<compile_context>
chip_gen: v7x
topology: tpu7x:2x2x1
jax: 0.10.0
libtpu: 0.0.40
codegen_flags: <defaults>
</compile_context>

<pallas_src>
import numpy as np
import jax
import jax.numpy as jnp
from jax.experimental import pallas as pl
from jax.experimental.pallas import tpu as pltpu

DOF = 4                      # dof
N_CLS = 10                   # n_cls
GEN_SIZE = (8, 8)            # gen_size
PATCHES = 576                # fixed by the module: hidden_units = 576 * dof
LO, HI = 0.0, 1.0            # Lagrange node range (backbone assumed fit to [0,1])
STEP = (HI - LO) / (DOF - 1)
INV_H = 1.0 / STEP
K_DIM = PATCHES * DOF        # 2304 contraction dim (multiple of 128 -> lane aligned)

# pre_proc fixed coefficients: [j=4, i=1, 3, 3] / 3
_PRE_COEFF = jnp.array(
    [[[[0., 1., 0.], [0., 1., 0.], [0., 1., 0.]]],
     [[[0., 0., 0.], [1., 1., 1.], [0., 0., 0.]]],
     [[[1., 0., 0.], [0., 1., 0.], [0., 0., 1.]]],
     [[[0., 0., 1.], [0., 1., 0.], [1., 0., 0.]]]],
    dtype=jnp.float32) / 3.0


def _round_up(x, m):
    return (x + m - 1) // m * m


# ---------------------------------------------------------------------------
# pre_proc: stride-2 3x3 patch reductions as XLA convolutions (no gathers)
# ---------------------------------------------------------------------------
def pre_proc(raw):
    """raw: [N, 1, H, W] (NCHW, float32)  ->  per-patch scalars [N, 576]."""
    n = raw.shape[0]
    # first stage: 'nihwpq,jipq->njhw' == conv 1->4 channels, 3x3, stride 2
    d = jax.lax.conv_general_dilated(
        raw, _PRE_COEFF, window_strides=(2, 2), padding='VALID',
        dimension_numbers=('NCHW', 'OIHW', 'NCHW'))                 # [N,4,13,13]
    # second stage: 'nkhwpq,jipq->nkjhw' == grouped conv, each of the 4 input
    # channels k produces 4 outputs j (no cross-channel sum); output chan = k*4+j
    k2 = jnp.tile(_PRE_COEFF, (4, 1, 1, 1))                         # [16,1,3,3]
    d = jax.lax.conv_general_dilated(
        d, k2, window_strides=(2, 2), padding='VALID',
        dimension_numbers=('NCHW', 'OIHW', 'NCHW'),
        feature_group_count=4)                                      # [N,16,6,6]
    return d.reshape(n, -1)                                         # [N,576] (k,j,h,w)


# ---------------------------------------------------------------------------
# Pallas kernel: fused Lagrange basis + single fused-head matmul
# ---------------------------------------------------------------------------
def visionnet_kernel(s_ref, nodes_ref, w_ref, out_ref):
    # s_ref     : [TB, K]      per-patch scalars, DOF-tiled (d-major columns), f32
    # nodes_ref : [1, K]       Lagrange node value for each column, f32
    # w_ref     : [K, OUT_PAD] fused (cls ++ gen, zero-padded) weights, bf16
    # out_ref   : [TB, OUT_PAD] f32
    s = s_ref[...]
    nodes = nodes_ref[...]
    # order-1 Lagrange (hat) basis, elementwise on VPU, kept in f32
    basis = jnp.maximum(0.0, 1.0 - jnp.abs(s - nodes) * INV_H)      # [TB, K]
    # single K=2304 MXU matmul, bf16 operands, f32 accumulation
    out_ref[...] = jnp.dot(basis.astype(w_ref.dtype), w_ref[...],
                           preferred_element_type=jnp.float32)


def visionnet_forward(x, w_cls, w_gen, *, batch_tile=256):
    """x: [N,1,H,W]; w_cls: [n_cls, 576*dof]; w_gen: [G, 576*dof] (torch Linear layout)."""
    n = x.shape[0]
    g = w_gen.shape[0]
    s = pre_proc(x)                                   # [N, P]
    p = s.shape[1]
    assert p == PATCHES
    assert p * DOF == w_cls.shape[1] == w_gen.shape[1]

    # d-major column layout: column d*P + p holds s[:, p] compared against node d.
    s_tiled = jnp.tile(s, (1, DOF)).astype(jnp.float32)             # [N, K]
    nodes = jnp.linspace(LO, HI, DOF, dtype=jnp.float32)
    node_vec = jnp.repeat(nodes, p)[None, :]                        # [1, K]

    # torch hidden index is p*DOF + d; rearrange both heads to [K = d*P + p, out],
    # fuse along the output axis and zero-pad to a lane-dense multiple of 128.
    wcls_k = w_cls.reshape(N_CLS, p, DOF).transpose(2, 1, 0).reshape(K_DIM, N_CLS)
    wgen_k = w_gen.reshape(g, p, DOF).transpose(2, 1, 0).reshape(K_DIM, g)
    out_dim = N_CLS + g
    out_pad = _round_up(out_dim, 128)
    w_fused = jnp.concatenate([wcls_k, wgen_k], axis=1)             # [K, out_dim]
    w_fused = jnp.pad(w_fused, ((0, 0), (0, out_pad - out_dim)))
    w_fused = w_fused.astype(jnp.bfloat16)                          # half the DMA/VMEM

    # batch tiling: whole (8-padded) batch in one step when small, 256-row tiles
    # otherwise; pad rows instead of asserting divisibility.
    bt = min(batch_tile, _round_up(n, 8))
    n_pad = _round_up(n, bt)
    if n_pad != n:
        s_tiled = jnp.pad(s_tiled, ((0, n_pad - n), (0, 0)))

    grid = (n_pad // bt,)
    out = pl.pallas_call(
        visionnet_kernel,
        out_shape=jax.ShapeDtypeStruct((n_pad, out_pad), jnp.float32),
        grid=grid,
        in_specs=[
            pl.BlockSpec((bt, K_DIM), lambda i: (i, 0)),
            pl.BlockSpec((1, K_DIM), lambda i: (0, 0)),
            pl.BlockSpec((K_DIM, out_pad), lambda i: (0, 0)),
        ],
        out_specs=pl.BlockSpec((bt, out_pad), lambda i: (i, 0)),
        compiler_params=pltpu.CompilerParams(dimension_semantics=("parallel",)),
    )(s_tiled, node_vec, w_fused)

    return out[:n, :N_CLS], out[:n, N_CLS:N_CLS + g]


# ---------------------------------------------------------------------------
# Pure-JAX reference (mirrors the PyTorch forward exactly; independent
# gather-based unfold implementation of pre_proc for cross-validation)
# ---------------------------------------------------------------------------
def _unfold_hw(x, k, s):
    """torch .unfold(2,k,s).unfold(3,k,s): [..., H, W] -> [..., Ho, Wo, k, k]."""
    h, w = x.shape[-2], x.shape[-1]
    ho = (h - k) // s + 1
    wo = (w - k) // s + 1
    ih = (jnp.arange(ho) * s)[:, None] + jnp.arange(k)[None, :]
    iw = (jnp.arange(wo) * s)[:, None] + jnp.arange(k)[None, :]
    x = x[..., ih, :]
    x = x[..., iw]
    return jnp.moveaxis(x, -3, -2)


def _pre_proc_ref(raw):
    d = _unfold_hw(raw, 3, 2)
    d = jnp.einsum('nihwpq,jipq->njhw', d, _PRE_COEFF)
    d = _unfold_hw(d, 3, 2)
    d = jnp.einsum('nkhwpq,jipq->nkjhw', d, _PRE_COEFF)
    return d.reshape(raw.shape[0], -1)


def reference_forward(x, w_cls, w_gen):
    s = _pre_proc_ref(x)                              # [N, 576]
    nodes = jnp.linspace(LO, HI, DOF, dtype=jnp.float32)
    basis = jnp.maximum(0.0, 1.0 - jnp.abs(s[..., None] - nodes) * INV_H)  # [N,P,DOF]
    hidden = basis.reshape(x.shape[0], -1)            # [N, 576*DOF] (p*DOF + d order)
    return hidden @ w_cls.T, hidden @ w_gen.T


if __name__ == "__main__":
    key = jax.random.PRNGKey(0)
    kx, kc, kg = jax.random.split(key, 3)

    # 1 channel, 28x28 so that 4*4*6*6 = 576 patches (module hardcodes 576*dof)
    N, C, H, W = 32, 1, 28, 28
    x = jax.random.uniform(kx, (N, C, H, W), dtype=jnp.float32)

    hidden_units = PATCHES * DOF
    bound = 1.0 / np.sqrt(hidden_units)
    w_cls = jax.random.uniform(kc, (N_CLS, hidden_units),
                               minval=-bound, maxval=bound, dtype=jnp.float32)
    w_gen = jax.random.uniform(kg, (GEN_SIZE[0] * GEN_SIZE[1], hidden_units),
                               minval=-bound, maxval=bound, dtype=jnp.float32)

    fwd = jax.jit(lambda a, b, c: visionnet_forward(a, b, c))
    cls_out, gen_out = jax.block_until_ready(fwd(x, w_cls, w_gen))

    ref_cls, ref_gen = reference_forward(x, w_cls, w_gen)
    # tolerance loosened for bf16 MXU inputs (f32 accumulation)
    np.testing.assert_allclose(np.asarray(cls_out), np.asarray(ref_cls),
                               rtol=1e-2, atol=1e-2)
    np.testing.assert_allclose(np.asarray(gen_out), np.asarray(ref_gen),
                               rtol=1e-2, atol=1e-2)
    print("KERNEL_OK")
</pallas_src>

<mosaic_0001>
module attributes {stable_mosaic.version = 11 : i64} {
  func.func @visionnet_kernel(%arg0: i32, %arg1: memref<32x2304xf32, #tpu.memory_space<vmem>>, %arg2: memref<1x2304xf32, #tpu.memory_space<vmem>>, %arg3: memref<2304x128xbf16, #tpu.memory_space<vmem>>, %arg4: memref<32x128xf32, #tpu.memory_space<vmem>>) attributes {dimension_semantics = [#tpu.dimension_semantics<parallel>], iteration_bounds = array<i64: 1>, scalar_prefetch = 0 : i64, scratch_operands = 0 : i64, tpu.core_type = #tpu.core_type<tc>, window_params = [{transform_indices = @transform_0, window_bounds = array<i64: 32, 2304>}, {pipeline_mode = #tpu.pipeline_mode<synchronous>, transform_indices = @transform_1, window_bounds = array<i64: 1, 2304>}, {pipeline_mode = #tpu.pipeline_mode<synchronous>, transform_indices = @transform_2, window_bounds = array<i64: 2304, 128>}, {transform_indices = @transform_3, window_bounds = array<i64: 32, 128>}]} {
    %c0 = arith.constant 0 : index
    %c0_0 = arith.constant 0 : index
    %0 = vector.load %arg1[%c0, %c0_0] : memref<32x2304xf32, #tpu.memory_space<vmem>>, vector<32x2304xf32>
    %c0_1 = arith.constant 0 : index
    %c0_2 = arith.constant 0 : index
    %1 = vector.load %arg2[%c0_1, %c0_2] : memref<1x2304xf32, #tpu.memory_space<vmem>>, vector<1x2304xf32>
    %2 = vector.broadcast %1 : vector<1x2304xf32> to vector<32x2304xf32>
    %3 = arith.subf %0, %2 : vector<32x2304xf32>
    %4 = math.absf %3 : vector<32x2304xf32>
    %cst = arith.constant 3.000000e+00 : f32
    %5 = vector.broadcast %cst : f32 to vector<32x2304xf32>
    %6 = arith.mulf %4, %5 : vector<32x2304xf32>
    %cst_3 = arith.constant 1.000000e+00 : f32
    %7 = vector.broadcast %cst_3 : f32 to vector<32x2304xf32>
    %8 = arith.subf %7, %6 : vector<32x2304xf32>
    %cst_4 = arith.constant 0.000000e+00 : f32
    %9 = vector.broadcast %cst_4 : f32 to vector<32x2304xf32>
    %10 = arith.maximumf %9, %8 : vector<32x2304xf32>
    %11 = arith.truncf %10 : vector<32x2304xf32> to vector<32x2304xbf16>
    %c0_5 = arith.constant 0 : index
    %c0_6 = arith.constant 0 : index
    %12 = vector.load %arg3[%c0_5, %c0_6] : memref<2304x128xbf16, #tpu.memory_space<vmem>>, vector<2304x128xbf16>
    %cst_7 = arith.constant dense<0.000000e+00> : vector<32x128xf32>
    %13 = tpu.matmul %11, %12, %cst_7 {dimension_numbers = #tpu.dot_dimension_numbers<[1], [0], [0], [1], [0, 0, 1, 1], [], []>} : vector<32x2304xbf16>, vector<2304x128xbf16>, vector<32x128xf32> -> vector<32x128xf32>
    %c0_8 = arith.constant 0 : index
    %c0_9 = arith.constant 0 : index
    %14 = vector.load %arg4[%c0_8, %c0_9] : memref<32x128xf32, #tpu.memory_space<vmem>>, vector<32x128xf32>
    tpu.vector_store %arg4[%c0_8, %c0_9], %13 {strides = array<i32>} : memref<32x128xf32, #tpu.memory_space<vmem>>, vector<32x128xf32>,
    return
  }
  func.func @transform_0(%arg0: i32) -> (i32, i32) {
    %c0_i32 = arith.constant 0 : i32
    %c0_i32_0 = arith.constant 0 : i32
    return %arg0, %c0_i32 : i32, i32
  }
  func.func @transform_1(%arg0: i32) -> (i32, i32) {
    %c0_i32 = arith.constant 0 : i32
    %c0_i32_0 = arith.constant 0 : i32
    %c0_i32_1 = arith.constant 0 : i32
    return %c0_i32, %c0_i32_0 : i32, i32
  }
  func.func @transform_2(%arg0: i32) -> (i32, i32) {
    %c0_i32 = arith.constant 0 : i32
    %c0_i32_0 = arith.constant 0 : i32
    %c0_i32_1 = arith.constant 0 : i32
    return %c0_i32, %c0_i32_0 : i32, i32
  }
  func.func @transform_3(%arg0: i32) -> (i32, i32) {
    %c0_i32 = arith.constant 0 : i32
    %c0_i32_0 = arith.constant 0 : i32
    return %arg0, %c0_i32 : i32, i32
  }
}

</mosaic_0001>

<llo_original>
// kernel: tile.15
$region0: #{tile.15}
  %s0 = inlined_call_operand.vmem [shape: f32[32,4,576], index: 0, kind: input, shape index: {}]
  %s1 = inlined_call_operand.vmem [shape: f32[32,2304], index: 1, kind: output, shape index: {}]
  $region1: #{tile.15} parent=0
    #allocation0 [shape = 'u8[655360]{0}', space=vmem, size = 0xa0000, scoped, tag = 'scoped mem for input reshape']
    %s3 = sshllo.u32 0, 4
    %s4 = smul.addr 4, 159
    %s5 = scalar_lea.vmem %s0, %s4
    %v6 = vld [vmem:[%s5] sm:%s3]
    %s7 = scalar_lea.vmem [#allocation0], 1272
    %8 = vst [vmem:[%s7] sm:%s3] %v6
    %s9 = smul.addr 4, 158
    %s10 = scalar_lea.vmem %s0, %s9
    %v11 = vld [vmem:[%s10] sm:%s3]
    %s12 = scalar_lea.vmem [#allocation0], 1264
    %13 = vst [vmem:[%s12] sm:%s3] %v11
    %s14 = smul.addr 4, 157
    %s15 = scalar_lea.vmem %s0, %s14
    %v16 = vld [vmem:[%s15] sm:%s3]
    %s17 = scalar_lea.vmem [#allocation0], 1256
    %18 = vst [vmem:[%s17] sm:%s3] %v16
    %s19 = smul.addr 4, 156
    %s20 = scalar_lea.vmem %s0, %s19
    %v21 = vld [vmem:[%s20] sm:%s3]
    %s22 = scalar_lea.vmem [#allocation0], 1248
    %23 = vst [vmem:[%s22] sm:%s3] %v21
    %s24 = smul.addr 4, 155
    %s25 = scalar_lea.vmem %s0, %s24
    %v26 = vld [vmem:[%s25] sm:%s3]
    %s27 = scalar_lea.vmem [#allocation0], 1240
    %28 = vst [vmem:[%s27] sm:%s3] %v26
    %s29 = smul.addr 4, 154
    %s30 = scalar_lea.vmem %s0, %s29
    %v31 = vld [vmem:[%s30] sm:%s3]
    %s32 = scalar_lea.vmem [#allocation0], 1232
    %33 = vst [vmem:[%s32] sm:%s3] %v31
    %s34 = smul.addr 4, 153
    %s35 = scalar_lea.vmem %s0, %s34
    %v36 = vld [vmem:[%s35] sm:%s3]
    %s37 = scalar_lea.vmem [#allocation0], 1224
    %38 = vst [vmem:[%s37] sm:%s3] %v36
    %s39 = smul.addr 4, 152
    %s40 = scalar_lea.vmem %s0, %s39
    %v41 = vld [vmem:[%s40] sm:%s3]
    %s42 = scalar_lea.vmem [#allocation0], 1216
    %43 = vst [vmem:[%s42] sm:%s3] %v41
    %s44 = smul.addr 4, 151
    %s45 = scalar_lea.vmem %s0, %s44
    %v46 = vld [vmem:[%s45] sm:%s3]
    %s47 = scalar_lea.vmem [#allocation0], 1208
    %48 = vst [vmem:[%s47] sm:%s3] %v46
    %s49 = smul.addr 4, 150
    %s50 = scalar_lea.vmem %s0, %s49
    %v51 = vld [vmem:[%s50] sm:%s3]
    %s52 = scalar_lea.vmem [#allocation0], 1200
    %53 = vst [vmem:[%s52] sm:%s3] %v51
    %s54 = smul.addr 4, 149
    %s55 = scalar_lea.vmem %s0, %s54
    %v56 = vld [vmem:[%s55] sm:%s3]
    %s57 = scalar_lea.vmem [#allocation0], 1192
    %58 = vst [vmem:[%s57] sm:%s3] %v56
    %s59 = smul.addr 4, 148
    %s60 = scalar_lea.vmem %s0, %s59
    %v61 = vld [vmem:[%s60] sm:%s3]
    %s62 = scalar_lea.vmem [#allocation0], 1184
    %63 = vst [vmem:[%s62] sm:%s3] %v61
    %s64 = smul.addr 4, 147
    %s65 = scalar_lea.vmem %s0, %s64
    %v66 = vld [vmem:[%s65] sm:%s3]
    %s67 = scalar_lea.vmem [#allocation0], 1176
    %68 = vst [vmem:[%s67] sm:%s3] %v66
    %s69 = smul.addr 4, 146
    %s70 = scalar_lea.vmem %s0, %s69
    %v71 = vld [vmem:[%s70] sm:%s3]
    %s72 = scalar_lea.vmem [#allocation0], 1168
    %73 = vst [vmem:[%s72] sm:%s3] %v71
    %s74 = smul.addr 4, 145
    %s75 = scalar_lea.vmem %s0, %s74
    %v76 = vld [vmem:[%s75] sm:%s3]
    %s77 = scalar_lea.vmem [#allocation0], 1160
    %78 = vst [vmem:[%s77] sm:%s3] %v76
    %s79 = smul.addr 4, 144
    %s80 = scalar_lea.vmem %s0, %s79
    %v81 = vld [vmem:[%s80] sm:%s3]
    %s82 = scalar_lea.vmem [#allocation0], 1152
    %83 = vst [vmem:[%s82] sm:%s3] %v81
    %s84 = smul.addr 4, 143
    %s85 = scalar_lea.vmem %s0, %s84
    %v86 = vld [vmem:[%s85] sm:%s3]
    %s87 = scalar_lea.vmem [#allocation0], 1144
    %88 = vst [vmem:[%s87] sm:%s3] %v86
    %s89 = smul.addr 4, 142
    %s90 = scalar_lea.vmem %s0, %s89
    %v91 = vld [vmem:[%s90] sm:%s3]
    %s92 = scalar_lea.vmem [#allocation0], 1136
    %93 = vst [vmem:[%s92] sm:%s3] %v91
    %s94 = smul.addr 4, 141
    %s95 = scalar_lea.vmem %s0, %s94
    %v96 = vld [vmem:[%s95] sm:%s3]
    %s97 = scalar_lea.vmem [#allocation0], 1128
    %98 = vst [vmem:[%s97] sm:%s3] %v96
    %s99 = smul.addr 4, 140
    %s100 = scalar_lea.vmem %s0, %s99
    %v101 = vld [vmem:[%s100] sm:%s3]
    %s102 = scalar_lea.vmem [#allocation0], 1120
    %103 = vst [vmem:[%s102] sm:%s3] %v101
    %s104 = smul.addr 4, 139
    %s105 = scalar_lea.vmem %s0, %s104
    %v106 = vld [vmem:[%s105] sm:%s3]
    %s107 = scalar_lea.vmem [#allocation0], 1112
    %108 = vst [vmem:[%s107] sm:%s3] %v106
    %s109 = smul.addr 4, 138
    %s110 = scalar_lea.vmem %s0, %s109
    %v111 = vld [vmem:[%s110] sm:%s3]
    %s112 = scalar_lea.vmem [#allocation0], 1104
    %113 = vst [vmem:[%s112] sm:%s3] %v111
    %s114 = smul.addr 4, 137
    %s115 = scalar_lea.vmem %s0, %s114
    %v116 = vld [vmem:[%s115] sm:%s3]
    %s117 = scalar_lea.vmem [#allocation0], 1096
    %118 = vst [vmem:[%s117] sm:%s3] %v116
    %s119 = smul.addr 4, 136
    %s120 = scalar_lea.vmem %s0, %s119
    %v121 = vld [vmem:[%s120] sm:%s3]
    %s122 = scalar_lea.vmem [#allocation0], 1088
    %123 = vst [vmem:[%s122] sm:%s3] %v121
    %s124 = smul.addr 4, 135
    %s125 = scalar_lea.vmem %s0, %s124
    %v126 = vld [vmem:[%s125] sm:%s3]
    %s127 = scalar_lea.vmem [#allocation0], 1080
    %128 = vst [vmem:[%s127] sm:%s3] %v126
    %s129 = smul.addr 4, 134
    %s130 = scalar_lea.vmem %s0, %s129
    %v131 = vld [vmem:[%s130] sm:%s3]
    %s132 = scalar_lea.vmem [#allocation0], 1072
    %133 = vst [vmem:[%s132] sm:%s3] %v131
    %s134 = smul.addr 4, 133
    %s135 = scalar_lea.vmem %s0, %s134
    %v136 = vld [vmem:[%s135] sm:%s3]
    %s137 = scalar_lea.vmem [#allocation0], 1064
    %138 = vst [vmem:[%s137] sm:%s3] %v136
    %s139 = smul.addr 4, 132
    %s140 = scalar_lea.vmem %s0, %s139
    %v141 = vld [vmem:[%s140] sm:%s3]
    %s142 = scalar_lea.vmem [#allocation0], 1056
    %143 = vst [vmem:[%s142] sm:%s3] %v141
    %s144 = smul.addr 4, 131
    %s145 = scalar_lea.vmem %s0, %s144
    %v146 = vld [vmem:[%s145] sm:%s3]
    %s147 = scalar_lea.vmem [#allocation0], 1048
    %148 = vst [vmem:[%s147] sm:%s3] %v146
    %s149 = smul.addr 4, 130
    %s150 = scalar_lea.vmem %s0, %s149
    %v151 = vld [vmem:[%s150] sm:%s3]
    %s152 = scalar_lea.vmem [#allocation0], 1040
    %153 = vst [vmem:[%s152] sm:%s3] %v151
    %s154 = smul.addr 4, 129
    %s155 = scalar_lea.vmem %s0, %s154
    %v156 = vld [vmem:[%s155] sm:%s3]
    %s157 = scalar_lea.vmem [#allocation0], 1032
    %158 = vst [vmem:[%s157] sm:%s3] %v156
    %s159 = smul.addr 4, 128
    %s160 = scalar_lea.vmem %s0, %s159
    %v161 = vld [vmem:[%s160] sm:%s3]
    %s162 = scalar_lea.vmem [#allocation0], 1024
    %163 = vst [vmem:[%s162] sm:%s3] %v161
    %s164 = smul.addr 4, 127
    %s165 = scalar_lea.vmem %s0, %s164
    %v166 = vld [vmem:[%s165] sm:%s3]
    %s167 = scalar_lea.vmem [#allocation0], 1016
    %168 = vst [vmem:[%s167] sm:%s3] %v166
    %s169 = smul.addr 4, 126
    %s170 = scalar_lea.vmem %s0, %s169
    %v171 = vld [vmem:[%s170] sm:%s3]
    %s172 = scalar_lea.vmem [#allocation0], 1008
    %173 = vst [vmem:[%s172] sm:%s3] %v171
    %s174 = smul.addr 4, 125
    %s175 = scalar_lea.vmem %s0, %s174
    %v176 = vld [vmem:[%s175] sm:%s3]
    %s177 = scalar_lea.vmem [#allocation0], 1000
    %178 = vst [vmem:[%s177] sm:%s3] %v176
    %s179 = smul.addr 4, 124
    %s180 = scalar_lea.vmem %s0, %s179
    %v181 = vld [vmem:[%s180] sm:%s3]
    %s182 = scalar_lea.vmem [#allocation0], 992
    %183 = vst [vmem:[%s182] sm:%s3] %v181
    %s184 = smul.addr 4, 123
    %s185 = scalar_lea.vmem %s0, %s184
    %v186 = vld [vmem:[%s185] sm:%s3]
    %s187 = scalar_lea.vmem [#allocation0], 984
    %188 = vst [vmem:[%s187] sm:%s3] %v186
    %s189 = smul.addr 4, 122
    %s190 = scalar_lea.vmem %s0, %s189
    %v191 = vld [vmem:[%s190] sm:%s3]
    %s192 = scalar_lea.vmem [#allocation0], 976
    %193 = vst [vmem:[%s192] sm:%s3] %v191
    %s194 = smul.addr 4, 121
    %s195 = scalar_lea.vmem %s0, %s194
    %v196 = vld [vmem:[%s195] sm:%s3]
    %s197 = scalar_lea.vmem [#allocation0], 968
    %198 = vst [vmem:[%s197] sm:%s3] %v196
    %s199 = smul.addr 4, 120
    %s200 = scalar_lea.vmem %s0, %s199
    %v201 = vld [vmem:[%s200] sm:%s3]
    %s202 = scalar_lea.vmem [#allocation0], 960
    %203 = vst [vmem:[%s202] sm:%s3] %v201
    %s204 = smul.addr 4, 119
    %s205 = scalar_lea.vmem %s0, %s204
    %v206 = vld [vmem:[%s205] sm:%s3]
    %s207 = scalar_lea.vmem [#allocation0], 952
    %208 = vst [vmem:[%s207] sm:%s3] %v206
    %s209 = smul.addr 4, 118
    %s210 = scalar_lea.vmem %s0, %s209
    %v211 = vld [vmem:[%s210] sm:%s3]
    %s212 = scalar_lea.vmem [#allocation0], 944
    %213 = vst [vmem:[%s212] sm:%s3] %v211
    %s214 = smul.addr 4, 117
    %s215 = scalar_lea.vmem %s0, %s214
    %v216 = vld [vmem:[%s215] sm:%s3]
    %s217 = scalar_lea.vmem [#allocation0], 936
    %218 = vst [vmem:[%s217] sm:%s3] %v216
    %s219 = smul.addr 4, 116
    %s220 = scalar_lea.vmem %s0, %s219
    %v221 = vld [vmem:[%s220] sm:%s3]
    %s222 = scalar_lea.vmem [#allocation0], 928
    %223 = vst [vmem:[%s222] sm:%s3] %v221
    %s224 = smul.addr 4, 115
    %s225 = scalar_lea.vmem %s0, %s224
    %v226 = vld [vmem:[%s225] sm:%s3]
    %s227 = scalar_lea.vmem [#allocation0], 920
    %228 = vst [vmem:[%s227] sm:%s3] %v226
    %s229 = smul.addr 4, 114
    %s230 = scalar_lea.vmem %s0, %s229
    %v231 = vld [vmem:[%s230] sm:%s3]
    %s232 = scalar_lea.vmem [#allocation0], 912
    %233 = vst [vmem:[%s232] sm:%s3] %v231
    %s234 = smul.addr 4, 113
    %s235 = scalar_lea.vmem %s0, %s234
    %v236 = vld [vmem:[%s235] sm:%s3]
    %s237 = scalar_lea.vmem [#allocation0], 904
    %238 = vst [vmem:[%s237] sm:%s3] %v236
    %s239 = smul.addr 4, 112
    %s240 = scalar_lea.vmem %s0, %s239
    %v241 = vld [vmem:[%s240] sm:%s3]
    %s242 = scalar_lea.vmem [#allocation0], 896
    %243 = vst [vmem:[%s242] sm:%s3] %v241
    %s244 = smul.addr 4, 111
    %s245 = scalar_lea.vmem %s0, %s244
    %v246 = vld [vmem:[%s245] sm:%s3]
    %s247 = scalar_lea.vmem [#allocation0], 888
    %248 = vst [vmem:[%s247] sm:%s3] %v246
    %s249 = smul.addr 4, 110
    %s250 = scalar_lea.vmem %s0, %s249
    %v251 = vld [vmem:[%s250] sm:%s3]
    %s252 = scalar_lea.vmem [#allocation0], 880
    %253 = vst [vmem:[%s252] sm:%s3] %v251
    %s254 = smul.addr 4, 109
    %s255 = scalar_lea.vmem %s0, %s254
    %v256 = vld [vmem:[%s255] sm:%s3]
    %s257 = scalar_lea.vmem [#allocation0], 872
    %258 = vst [vmem:[%s257] sm:%s3] %v256
    %s259 = smul.addr 4, 108
    %s260 = scalar_lea.vmem %s0, %s259
    %v261 = vld [vmem:[%s260] sm:%s3]
    %s262 = scalar_lea.vmem [#allocation0], 864
    %263 = vst [vmem:[%s262] sm:%s3] %v261
    %s264 = smul.addr 4, 107
    %s265 = scalar_lea.vmem %s0, %s264
    %v266 = vld [vmem:[%s265] sm:%s3]
    %s267 = scalar_lea.vmem [#allocation0], 856
    %268 = vst [vmem:[%s267] sm:%s3] %v266
    %s269 = smul.addr 4, 106
    %s270 = scalar_lea.vmem %s0, %s269
    %v271 = vld [vmem:[%s270] sm:%s3]
    %s272 = scalar_lea.vmem [#allocation0], 848
    %273 = vst [vmem:[%s272] sm:%s3] %v271
    %s274 = smul.addr 4, 105
    %s275 = scalar_lea.vmem %s0, %s274
    %v276 = vld [vmem:[%s275] sm:%s3]
    %s277 = scalar_lea.vmem [#allocation0], 840
    %278 = vst [vmem:[%s277] sm:%s3] %v276
    %s279 = smul.addr 4, 104
    %s280 = scalar_lea.vmem %s0, %s279
    %v281 = vld [vmem:[%s280] sm:%s3]
    %s282 = scalar_lea.vmem [#allocation0], 832
    %283 = vst [vmem:[%s282] sm:%s3] %v281
    %s284 = smul.addr 4, 103
    %s285 = scalar_lea.vmem %s0, %s284
    %v286 = vld [vmem:[%s285] sm:%s3]
    %s287 = scalar_lea.vmem [#allocation0], 824
    %288 = vst [vmem:[%s287] sm:%s3] %v286
    %s289 = smul.addr 4, 102
    %s290 = scalar_lea.vmem %s0, %s289
    %v291 = vld [vmem:[%s290] sm:%s3]
    %s292 = scalar_lea.vmem [#allocation0], 816
    %293 = vst [vmem:[%s292] sm:%s3] %v291
    %s294 = smul.addr 4, 101
    %s295 = scalar_lea.vmem %s0, %s294
    %v296 = vld [vmem:[%s295] sm:%s3]
    %s297 = scalar_lea.vmem [#allocation0], 808
    %298 = vst [vmem:[%s297] sm:%s3] %v296
    %s299 = smul.addr 4, 100
    %s300 = scalar_lea.vmem %s0, %s299
    %v301 = vld [vmem:[%s300] sm:%s3]
    %s302 = scalar_lea.vmem [#allocation0], 800
    %303 = vst [vmem:[%s302] sm:%s3] %v301
    %s304 = smul.addr 4, 99
    %s305 = scalar_lea.vmem %s0, %s304
    %v306 = vld [vmem:[%s305] sm:%s3]
    %s307 = scalar_lea.vmem [#allocation0], 792
    %308 = vst [vmem:[%s307] sm:%s3] %v306
    %s309 = smul.addr 4, 98
    %s310 = scalar_lea.vmem %s0, %s309
    %v311 = vld [vmem:[%s310] sm:%s3]
    %s312 = scalar_lea.vmem [#allocation0], 784
    %313 = vst [vmem:[%s312] sm:%s3] %v311
    %s314 = smul.addr 4, 97
    %s315 = scalar_lea.vmem %s0, %s314
    %v316 = vld [vmem:[%s315] sm:%s3]
    %s317 = scalar_lea.vmem [#allocation0], 776
    %318 = vst [vmem:[%s317] sm:%s3] %v316
    %s319 = smul.addr 4, 96
    %s320 = scalar_lea.vmem %s0, %s319
    %v321 = vld [vmem:[%s320] sm:%s3]
    %s322 = scalar_lea.vmem [#allocation0], 768
    %323 = vst [vmem:[%s322] sm:%s3] %v321
    %s324 = smul.addr 4, 95
    %s325 = scalar_lea.vmem %s0, %s324
    %v326 = vld [vmem:[%s325] sm:%s3]
    %s327 = scalar_lea.vmem [#allocation0], 760
    %328 = vst [vmem:[%s327] sm:%s3] %v326
    %s329 = smul.addr 4, 94
    %s330 = scalar_lea.vmem %s0, %s329
    %v331 = vld [vmem:[%s330] sm:%s3]
    %s332 = scalar_lea.vmem [#allocation0], 752
    %333 = vst [vmem:[%s332] sm:%s3] %v331
    %s334 = smul.addr 4, 93
    %s335 = scalar_lea.vmem %s0, %s334
    %v336 = vld [vmem:[%s335] sm:%s3]
    %s337 = scalar_lea.vmem [#allocation0], 744
    %338 = vst [vmem:[%s337] sm:%s3] %v336
    %s339 = smul.addr 4, 92
    %s340 = scalar_lea.vmem %s0, %s339
    %v341 = vld [vmem:[%s340] sm:%s3]
    %s342 = scalar_lea.vmem [#allocation0], 736
    %343 = vst [vmem:[%s342] sm:%s3] %v341
    %s344 = smul.addr 4, 91
    %s345 = scalar_lea.vmem %s0, %s344
    %v346 = vld [vmem:[%s345] sm:%s3]
    %s347 = scalar_lea.vmem [#allocation0], 728
    %348 = vst [vmem:[%s347] sm:%s3] %v346
    %s349 = smul.addr 4, 90
    %s350 = scalar_lea.vmem %s0, %s349
    %v351 = vld [vmem:[%s350] sm:%s3]
    %s352 = scalar_lea.vmem [#allocation0], 720
    %353 = vst [vmem:[%s352] sm:%s3] %v351
    %s354 = smul.addr 4, 89
    %s355 = scalar_lea.vmem %s0, %s354
    %v356 = vld [vmem:[%s355] sm:%s3]
    %s357 = scalar_lea.vmem [#allocation0], 712
    %358 = vst [vmem:[%s357] sm:%s3] %v356
    %s359 = smul.addr 4, 88
    %s360 = scalar_lea.vmem %s0, %s359
    %v361 = vld [vmem:[%s360] sm:%s3]
    %s362 = scalar_lea.vmem [#allocation0], 704
    %363 = vst [vmem:[%s362] sm:%s3] %v361
    %s364 = smul.addr 4, 87
    %s365 = scalar_lea.vmem %s0, %s364
    %v366 = vld [vmem:[%s365] sm:%s3]
    %s367 = scalar_lea.vmem [#allocation0], 696
    %368 = vst [vmem:[%s367] sm:%s3] %v366
    %s369 = smul.addr 4, 86
    %s370 = scalar_lea.vmem %s0, %s369
    %v371 = vld [vmem:[%s370] sm:%s3]
    %s372 = scalar_lea.vmem [#allocation0], 688
    %373 = vst [vmem:[%s372] sm:%s3] %v371
    %s374 = smul.addr 4, 85
    %s375 = scalar_lea.vmem %s0, %s374
    %v376 = vld [vmem:[%s375] sm:%s3]
    %s377 = scalar_lea.vmem [#allocation0], 680
    %378 = vst [vmem:[%s377] sm:%s3] %v376
    %s379 = smul.addr 4, 84
    %s380 = scalar_lea.vmem %s0, %s379
    %v381 = vld [vmem:[%s380] sm:%s3]
    %s382 = scalar_lea.vmem [#allocation0], 672
    %383 = vst [vmem:[%s382] sm:%s3] %v381
    %s384 = smul.addr 4, 83
    %s385 = scalar_lea.vmem %s0, %s384
    %v386 = vld [vmem:[%s385] sm:%s3]
    %s387 = scalar_lea.vmem [#allocation0], 664
    %388 = vst [vmem:[%s387] sm:%s3] %v386
    %s389 = smul.addr 4, 82
    %s390 = scalar_lea.vmem %s0, %s389
    %v391 = vld [vmem:[%s390] sm:%s3]
    %s392 = scalar_lea.vmem [#allocation0], 656
    %393 = vst [vmem:[%s392] sm:%s3] %v391
    %s394 = smul.addr 4, 81
    %s395 = scalar_lea.vmem %s0, %s394
    %v396 = vld [vmem:[%s395] sm:%s3]
    %s397 = scalar_lea.vmem [#allocation0], 648
    %398 = vst [vmem:[%s397] sm:%s3] %v396
    %s399 = smul.addr 4, 80
    %s400 = scalar_lea.vmem %s0, %s399
    %v401 = vld [vmem:[%s400] sm:%s3]
    %s402 = scalar_lea.vmem [#allocation0], 640
    %403 = vst [vmem:[%s402] sm:%s3] %v401
    %s404 = smul.addr 4, 79
    %s405 = scalar_lea.vmem %s0, %s404
    %v406 = vld [vmem:[%s405] sm:%s3]
    %s407 = scalar_lea.vmem [#allocation0], 632
    %408 = vst [vmem:[%s407] sm:%s3] %v406
    %s409 = smul.addr 4, 78
    %s410 = scalar_lea.vmem %s0, %s409
    %v411 = vld [vmem:[%s410] sm:%s3]
    %s412 = scalar_lea.vmem [#allocation0], 624
    %413 = vst [vmem:[%s412] sm:%s3] %v411
    %s414 = smul.addr 4, 77
    %s415 = scalar_lea.vmem %s0, %s414
    %v416 = vld [vmem:[%s415] sm:%s3]
    %s417 = scalar_lea.vmem [#allocation0], 616
    %418 = vst [vmem:[%s417] sm:%s3] %v416
    %s419 = smul.addr 4, 76
    %s420 = scalar_lea.vmem %s0, %s419
    %v421 = vld [vmem:[%s420] sm:%s3]
    %s422 = scalar_lea.vmem [#allocation0], 608
    %423 = vst [vmem:[%s422] sm:%s3] %v421
    %s424 = smul.addr 4, 75
    %s425 = scalar_lea.vmem %s0, %s424
    %v426 = vld [vmem:[%s425] sm:%s3]
    %s427 = scalar_lea.vmem [#allocation0], 600
    %428 = vst [vmem:[%s427] sm:%s3] %v426
    %s429 = smul.addr 4, 74
    %s430 = scalar_lea.vmem %s0, %s429
    %v431 = vld [vmem:[%s430] sm:%s3]
    %s432 = scalar_lea.vmem [#allocation0], 592
    %433 = vst [vmem:[%s432] sm:%s3] %v431
    %s434 = smul.addr 4, 73
    %s435 = scalar_lea.vmem %s0, %s434
    %v436 = vld [vmem:[%s435] sm:%s3]
    %s437 = scalar_lea.vmem [#allocation0], 584
    %438 = vst [vmem:[%s437] sm:%s3] %v436
    %s439 = smul.addr 4, 72
    %s440 = scalar_lea.vmem %s0, %s439
    %v441 = vld [vmem:[%s440] sm:%s3]
    %s442 = scalar_lea.vmem [#allocation0], 576
    %443 = vst [vmem:[%s442] sm:%s3] %v441
    %s444 = smul.addr 4, 71
    %s445 = scalar_lea.vmem %s0, %s444
    %v446 = vld [vmem:[%s445] sm:%s3]
    %s447 = scalar_lea.vmem [#allocation0], 568
    %448 = vst [vmem:[%s447] sm:%s3] %v446
    %s449 = smul.addr 4, 70
    %s450 = scalar_lea.vmem %s0, %s449
    %v451 = vld [vmem:[%s450] sm:%s3]
    %s452 = scalar_lea.vmem [#allocation0], 560
    %453 = vst [vmem:[%s452] sm:%s3] %v451
    %s454 = smul.addr 4, 69
    %s455 = scalar_lea.vmem %s0, %s454
    %v456 = vld [vmem:[%s455] sm:%s3]
    %s457 = scalar_lea.vmem [#allocation0], 552
    %458 = vst [vmem:[%s457] sm:%s3] %v456
    %s459 = smul.addr 4, 68
    %s460 = scalar_lea.vmem %s0, %s459
    %v461 = vld [vmem:[%s460] sm:%s3]
    %s462 = scalar_lea.vmem [#allocation0], 544
    %463 = vst [vmem:[%s462] sm:%s3] %v461
    %s464 = smul.addr 4, 67
    %s465 = scalar_lea.vmem %s0, %s464
    %v466 = vld [vmem:[%s465] sm:%s3]
    %s467 = scalar_lea.vmem [#allocation0], 536
    %468 = vst [vmem:[%s467] sm:%s3] %v466
    %s469 = smul.addr 4, 66
    %s470 = scalar_lea.vmem %s0, %s469
    %v471 = vld [vmem:[%s470] sm:%s3]
    %s472 = scalar_lea.vmem [#allocation0], 528
    %473 = vst [vmem:[%s472] sm:%s3] %v471
    %s474 = smul.addr 4, 65
    %s475 = scalar_lea.vmem %s0, %s474
    %v476 = vld [vmem:[%s475] sm:%s3]
    %s477 = scalar_lea.vmem [#allocation0], 520
    %478 = vst [vmem:[%s477] sm:%s3] %v476
    %s479 = smul.addr 4, 64
    %s480 = scalar_lea.vmem %s0, %s479
    %v481 = vld [vmem:[%s480] sm:%s3]
    %s482 = scalar_lea.vmem [#allocation0], 512
    %483 = vst [vmem:[%s482] sm:%s3] %v481
    %s484 = smul.addr 4, 63
    %s485 = scalar_lea.vmem %s0, %s484
    %v486 = vld [vmem:[%s485] sm:%s3]
    %s487 = scalar_lea.vmem [#allocation0], 504
    %488 = vst [vmem:[%s487] sm:%s3] %v486
    %s489 = smul.addr 4, 62
    %s490 = scalar_lea.vmem %s0, %s489
    %v491 = vld [vmem:[%s490] sm:%s3]
    %s492 = scalar_lea.vmem [#allocation0], 496
    %493 = vst [vmem:[%s492] sm:%s3] %v491
    %s494 = smul.addr 4, 61
    %s495 = scalar_lea.vmem %s0, %s494
    %v496 = vld [vmem:[%s495] sm:%s3]
    %s497 = scalar_lea.vmem [#allocation0], 488
    %498 = vst [vmem:[%s497] sm:%s3] %v496
    %s499 = smul.addr 4, 60
    %s500 = scalar_lea.vmem %s0, %s499
    %v501 = vld [vmem:[%s500] sm:%s3]
    %s502 = scalar_lea.vmem [#allocation0], 480
    %503 = vst [vmem:[%s502] sm:%s3] %v501
    %s504 = smul.addr 4, 59
    %s505 = scalar_lea.vmem %s0, %s504
    %v506 = vld [vmem:[%s505] sm:%s3]
    %s507 = scalar_lea.vmem [#allocation0], 472
    %508 = vst [vmem:[%s507] sm:%s3] %v506
    %s509 = smul.addr 4, 58
    %s510 = scalar_lea.vmem %s0, %s509
    %v511 = vld [vmem:[%s510] sm:%s3]
    %s512 = scalar_lea.vmem [#allocation0], 464
    %513 = vst [vmem:[%s512] sm:%s3] %v511
    %s514 = smul.addr 4, 57
    %s515 = scalar_lea.vmem %s0, %s514
    %v516 = vld [vmem:[%s515] sm:%s3]
    %s517 = scalar_lea.vmem [#allocation0], 456
    %518 = vst [vmem:[%s517] sm:%s3] %v516
    %s519 = smul.addr 4, 56
    %s520 = scalar_lea.vmem %s0, %s519
    %v521 = vld [vmem:[%s520] sm:%s3]
    %s522 = scalar_lea.vmem [#allocation0], 448
    %523 = vst [vmem:[%s522] sm:%s3] %v521
    %s524 = smul.addr 4, 55
    %s525 = scalar_lea.vmem %s0, %s524
    %v526 = vld [vmem:[%s525] sm:%s3]
    %s527 = scalar_lea.vmem [#allocation0], 440
    %528 = vst [vmem:[%s527] sm:%s3] %v526
    %s529 = smul.addr 4, 54
    %s530 = scalar_lea.vmem %s0, %s529
    %v531 = vld [vmem:[%s530] sm:%s3]
    %s532 = scalar_lea.vmem [#allocation0], 432
    %533 = vst [vmem:[%s532] sm:%s3] %v531
    %s534 = smul.addr 4, 53
    %s535 = scalar_lea.vmem %s0, %s534
    %v536 = vld [vmem:[%s535] sm:%s3]
    %s537 = scalar_lea.vmem [#allocation0], 424
    %538 = vst [vmem:[%s537] sm:%s3] %v536
    %s539 = smul.addr 4, 52
    %s540 = scalar_lea.vmem %s0, %s539
    %v541 = vld [vmem:[%s540] sm:%s3]
    %s542 = scalar_lea.vmem [#allocation0], 416
    %543 = vst [vmem:[%s542] sm:%s3] %v541
    %s544 = smul.addr 4, 51
    %s545 = scalar_lea.vmem %s0, %s544
    %v546 = vld [vmem:[%s545] sm:%s3]
    %s547 = scalar_lea.vmem [#allocation0], 408
    %548 = vst [vmem:[%s547] sm:%s3] %v546
    %s549 = smul.addr 4, 50
    %s550 = scalar_lea.vmem %s0, %s549
    %v551 = vld [vmem:[%s550] sm:%s3]
    %s552 = scalar_lea.vmem [#allocation0], 400
    %553 = vst [vmem:[%s552] sm:%s3] %v551
    %s554 = smul.addr 4, 49
    %s555 = scalar_lea.vmem %s0, %s554
    %v556 = vld [vmem:[%s555] sm:%s3]
    %s557 = scalar_lea.vmem [#allocation0], 392
    %558 = vst [vmem:[%s557] sm:%s3] %v556
    %s559 = smul.addr 4, 48
    %s560 = scalar_lea.vmem %s0, %s559
    %v561 = vld [vmem:[%s560] sm:%s3]
    %s562 = scalar_lea.vmem [#allocation0], 384
    %563 = vst [vmem:[%s562] sm:%s3] %v561
    %s564 = smul.addr 4, 47
    %s565 = scalar_lea.vmem %s0, %s564
    %v566 = vld [vmem:[%s565] sm:%s3]
    %s567 = scalar_lea.vmem [#allocation0], 376
    %568 = vst [vmem:[%s567] sm:%s3] %v566
    %s569 = smul.addr 4, 46
    %s570 = scalar_lea.vmem %s0, %s569
    %v571 = vld [vmem:[%s570] sm:%s3]
    %s572 = scalar_lea.vmem [#allocation0], 368
    %573 = vst [vmem:[%s572] sm:%s3] %v571
    %s574 = smul.addr 4, 45
    %s575 = scalar_lea.vmem %s0, %s574
    %v576 = vld [vmem:[%s575] sm:%s3]
    %s577 = scalar_lea.vmem [#allocation0], 360
    %578 = vst [vmem:[%s577] sm:%s3] %v576
    %s579 = smul.addr 4, 44
    %s580 = scalar_lea.vmem %s0, %s579
    %v581 = vld [vmem:[%s580] sm:%s3]
    %s582 = scalar_lea.vmem [#allocation0], 352
    %583 = vst [vmem:[%s582] sm:%s3] %v581
    %s584 = smul.addr 4, 43
    %s585 = scalar_lea.vmem %s0, %s584
    %v586 = vld [vmem:[%s585] sm:%s3]
    %s587 = scalar_lea.vmem [#allocation0], 344
    %588 = vst [vmem:[%s587] sm:%s3] %v586
    %s589 = smul.addr 4, 42
    %s590 = scalar_lea.vmem %s0, %s589
    %v591 = vld [vmem:[%s590] sm:%s3]
    %s592 = scalar_lea.vmem [#allocation0], 336
    %593 = vst [vmem:[%s592] sm:%s3] %v591
    %s594 = smul.addr 4, 41
    %s595 = scalar_lea.vmem %s0, %s594
    %v596 = vld [vmem:[%s595] sm:%s3]
    %s597 = scalar_lea.vmem [#allocation0], 328
    %598 = vst [vmem:[%s597] sm:%s3] %v596
    %s599 = smul.addr 4, 40
    %s600 = scalar_lea.vmem %s0, %s599
    %v601 = vld [vmem:[%s600] sm:%s3]
    %s602 = scalar_lea.vmem [#allocation0], 320
    %603 = vst [vmem:[%s602] sm:%s3] %v601
    %s604 = smul.addr 4, 39
    %s605 = scalar_lea.vmem %s0, %s604
    %v606 = vld [vmem:[%s605] sm:%s3]
    %s607 = scalar_lea.vmem [#allocation0], 312
    %608 = vst [vmem:[%s607] sm:%s3] %v606
    %s609 = smul.addr 4, 38
    %s610 = scalar_lea.vmem %s0, %s609
    %v611 = vld [vmem:[%s610] sm:%s3]
    %s612 = scalar_lea.vmem [#allocation0], 304
    %613 = vst [vmem:[%s612] sm:%s3] %v611
    %s614 = smul.addr 4, 37
    %s615 = scalar_lea.vmem %s0, %s614
    %v616 = vld [vmem:[%s615] sm:%s3]
    %s617 = scalar_lea.vmem [#allocation0], 296
    %618 = vst [vmem:[%s617] sm:%s3] %v616
    %s619 = smul.addr 4, 36
    %s620 = scalar_lea.vmem %s0, %s619
    %v621 = vld [vmem:[%s620] sm:%s3]
    %s622 = scalar_lea.vmem [#allocation0], 288
    %623 = vst [vmem:[%s622] sm:%s3] %v621
    %s624 = smul.addr 4, 35
    %s625 = scalar_lea.vmem %s0, %s624
    %v626 = vld [vmem:[%s625] sm:%s3]
    %s627 = scalar_lea.vmem [#allocation0], 280
    %628 = vst [vmem:[%s627] sm:%s3] %v626
    %s629 = smul.addr 4, 34
    %s630 = scalar_lea.vmem %s0, %s629
    %v631 = vld [vmem:[%s630] sm:%s3]
    %s632 = scalar_lea.vmem [#allocation0], 272
    %633 = vst [vmem:[%s632] sm:%s3] %v631
    %s634 = smul.addr 4, 33
    %s635 = scalar_lea.vmem %s0, %s634
    %v636 = vld [vmem:[%s635] sm:%s3]
    %s637 = scalar_lea.vmem [#allocation0], 264
    %638 = vst [vmem:[%s637] sm:%s3] %v636
    %s639 = smul.addr 4, 32
    %s640 = scalar_lea.vmem %s0, %s639
    %v641 = vld [vmem:[%s640] sm:%s3]
    %s642 = scalar_lea.vmem [#allocation0], 256
    %643 = vst [vmem:[%s642] sm:%s3] %v641
    %s644 = smul.addr 4, 31
    %s645 = scalar_lea.vmem %s0, %s644
    %v646 = vld [vmem:[%s645] sm:%s3]
    %s647 = scalar_lea.vmem [#allocation0], 248
    %648 = vst [vmem:[%s647] sm:%s3] %v646
    %s649 = smul.addr 4, 30
    %s650 = scalar_lea.vmem %s0, %s649
    %v651 = vld [vmem:[%s650] sm:%s3]
    %s652 = scalar_lea.vmem [#allocation0], 240
    %653 = vst [vmem:[%s652] sm:%s3] %v651
    %s654 = smul.addr 4, 29
    %s655 = scalar_lea.vmem %s0, %s654
    %v656 = vld [vmem:[%s655] sm:%s3]
    %s657 = scalar_lea.vmem [#allocation0], 232
    %658 = vst [vmem:[%s657] sm:%s3] %v656
    %s659 = smul.addr 4, 28
    %s660 = scalar_lea.vmem %s0, %s659
    %v661 = vld [vmem:[%s660] sm:%s3]
    %s662 = scalar_lea.vmem [#allocation0], 224
    %663 = vst [vmem:[%s662] sm:%s3] %v661
    %s664 = smul.addr 4, 27
    %s665 = scalar_lea.vmem %s0, %s664
    %v666 = vld [vmem:[%s665] sm:%s3]
    %s667 = scalar_lea.vmem [#allocation0], 216
    %668 = vst [vmem:[%s667] sm:%s3] %v666
    %s669 = smul.addr 4, 26
    %s670 = scalar_lea.vmem %s0, %s669
    %v671 = vld [vmem:[%s670] sm:%s3]
    %s672 = scalar_lea.vmem [#allocation0], 208
    %673 = vst [vmem:[%s672] sm:%s3] %v671
    %s674 = smul.addr 4, 25
    %s675 = scalar_lea.vmem %s0, %s674
    %v676 = vld [vmem:[%s675] sm:%s3]
    %s677 = scalar_lea.vmem [#allocation0], 200
    %678 = vst [vmem:[%s677] sm:%s3] %v676
    %s679 = smul.addr 4, 24
    %s680 = scalar_lea.vmem %s0, %s679
    %v681 = vld [vmem:[%s680] sm:%s3]
    %s682 = scalar_lea.vmem [#allocation0], 192
    %683 = vst [vmem:[%s682] sm:%s3] %v681
    %s684 = smul.addr 4, 23
    %s685 = scalar_lea.vmem %s0, %s684
    %v686 = vld [vmem:[%s685] sm:%s3]
    %s687 = scalar_lea.vmem [#allocation0], 184
    %688 = vst [vmem:[%s687] sm:%s3] %v686
    %s689 = smul.addr 4, 22
    %s690 = scalar_lea.vmem %s0, %s689
    %v691 = vld [vmem:[%s690] sm:%s3]
    %s692 = scalar_lea.vmem [#allocation0], 176
    %693 = vst [vmem:[%s692] sm:%s3] %v691
    %s694 = smul.addr 4, 21
    %s695 = scalar_lea.vmem %s0, %s694
    %v696 = vld [vmem:[%s695] sm:%s3]
    %s697 = scalar_lea.vmem [#allocation0], 168
    %698 = vst [vmem:[%s697] sm:%s3] %v696
    %s699 = smul.addr 4, 20
    %s700 = scalar_lea.vmem %s0, %s699
    %v701 = vld [vmem:[%s700] sm:%s3]
    %s702 = scalar_lea.vmem [#allocation0], 160
    %703 = vst [vmem:[%s702] sm:%s3] %v701
    %s704 = smul.addr 4, 19
    %s705 = scalar_lea.vmem %s0, %s704
    %v706 = vld [vmem:[%s705] sm:%s3]
    %s707 = scalar_lea.vmem [#allocation0], 152
    %708 = vst [vmem:[%s707] sm:%s3] %v706
    %s709 = smul.addr 4, 18
    %s710 = scalar_lea.vmem %s0, %s709
    %v711 = vld [vmem:[%s710] sm:%s3]
    %s712 = scalar_lea.vmem [#allocation0], 144
    %713 = vst [vmem:[%s712] sm:%s3] %v711
    %s714 = smul.addr 4, 17
    %s715 = scalar_lea.vmem %s0, %s714
    %v716 = vld [vmem:[%s715] sm:%s3]
    %s717 = scalar_lea.vmem [#allocation0], 136
    %718 = vst [vmem:[%s717] sm:%s3] %v716
    %s719 = smul.addr 4, 16
    %s720 = scalar_lea.vmem %s0, %s719
    %v721 = vld [vmem:[%s720] sm:%s3]
    %s722 = scalar_lea.vmem [#allocation0], 128
    %723 = vst [vmem:[%s722] sm:%s3] %v721
    %s724 = smul.addr 4, 15
    %s725 = scalar_lea.vmem %s0, %s724
    %v726 = vld [vmem:[%s725] sm:%s3]
    %s727 = scalar_lea.vmem [#allocation0], 120
    %728 = vst [vmem:[%s727] sm:%s3] %v726
    %s729 = smul.addr 4, 14
    %s730 = scalar_lea.vmem %s0, %s729
    %v731 = vld [vmem:[%s730] sm:%s3]
    %s732 = scalar_lea.vmem [#allocation0], 112
    %733 = vst [vmem:[%s732] sm:%s3] %v731
    %s734 = smul.addr 4, 13
    %s735 = scalar_lea.vmem %s0, %s734
    %v736 = vld [vmem:[%s735] sm:%s3]
    %s737 = scalar_lea.vmem [#allocation0], 104
    %738 = vst [vmem:[%s737] sm:%s3] %v736
    %s739 = smul.addr 4, 12
    %s740 = scalar_lea.vmem %s0, %s739
    %v741 = vld [vmem:[%s740] sm:%s3]
    %s742 = scalar_lea.vmem [#allocation0], 96
    %743 = vst [vmem:[%s742] sm:%s3] %v741
    %s744 = smul.addr 4, 11
    %s745 = scalar_lea.vmem %s0, %s744
    %v746 = vld [vmem:[%s745] sm:%s3]
    %s747 = scalar_lea.vmem [#allocation0], 88
    %748 = vst [vmem:[%s747] sm:%s3] %v746
    %s749 = smul.addr 4, 10
    %s750 = scalar_lea.vmem %s0, %s749
    %v751 = vld [vmem:[%s750] sm:%s3]
    %s752 = scalar_lea.vmem [#allocation0], 80
    %753 = vst [vmem:[%s752] sm:%s3] %v751
    %s754 = smul.addr 4, 9
    %s755 = scalar_lea.vmem %s0, %s754
    %v756 = vld [vmem:[%s755] sm:%s3]
    %s757 = scalar_lea.vmem [#allocation0], 72
    %758 = vst [vmem:[%s757] sm:%s3] %v756
    %s759 = smul.addr 4, 8
    %s760 = scalar_lea.vmem %s0, %s759
    %v761 = vld [vmem:[%s760] sm:%s3]
    %s762 = scalar_lea.vmem [#allocation0], 64
    %763 = vst [vmem:[%s762] sm:%s3] %v761
    %s764 = smul.addr 4, 7
    %s765 = scalar_lea.vmem %s0, %s764
    %v766 = vld [vmem:[%s765] sm:%s3]
    %s767 = scalar_lea.vmem [#allocation0], 56
    %768 = vst [vmem:[%s767] sm:%s3] %v766
    %s769 = smul.addr 4, 6
    %s770 = scalar_lea.vmem %s0, %s769
    %v771 = vld [vmem:[%s770] sm:%s3]
    %s772 = scalar_lea.vmem [#allocation0], 48
    %773 = vst [vmem:[%s772] sm:%s3] %v771
    %s774 = smul.addr 4, 5
    %s775 = scalar_lea.vmem %s0, %s774
    %v776 = vld [vmem:[%s775] sm:%s3]
    %s777 = scalar_lea.vmem [#allocation0], 40
    %778 = vst [vmem:[%s777] sm:%s3] %v776
    %s779 = smul.addr 4, 4
    %s780 = scalar_lea.vmem %s0, %s779
    %v781 = vld [vmem:[%s780] sm:%s3]
    %s782 = scalar_lea.vmem [#allocation0], 32
    %783 = vst [vmem:[%s782] sm:%s3] %v781
    %s784 = smul.addr 4, 3
    %s785 = scalar_lea.vmem %s0, %s784
    %v786 = vld [vmem:[%s785] sm:%s3]
    %s787 = scalar_lea.vmem [#allocation0], 24
    %788 = vst [vmem:[%s787] sm:%s3] %v786
    %s789 = smul.addr 4, 2
    %s790 = scalar_lea.vmem %s0, %s789
    %v791 = vld [vmem:[%s790] sm:%s3]
    %s792 = scalar_lea.vmem [#allocation0], 16
    %793 = vst [vmem:[%s792] sm:%s3] %v791
    %s794 = scalar_lea.vmem %s0, 4
    %v795 = vld [vmem:[%s794] sm:%s3]
    %s796 = scalar_lea.vmem [#allocation0], 8
    %797 = vst [vmem:[%s796] sm:%s3] %v795
    %v798 = vld [vmem:[%s0] sm:%s3]
    %799 = vst [vmem:[#allocation0] sm:%s3] %v798
    %s800 = scalar_lea.vmem [#allocation0], 32
    %s801 = smov 3
    %v802 = vld [vmem:[%s800] ss:$2 sm:%s801]
    %vm803 = vcmask 523264
    %s804 = scalar_lea.vmem %s1, 32
    %805 = vst.msk [vmem:[%s804] ss:$72 sm:$0x3] %vm803, %v802
    %s806 = scalar_lea.vmem [#allocation0], 72
    %s807 = smov 3
    %v808 = vld [vmem:[%s806] ss:$2 sm:%s807]
    %vm809 = vcmask 523264
    %s810 = scalar_lea.vmem %s1, 33
    %811 = vst.msk [vmem:[%s810] ss:$72 sm:$0x3] %vm809, %v808
    %s812 = scalar_lea.vmem [#allocation0], 112
    %s813 = smov 3
    %v814 = vld [vmem:[%s812] ss:$2 sm:%s813]
    %vm815 = vcmask 523264
    %s816 = scalar_lea.vmem %s1, 34
    %817 = vst.msk [vmem:[%s816] ss:$72 sm:$0x3] %vm815, %v814
    %s818 = scalar_lea.vmem [#allocation0], 152
    %s819 = smov 3
    %v820 = vld [vmem:[%s818] ss:$2 sm:%s819]
    %vm821 = vcmask 523264
    %s822 = scalar_lea.vmem %s1, 35
    %823 = vst.msk [vmem:[%s822] ss:$72 sm:$0x3] %vm821, %v820
    %s824 = scalar_lea.vmem [#allocation0], 192
    %s825 = smov 3
    %v826 = vld [vmem:[%s824] ss:$2 sm:%s825]
    %vm827 = vcmask 523264
    %s828 = scalar_lea.vmem %s1, 36
    %829 = vst.msk [vmem:[%s828] ss:$72 sm:$0x3] %vm827, %v826
    %s830 = scalar_lea.vmem [#allocation0], 232
    %s831 = smov 3
    %v832 = vld [vmem:[%s830] ss:$2 sm:%s831]
    %vm833 = vcmask 523264
    %s834 = scalar_lea.vmem %s1, 37
    %835 = vst.msk [vmem:[%s834] ss:$72 sm:$0x3] %vm833, %v832
    %s836 = scalar_lea.vmem [#allocation0], 272
    %s837 = smov 3
    %v838 = vld [vmem:[%s836] ss:$2 sm:%s837]
    %vm839 = vcmask 523264
    %s840 = scalar_lea.vmem %s1, 38
    %841 = vst.msk [vmem:[%s840] ss:$72 sm:$0x3] %vm839, %v838
    %s842 = scalar_lea.vmem [#allocation0], 312
    %s843 = smov 3
    %v844 = vld [vmem:[%s842] ss:$2 sm:%s843]
    %vm845 = vcmask 523264
    %s846 = scalar_lea.vmem %s1, 39
    %847 = vst.msk [vmem:[%s846] ss:$72 sm:$0x3] %vm845, %v844
    %s848 = scalar_lea.vmem [#allocation0], 352
    %s849 = smov 3
    %v850 = vld [vmem:[%s848] ss:$2 sm:%s849]
    %vm851 = vcmask 523264
    %s852 = scalar_lea.vmem %s1, 176
    %853 = vst.msk [vmem:[%s852] ss:$72 sm:$0x3] %vm851, %v850
    %s854 = scalar_lea.vmem [#allocation0], 392
    %s855 = smov 3
    %v856 = vld [vmem:[%s854] ss:$2 sm:%s855]
    %vm857 = vcmask 523264
    %s858 = scalar_lea.vmem %s1, 177
    %859 = vst.msk [vmem:[%s858] ss:$72 sm:$0x3] %vm857, %v856
    %s860 = scalar_lea.vmem [#allocation0], 432
    %s861 = smov 3
    %v862 = vld [vmem:[%s860] ss:$2 sm:%s861]
    %vm863 = vcmask 523264
    %s864 = scalar_lea.vmem %s1, 178
    %865 = vst.msk [vmem:[%s864] ss:$72 sm:$0x3] %vm863, %v862
    %s866 = scalar_lea.vmem [#allocation0], 472
    %s867 = smov 3
    %v868 = vld [vmem:[%s866] ss:$2 sm:%s867]
    %vm869 = vcmask 523264
    %s870 = scalar_lea.vmem %s1, 179
    %871 = vst.msk [vmem:[%s870] ss:$72 sm:$0x3] %vm869, %v868
    %s872 = scalar_lea.vmem [#allocation0], 512
    %s873 = smov 3
    %v874 = vld [vmem:[%s872] ss:$2 sm:%s873]
    %vm875 = vcmask 523264
    %s876 = scalar_lea.vmem %s1, 180
    %877 = vst.msk [vmem:[%s876] ss:$72 sm:$0x3] %vm875, %v874
    %s878 = scalar_lea.vmem [#allocation0], 552
    %s879 = smov 3
    %v880 = vld [vmem:[%s878] ss:$2 sm:%s879]
    %vm881 = vcmask 523264
    %s882 = scalar_lea.vmem %s1, 181
    %883 = vst.msk [vmem:[%s882] ss:$72 sm:$0x3] %vm881, %v880
    %s884 = scalar_lea.vmem [#allocation0], 592
    %s885 = smov 3
    %v886 = vld [vmem:[%s884] ss:$2 sm:%s885]
    %vm887 = vcmask 523264
    %s888 = scalar_lea.vmem %s1, 182
    %889 = vst.msk [vmem:[%s888] ss:$72 sm:$0x3] %vm887, %v886
    %s890 = scalar_lea.vmem [#allocation0], 632
    %s891 = smov 3
    %v892 = vld [vmem:[%s890] ss:$2 sm:%s891]
    %vm893 = vcmask 523264
    %s894 = scalar_lea.vmem %s1, 183
    %895 = vst.msk [vmem:[%s894] ss:$72 sm:$0x3] %vm893, %v892
    %s896 = scalar_lea.vmem [#allocation0], 672
    %s897 = smov 3
    %v898 = vld [vmem:[%s896] ss:$2 sm:%s897]
    %vm899 = vcmask 523264
    %s900 = scalar_lea.vmem %s1, 320
    %901 = vst.msk [vmem:[%s900] ss:$72 sm:$0x3] %vm899, %v898
    %s902 = scalar_lea.vmem [#allocation0], 712
    %s903 = smov 3
    %v904 = vld [vmem:[%s902] ss:$2 sm:%s903]
    %vm905 = vcmask 523264
    %s906 = scalar_lea.vmem %s1, 321
    %907 = vst.msk [vmem:[%s906] ss:$72 sm:$0x3] %vm905, %v904
    %s908 = scalar_lea.vmem [#allocation0], 752
    %s909 = smov 3
    %v910 = vld [vmem:[%s908] ss:$2 sm:%s909]
    %vm911 = vcmask 523264
    %s912 = scalar_lea.vmem %s1, 322
    %913 = vst.msk [vmem:[%s912] ss:$72 sm:$0x3] %vm911, %v910
    %s914 = scalar_lea.vmem [#allocation0], 792
    %s915 = smov 3
    %v916 = vld [vmem:[%s914] ss:$2 sm:%s915]
    %vm917 = vcmask 523264
    %s918 = scalar_lea.vmem %s1, 323
    %919 = vst.msk [vmem:[%s918] ss:$72 sm:$0x3] %vm917, %v916
    %s920 = scalar_lea.vmem [#allocation0], 832
    %s921 = smov 3
    %v922 = vld [vmem:[%s920] ss:$2 sm:%s921]
    %vm923 = vcmask 523264
    %s924 = scalar_lea.vmem %s1, 324
    %925 = vst.msk [vmem:[%s924] ss:$72 sm:$0x3] %vm923, %v922
    %s926 = scalar_lea.vmem [#allocation0], 872
    %s927 = smov 3
    %v928 = vld [vmem:[%s926] ss:$2 sm:%s927]
    %vm929 = vcmask 523264
    %s930 = scalar_lea.vmem %s1, 325
    %931 = vst.msk [vmem:[%s930] ss:$72 sm:$0x3] %vm929, %v928
    %s932 = scalar_lea.vmem [#allocation0], 912
    %s933 = smov 3
    %v934 = vld [vmem:[%s932] ss:$2 sm:%s933]
    %vm935 = vcmask 523264
    %s936 = scalar_lea.vmem %s1, 326
    %937 = vst.msk [vmem:[%s936] ss:$72 sm:$0x3] %vm935, %v934
    %s938 = scalar_lea.vmem [#allocation0], 952
    %s939 = smov 3
    %v940 = vld [vmem:[%s938] ss:$2 sm:%s939]
    %vm941 = vcmask 523264
    %s942 = scalar_lea.vmem %s1, 327
    %943 = vst.msk [vmem:[%s942] ss:$72 sm:$0x3] %vm941, %v940
    %s944 = scalar_lea.vmem [#allocation0], 992
    %s945 = smov 3
    %v946 = vld [vmem:[%s944] ss:$2 sm:%s945]
    %vm947 = vcmask 523264
    %s948 = scalar_lea.vmem %s1, 464
    %949 = vst.msk [vmem:[%s948] ss:$72 sm:$0x3] %vm947, %v946
    %s950 = scalar_lea.vmem [#allocation0], 1032
    %s951 = smov 3
    %v952 = vld [vmem:[%s950] ss:$2 sm:%s951]
    %vm953 = vcmask 523264
    %s954 = scalar_lea.vmem %s1, 465
    %955 = vst.msk [vmem:[%s954] ss:$72 sm:$0x3] %vm953, %v952
    %s956 = scalar_lea.vmem [#allocation0], 1072
    %s957 = smov 3
    %v958 = vld [vmem:[%s956] ss:$2 sm:%s957]
    %vm959 = vcmask 523264
    %s960 = scalar_lea.vmem %s1, 466
    %961 = vst.msk [vmem:[%s960] ss:$72 sm:$0x3] %vm959, %v958
    %s962 = scalar_lea.vmem [#allocation0], 1112
    %s963 = smov 3
    %v964 = vld [vmem:[%s962] ss:$2 sm:%s963]
    %vm965 = vcmask 523264
    %s966 = scalar_lea.vmem %s1, 467
    %967 = vst.msk [vmem:[%s966] ss:$72 sm:$0x3] %vm965, %v964
    %s968 = scalar_lea.vmem [#allocation0], 1152
    %s969 = smov 3
    %v970 = vld [vmem:[%s968] ss:$2 sm:%s969]
    %vm971 = vcmask 523264
    %s972 = scalar_lea.vmem %s1, 468
    %973 = vst.msk [vmem:[%s972] ss:$72 sm:$0x3] %vm971, %v970
    %s974 = scalar_lea.vmem [#allocation0], 1192
    %s975 = smov 3
    %v976 = vld [vmem:[%s974] ss:$2 sm:%s975]
    %vm977 = vcmask 523264
    %s978 = scalar_lea.vmem %s1, 469
    %979 = vst.msk [vmem:[%s978] ss:$72 sm:$0x3] %vm977, %v976
    %s980 = scalar_lea.vmem [#allocation0], 1232
    %s981 = smov 3
    %v982 = vld [vmem:[%s980] ss:$2 sm:%s981]
    %vm983 = vcmask 523264
    %s984 = scalar_lea.vmem %s1, 470
    %985 = vst.msk [vmem:[%s984] ss:$72 sm:$0x3] %vm983, %v982
    %s986 = scalar_lea.vmem [#allocation0], 1272
    %s987 = smov 3
    %v988 = vld [vmem:[%s986] ss:$2 sm:%s987]
    %vm989 = vcmask 523264
    %s990 = scalar_lea.vmem %s1, 471
    %991 = vst.msk [vmem:[%s990] ss:$72 sm:$0x3] %vm989, %v988
    %s992 = smov 3
    %v993 = vld [vmem:[#allocation0] ss:$2 sm:%s992]
    %994 = vst [vmem:[%s1] ss:$72 sm:$0x3] %v993
    %s995 = scalar_lea.vmem [#allocation0], 8
    %s996 = smov 3
    %v997 = vld [vmem:[%s995] ss:$2 sm:%s996]
    %s998 = scalar_lea.vmem %s1, 8
    %999 = vst [vmem:[%s998] ss:$72 sm:$0x3] %v997
    %s1000 = scalar_lea.vmem [#allocation0], 16
    %s1001 = smov 3
    %v1002 = vld [vmem:[%s1000] ss:$2 sm:%s1001]
    %s1003 = scalar_lea.vmem %s1, 16
    %1004 = vst [vmem:[%s1003] ss:$72 sm:$0x3] %v1002
    %s1005 = scalar_lea.vmem [#allocation0], 24
    %s1006 = smov 3
    %v1007 = vld [vmem:[%s1005] ss:$2 sm:%s1006]
    %s1008 = scalar_lea.vmem %s1, 24
    %1009 = vst [vmem:[%s1008] ss:$72 sm:$0x3] %v1007
    %s1010 = scalar_lea.vmem [#allocation0], 40
    %s1011 = smov 3
    %v1012 = vld [vmem:[%s1010] ss:$2 sm:%s1011]
    %s1013 = scalar_lea.vmem %s1, 1
    %1014 = vst [vmem:[%s1013] ss:$72 sm:$0x3] %v1012
    %s1015 = scalar_lea.vmem [#allocation0], 48
    %s1016 = smov 3
    %v1017 = vld [vmem:[%s1015] ss:$2 sm:%s1016]
    %s1018 = scalar_lea.vmem %s1, 9
    %1019 = vst [vmem:[%s1018] ss:$72 sm:$0x3] %v1017
    %s1020 = scalar_lea.vmem [#allocation0], 56
    %s1021 = smov 3
    %v1022 = vld [vmem:[%s1020] ss:$2 sm:%s1021]
    %s1023 = scalar_lea.vmem %s1, 17
    %1024 = vst [vmem:[%s1023] ss:$72 sm:$0x3] %v1022
    %s1025 = scalar_lea.vmem [#allocation0], 64
    %s1026 = smov 3
    %v1027 = vld [vmem:[%s1025] ss:$2 sm:%s1026]
    %s1028 = scalar_lea.vmem %s1, 25
    %1029 = vst [vmem:[%s1028] ss:$72 sm:$0x3] %v1027
    %s1030 = scalar_lea.vmem [#allocation0], 80
    %s1031 = smov 3
    %v1032 = vld [vmem:[%s1030] ss:$2 sm:%s1031]
    %s1033 = scalar_lea.vmem %s1, 2
    %1034 = vst [vmem:[%s1033] ss:$72 sm:$0x3] %v1032
    %s1035 = scalar_lea.vmem [#allocation0], 88
    %s1036 = smov 3
    %v1037 = vld [vmem:[%s1035] ss:$2 sm:%s1036]
    %s1038 = scalar_lea.vmem %s1, 10
    %1039 = vst [vmem:[%s1038] ss:$72 sm:$0x3] %v1037
    %s1040 = scalar_lea.vmem [#allocation0], 96
    %s1041 = smov 3
    %v1042 = vld [vmem:[%s1040] ss:$2 sm:%s1041]
    %s1043 = scalar_lea.vmem %s1, 18
    %1044 = vst [vmem:[%s1043] ss:$72 sm:$0x3] %v1042
    %s1045 = scalar_lea.vmem [#allocation0], 104
    %s1046 = smov 3
    %v1047 = vld [vmem:[%s1045] ss:$2 sm:%s1046]
    %s1048 = scalar_lea.vmem %s1, 26
    %1049 = vst [vmem:[%s1048] ss:$72 sm:$0x3] %v1047
    %s1050 = scalar_lea.vmem [#allocation0], 120
    %s1051 = smov 3
    %v1052 = vld [vmem:[%s1050] ss:$2 sm:%s1051]
    %s1053 = scalar_lea.vmem %s1, 3
    %1054 = vst [vmem:[%s1053] ss:$72 sm:$0x3] %v1052
    %s1055 = scalar_lea.vmem [#allocation0], 128
    %s1056 = smov 3
    %v1057 = vld [vmem:[%s1055] ss:$2 sm:%s1056]
    %s1058 = scalar_lea.vmem %s1, 11
    %1059 = vst [vmem:[%s1058] ss:$72 sm:$0x3] %v1057
    %s1060 = scalar_lea.vmem [#allocation0], 136
    %s1061 = smov 3
    %v1062 = vld [vmem:[%s1060] ss:$2 sm:%s1061]
    %s1063 = scalar_lea.vmem %s1, 19
    %1064 = vst [vmem:[%s1063] ss:$72 sm:$0x3] %v1062
    %s1065 = scalar_lea.vmem [#allocation0], 144
    %s1066 = smov 3
    %v1067 = vld [vmem:[%s1065] ss:$2 sm:%s1066]
    %s1068 = scalar_lea.vmem %s1, 27
    %1069 = vst [vmem:[%s1068] ss:$72 sm:$0x3] %v1067
    %s1070 = scalar_lea.vmem [#allocation0], 160
    %s1071 = smov 3
    %v1072 = vld [vmem:[%s1070] ss:$2 sm:%s1071]
    %s1073 = scalar_lea.vmem %s1, 4
    %1074 = vst [vmem:[%s1073] ss:$72 sm:$0x3] %v1072
    %s1075 = scalar_lea.vmem [#allocation0], 168
    %s1076 = smov 3
    %v1077 = vld [vmem:[%s1075] ss:$2 sm:%s1076]
    %s1078 = scalar_lea.vmem %s1, 12
    %1079 = vst [vmem:[%s1078] ss:$72 sm:$0x3] %v1077
    %s1080 = scalar_lea.vmem [#allocation0], 176
    %s1081 = smov 3
    %v1082 = vld [vmem:[%s1080] ss:$2 sm:%s1081]
    %s1083 = scalar_lea.vmem %s1, 20
    %1084 = vst [vmem:[%s1083] ss:$72 sm:$0x3] %v1082
    %s1085 = scalar_lea.vmem [#allocation0], 184
    %s1086 = smov 3
    %v1087 = vld [vmem:[%s1085] ss:$2 sm:%s1086]
    %s1088 = scalar_lea.vmem %s1, 28
    %1089 = vst [vmem:[%s1088] ss:$72 sm:$0x3] %v1087
    %s1090 = scalar_lea.vmem [#allocation0], 200
    %s1091 = smov 3
    %v1092 = vld [vmem:[%s1090] ss:$2 sm:%s1091]
    %s1093 = scalar_lea.vmem %s1, 5
    %1094 = vst [vmem:[%s1093] ss:$72 sm:$0x3] %v1092
    %s1095 = scalar_lea.vmem [#allocation0], 208
    %s1096 = smov 3
    %v1097 = vld [vmem:[%s1095] ss:$2 sm:%s1096]
    %s1098 = scalar_lea.vmem %s1, 13
    %1099 = vst [vmem:[%s1098] ss:$72 sm:$0x3] %v1097
    %s1100 = scalar_lea.vmem [#allocation0], 216
    %s1101 = smov 3
    %v1102 = vld [vmem:[%s1100] ss:$2 sm:%s1101]
    %s1103 = scalar_lea.vmem %s1, 21
    %1104 = vst [vmem:[%s1103] ss:$72 sm:$0x3] %v1102
    %s1105 = scalar_lea.vmem [#allocation0], 224
    %s1106 = smov 3
    %v1107 = vld [vmem:[%s1105] ss:$2 sm:%s1106]
    %s1108 = scalar_lea.vmem %s1, 29
    %1109 = vst [vmem:[%s1108] ss:$72 sm:$0x3] %v1107
    %s1110 = scalar_lea.vmem [#allocation0], 240
    %s1111 = smov 3
    %v1112 = vld [vmem:[%s1110] ss:$2 sm:%s1111]
    %s1113 = scalar_lea.vmem %s1, 6
    %1114 = vst [vmem:[%s1113] ss:$72 sm:$0x3] %v1112
    %s1115 = scalar_lea.vmem [#allocation0], 248
    %s1116 = smov 3
    %v1117 = vld [vmem:[%s1115] ss:$2 sm:%s1116]
    %s1118 = scalar_lea.vmem %s1, 14
    %1119 = vst [vmem:[%s1118] ss:$72 sm:$0x3] %v1117
    %s1120 = scalar_lea.vmem [#allocation0], 256
    %s1121 = smov 3
    %v1122 = vld [vmem:[%s1120] ss:$2 sm:%s1121]
    %s1123 = scalar_lea.vmem %s1, 22
    %1124 = vst [vmem:[%s1123] ss:$72 sm:$0x3] %v1122
    %s1125 = scalar_lea.vmem [#allocation0], 264
    %s1126 = smov 3
    %v1127 = vld [vmem:[%s1125] ss:$2 sm:%s1126]
    %s1128 = scalar_lea.vmem %s1, 30
    %1129 = vst [vmem:[%s1128] ss:$72 sm:$0x3] %v1127
    %s1130 = scalar_lea.vmem [#allocation0], 280
    %s1131 = smov 3
    %v1132 = vld [vmem:[%s1130] ss:$2 sm:%s1131]
    %s1133 = scalar_lea.vmem %s1, 7
    %1134 = vst [vmem:[%s1133] ss:$72 sm:$0x3] %v1132
    %s1135 = scalar_lea.vmem [#allocation0], 288
    %s1136 = smov 3
    %v1137 = vld [vmem:[%s1135] ss:$2 sm:%s1136]
    %s1138 = scalar_lea.vmem %s1, 15
    %1139 = vst [vmem:[%s1138] ss:$72 sm:$0x3] %v1137
    %s1140 = scalar_lea.vmem [#allocation0], 296
    %s1141 = smov 3
    %v1142 = vld [vmem:[%s1140] ss:$2 sm:%s1141]
    %s1143 = scalar_lea.vmem %s1, 23
    %1144 = vst [vmem:[%s1143] ss:$72 sm:$0x3] %v1142
    %s1145 = scalar_lea.vmem [#allocation0], 304
    %s1146 = smov 3
    %v1147 = vld [vmem:[%s1145] ss:$2 sm:%s1146]
    %s1148 = scalar_lea.vmem %s1, 31
    %1149 = vst [vmem:[%s1148] ss:$72 sm:$0x3] %v1147
    %s1150 = scalar_lea.vmem [#allocation0], 320
    %s1151 = smov 3
    %v1152 = vld [vmem:[%s1150] ss:$2 sm:%s1151]
    %s1153 = scalar_lea.vmem %s1, 144
    %1154 = vst [vmem:[%s1153] ss:$72 sm:$0x3] %v1152
    %s1155 = scalar_lea.vmem [#allocation0], 328
    %s1156 = smov 3
    %v1157 = vld [vmem:[%s1155] ss:$2 sm:%s1156]
    %s1158 = scalar_lea.vmem %s1, 152
    %1159 = vst [vmem:[%s1158] ss:$72 sm:$0x3] %v1157
    %s1160 = scalar_lea.vmem [#allocation0], 336
    %s1161 = smov 3
    %v1162 = vld [vmem:[%s1160] ss:$2 sm:%s1161]
    %s1163 = scalar_lea.vmem %s1, 160
    %1164 = vst [vmem:[%s1163] ss:$72 sm:$0x3] %v1162
    %s1165 = scalar_lea.vmem [#allocation0], 344
    %s1166 = smov 3
    %v1167 = vld [vmem:[%s1165] ss:$2 sm:%s1166]
    %s1168 = scalar_lea.vmem %s1, 168
    %1169 = vst [vmem:[%s1168] ss:$72 sm:$0x3] %v1167
    %s1170 = scalar_lea.vmem [#allocation0], 360
    %s1171 = smov 3
    %v1172 = vld [vmem:[%s1170] ss:$2 sm:%s1171]
    %s1173 = scalar_lea.vmem %s1, 145
    %1174 = vst [vmem:[%s1173] ss:$72 sm:$0x3] %v1172
    %s1175 = scalar_lea.vmem [#allocation0], 368
    %s1176 = smov 3
    %v1177 = vld [vmem:[%s1175] ss:$2 sm:%s1176]
    %s1178 = scalar_lea.vmem %s1, 153
    %1179 = vst [vmem:[%s1178] ss:$72 sm:$0x3] %v1177
    %s1180 = scalar_lea.vmem [#allocation0], 376
    %s1181 = smov 3
    %v1182 = vld [vmem:[%s1180] ss:$2 sm:%s1181]
    %s1183 = scalar_lea.vmem %s1, 161
    %1184 = vst [vmem:[%s1183] ss:$72 sm:$0x3] %v1182
    %s1185 = scalar_lea.vmem [#allocation0], 384
    %s1186 = smov 3
    %v1187 = vld [vmem:[%s1185] ss:$2 sm:%s1186]
    %s1188 = scalar_lea.vmem %s1, 169
    %1189 = vst [vmem:[%s1188] ss:$72 sm:$0x3] %v1187
    %s1190 = scalar_lea.vmem [#allocation0], 400
    %s1191 = smov 3
    %v1192 = vld [vmem:[%s1190] ss:$2 sm:%s1191]
    %s1193 = scalar_lea.vmem %s1, 146
    %1194 = vst [vmem:[%s1193] ss:$72 sm:$0x3] %v1192
    %s1195 = scalar_lea.vmem [#allocation0], 408
    %s1196 = smov 3
    %v1197 = vld [vmem:[%s1195] ss:$2 sm:%s1196]
    %s1198 = scalar_lea.vmem %s1, 154
    %1199 = vst [vmem:[%s1198] ss:$72 sm:$0x3] %v1197
    %s1200 = scalar_lea.vmem [#allocation0], 416
    %s1201 = smov 3
    %v1202 = vld [vmem:[%s1200] ss:$2 sm:%s1201]
    %s1203 = scalar_lea.vmem %s1, 162
    %1204 = vst [vmem:[%s1203] ss:$72 sm:$0x3] %v1202
    %s1205 = scalar_lea.vmem [#allocation0], 424
    %s1206 = smov 3
    %v1207 = vld [vmem:[%s1205] ss:$2 sm:%s1206]
    %s1208 = scalar_lea.vmem %s1, 170
    %1209 = vst [vmem:[%s1208] ss:$72 sm:$0x3] %v1207
    %s1210 = scalar_lea.vmem [#allocation0], 440
    %s1211 = smov 3
    %v1212 = vld [vmem:[%s1210] ss:$2 sm:%s1211]
    %s1213 = scalar_lea.vmem %s1, 147
    %1214 = vst [vmem:[%s1213] ss:$72 sm:$0x3] %v1212
    %s1215 = scalar_lea.vmem [#allocation0], 448
    %s1216 = smov 3
    %v1217 = vld [vmem:[%s1215] ss:$2 sm:%s1216]
    %s1218 = scalar_lea.vmem %s1, 155
    %1219 = vst [vmem:[%s1218] ss:$72 sm:$0x3] %v1217
    %s1220 = scalar_lea.vmem [#allocation0], 456
    %s1221 = smov 3
    %v1222 = vld [vmem:[%s1220] ss:$2 sm:%s1221]
    %s1223 = scalar_lea.vmem %s1, 163
    %1224 = vst [vmem:[%s1223] ss:$72 sm:$0x3] %v1222
    %s1225 = scalar_lea.vmem [#allocation0], 464
    %s1226 = smov 3
    %v1227 = vld [vmem:[%s1225] ss:$2 sm:%s1226]
    %s1228 = scalar_lea.vmem %s1, 171
    %1229 = vst [vmem:[%s1228] ss:$72 sm:$0x3] %v1227
    %s1230 = scalar_lea.vmem [#allocation0], 480
    %s1231 = smov 3
    %v1232 = vld [vmem:[%s1230] ss:$2 sm:%s1231]
    %s1233 = scalar_lea.vmem %s1, 148
    %1234 = vst [vmem:[%s1233] ss:$72 sm:$0x3] %v1232
    %s1235 = scalar_lea.vmem [#allocation0], 488
    %s1236 = smov 3
    %v1237 = vld [vmem:[%s1235] ss:$2 sm:%s1236]
    %s1238 = scalar_lea.vmem %s1, 156
    %1239 = vst [vmem:[%s1238] ss:$72 sm:$0x3] %v1237
    %s1240 = scalar_lea.vmem [#allocation0], 496
    %s1241 = smov 3
    %v1242 = vld [vmem:[%s1240] ss:$2 sm:%s1241]
    %s1243 = scalar_lea.vmem %s1, 164
    %1244 = vst [vmem:[%s1243] ss:$72 sm:$0x3] %v1242
    %s1245 = scalar_lea.vmem [#allocation0], 504
    %s1246 = smov 3
    %v1247 = vld [vmem:[%s1245] ss:$2 sm:%s1246]
    %s1248 = scalar_lea.vmem %s1, 172
    %1249 = vst [vmem:[%s1248] ss:$72 sm:$0x3] %v1247
    %s1250 = scalar_lea.vmem [#allocation0], 520
    %s1251 = smov 3
    %v1252 = vld [vmem:[%s1250] ss:$2 sm:%s1251]
    %s1253 = scalar_lea.vmem %s1, 149
    %1254 = vst [vmem:[%s1253] ss:$72 sm:$0x3] %v1252
    %s1255 = scalar_lea.vmem [#allocation0], 528
    %s1256 = smov 3
    %v1257 = vld [vmem:[%s1255] ss:$2 sm:%s1256]
    %s1258 = scalar_lea.vmem %s1, 157
    %1259 = vst [vmem:[%s1258] ss:$72 sm:$0x3] %v1257
    %s1260 = scalar_lea.vmem [#allocation0], 536
    %s1261 = smov 3
    %v1262 = vld [vmem:[%s1260] ss:$2 sm:%s1261]
    %s1263 = scalar_lea.vmem %s1, 165
    %1264 = vst [vmem:[%s1263] ss:$72 sm:$0x3] %v1262
    %s1265 = scalar_lea.vmem [#allocation0], 544
    %s1266 = smov 3
    %v1267 = vld [vmem:[%s1265] ss:$2 sm:%s1266]
    %s1268 = scalar_lea.vmem %s1, 173
    %1269 = vst [vmem:[%s1268] ss:$72 sm:$0x3] %v1267
    %s1270 = scalar_lea.vmem [#allocation0], 560
    %s1271 = smov 3
    %v1272 = vld [vmem:[%s1270] ss:$2 sm:%s1271]
    %s1273 = scalar_lea.vmem %s1, 150
    %1274 = vst [vmem:[%s1273] ss:$72 sm:$0x3] %v1272
    %s1275 = scalar_lea.vmem [#allocation0], 568
    %s1276 = smov 3
    %v1277 = vld [vmem:[%s1275] ss:$2 sm:%s1276]
    %s1278 = scalar_lea.vmem %s1, 158
    %1279 = vst [vmem:[%s1278] ss:$72 sm:$0x3] %v1277
    %s1280 = scalar_lea.vmem [#allocation0], 576
    %s1281 = smov 3
    %v1282 = vld [vmem:[%s1280] ss:$2 sm:%s1281]
    %s1283 = scalar_lea.vmem %s1, 166
    %1284 = vst [vmem:[%s1283] ss:$72 sm:$0x3] %v1282
    %s1285 = scalar_lea.vmem [#allocation0], 584
    %s1286 = smov 3
    %v1287 = vld [vmem:[%s1285] ss:$2 sm:%s1286]
    %s1288 = scalar_lea.vmem %s1, 174
    %1289 = vst [vmem:[%s1288] ss:$72 sm:$0x3] %v1287
    %s1290 = scalar_lea.vmem [#allocation0], 600
    %s1291 = smov 3
    %v1292 = vld [vmem:[%s1290] ss:$2 sm:%s1291]
    %s1293 = scalar_lea.vmem %s1, 151
    %1294 = vst [vmem:[%s1293] ss:$72 sm:$0x3] %v1292
    %s1295 = scalar_lea.vmem [#allocation0], 608
    %s1296 = smov 3
    %v1297 = vld [vmem:[%s1295] ss:$2 sm:%s1296]
    %s1298 = scalar_lea.vmem %s1, 159
    %1299 = vst [vmem:[%s1298] ss:$72 sm:$0x3] %v1297
    %s1300 = scalar_lea.vmem [#allocation0], 616
    %s1301 = smov 3
    %v1302 = vld [vmem:[%s1300] ss:$2 sm:%s1301]
    %s1303 = scalar_lea.vmem %s1, 167
    %1304 = vst [vmem:[%s1303] ss:$72 sm:$0x3] %v1302
    %s1305 = scalar_lea.vmem [#allocation0], 624
    %s1306 = smov 3
    %v1307 = vld [vmem:[%s1305] ss:$2 sm:%s1306]
    %s1308 = scalar_lea.vmem %s1, 175
    %1309 = vst [vmem:[%s1308] ss:$72 sm:$0x3] %v1307
    %s1310 = scalar_lea.vmem [#allocation0], 640
    %s1311 = smov 3
    %v1312 = vld [vmem:[%s1310] ss:$2 sm:%s1311]
    %s1313 = scalar_lea.vmem %s1, 288
    %1314 = vst [vmem:[%s1313] ss:$72 sm:$0x3] %v1312
    %s1315 = scalar_lea.vmem [#allocation0], 648
    %s1316 = smov 3
    %v1317 = vld [vmem:[%s1315] ss:$2 sm:%s1316]
    %s1318 = scalar_lea.vmem %s1, 296
    %1319 = vst [vmem:[%s1318] ss:$72 sm:$0x3] %v1317
    %s1320 = scalar_lea.vmem [#allocation0], 656
    %s1321 = smov 3
    %v1322 = vld [vmem:[%s1320] ss:$2 sm:%s1321]
    %s1323 = scalar_lea.vmem %s1, 304
    %1324 = vst [vmem:[%s1323] ss:$72 sm:$0x3] %v1322
    %s1325 = scalar_lea.vmem [#allocation0], 664
    %s1326 = smov 3
    %v1327 = vld [vmem:[%s1325] ss:$2 sm:%s1326]
    %s1328 = scalar_lea.vmem %s1, 312
    %1329 = vst [vmem:[%s1328] ss:$72 sm:$0x3] %v1327
    %s1330 = scalar_lea.vmem [#allocation0], 680
    %s1331 = smov 3
    %v1332 = vld [vmem:[%s1330] ss:$2 sm:%s1331]
    %s1333 = scalar_lea.vmem %s1, 289
    %1334 = vst [vmem:[%s1333] ss:$72 sm:$0x3] %v1332
    %s1335 = scalar_lea.vmem [#allocation0], 688
    %s1336 = smov 3
    %v1337 = vld [vmem:[%s1335] ss:$2 sm:%s1336]
    %s1338 = scalar_lea.vmem %s1, 297
    %1339 = vst [vmem:[%s1338] ss:$72 sm:$0x3] %v1337
    %s1340 = scalar_lea.vmem [#allocation0], 696
    %s1341 = smov 3
    %v1342 = vld [vmem:[%s1340] ss:$2 sm:%s1341]
    %s1343 = scalar_lea.vmem %s1, 305
    %1344 = vst [vmem:[%s1343] ss:$72 sm:$0x3] %v1342
    %s1345 = scalar_lea.vmem [#allocation0], 704
    %s1346 = smov 3
    %v1347 = vld [vmem:[%s1345] ss:$2 sm:%s1346]
    %s1348 = scalar_lea.vmem %s1, 313
    %1349 = vst [vmem:[%s1348] ss:$72 sm:$0x3] %v1347
    %s1350 = scalar_lea.vmem [#allocation0], 720
    %s1351 = smov 3
    %v1352 = vld [vmem:[%s1350] ss:$2 sm:%s1351]
    %s1353 = scalar_lea.vmem %s1, 290
    %1354 = vst [vmem:[%s1353] ss:$72 sm:$0x3] %v1352
    %s1355 = scalar_lea.vmem [#allocation0], 728
    %s1356 = smov 3
    %v1357 = vld [vmem:[%s1355] ss:$2 sm:%s1356]
    %s1358 = scalar_lea.vmem %s1, 298
    %1359 = vst [vmem:[%s1358] ss:$72 sm:$0x3] %v1357
    %s1360 = scalar_lea.vmem [#allocation0], 736
    %s1361 = smov 3
    %v1362 = vld [vmem:[%s1360] ss:$2 sm:%s1361]
    %s1363 = scalar_lea.vmem %s1, 306
    %1364 = vst [vmem:[%s1363] ss:$72 sm:$0x3] %v1362
    %s1365 = scalar_lea.vmem [#allocation0], 744
    %s1366 = smov 3
    %v1367 = vld [vmem:[%s1365] ss:$2 sm:%s1366]
    %s1368 = scalar_lea.vmem %s1, 314
    %1369 = vst [vmem:[%s1368] ss:$72 sm:$0x3] %v1367
    %s1370 = scalar_lea.vmem [#allocation0], 760
    %s1371 = smov 3
    %v1372 = vld [vmem:[%s1370] ss:$2 sm:%s1371]
    %s1373 = scalar_lea.vmem %s1, 291
    %1374 = vst [vmem:[%s1373] ss:$72 sm:$0x3] %v1372
    %s1375 = scalar_lea.vmem [#allocation0], 768
    %s1376 = smov 3
    %v1377 = vld [vmem:[%s1375] ss:$2 sm:%s1376]
    %s1378 = scalar_lea.vmem %s1, 299
    %1379 = vst [vmem:[%s1378] ss:$72 sm:$0x3] %v1377
    %s1380 = scalar_lea.vmem [#allocation0], 776
    %s1381 = smov 3
    %v1382 = vld [vmem:[%s1380] ss:$2 sm:%s1381]
    %s1383 = scalar_lea.vmem %s1, 307
    %1384 = vst [vmem:[%s1383] ss:$72 sm:$0x3] %v1382
    %s1385 = scalar_lea.vmem [#allocation0], 784
    %s1386 = smov 3
    %v1387 = vld [vmem:[%s1385] ss:$2 sm:%s1386]
    %s1388 = scalar_lea.vmem %s1, 315
    %1389 = vst [vmem:[%s1388] ss:$72 sm:$0x3] %v1387
    %s1390 = scalar_lea.vmem [#allocation0], 800
    %s1391 = smov 3
    %v1392 = vld [vmem:[%s1390] ss:$2 sm:%s1391]
    %s1393 = scalar_lea.vmem %s1, 292
    %1394 = vst [vmem:[%s1393] ss:$72 sm:$0x3] %v1392
    %s1395 = scalar_lea.vmem [#allocation0], 808
    %s1396 = smov 3
    %v1397 = vld [vmem:[%s1395] ss:$2 sm:%s1396]
    %s1398 = scalar_lea.vmem %s1, 300
    %1399 = vst [vmem:[%s1398] ss:$72 sm:$0x3] %v1397
    %s1400 = scalar_lea.vmem [#allocation0], 816
    %s1401 = smov 3
    %v1402 = vld [vmem:[%s1400] ss:$2 sm:%s1401]
    %s1403 = scalar_lea.vmem %s1, 308
    %1404 = vst [vmem:[%s1403] ss:$72 sm:$0x3] %v1402
    %s1405 = scalar_lea.vmem [#allocation0], 824
    %s1406 = smov 3
    %v1407 = vld [vmem:[%s1405] ss:$2 sm:%s1406]
    %s1408 = scalar_lea.vmem %s1, 316
    %1409 = vst [vmem:[%s1408] ss:$72 sm:$0x3] %v1407
    %s1410 = scalar_lea.vmem [#allocation0], 840
    %s1411 = smov 3
    %v1412 = vld [vmem:[%s1410] ss:$2 sm:%s1411]
    %s1413 = scalar_lea.vmem %s1, 293
    %1414 = vst [vmem:[%s1413] ss:$72 sm:$0x3] %v1412
    %s1415 = scalar_lea.vmem [#allocation0], 848
    %s1416 = smov 3
    %v1417 = vld [vmem:[%s1415] ss:$2 sm:%s1416]
    %s1418 = scalar_lea.vmem %s1, 301
    %1419 = vst [vmem:[%s1418] ss:$72 sm:$0x3] %v1417
    %s1420 = scalar_lea.vmem [#allocation0], 856
    %s1421 = smov 3
    %v1422 = vld [vmem:[%s1420] ss:$2 sm:%s1421]
    %s1423 = scalar_lea.vmem %s1, 309
    %1424 = vst [vmem:[%s1423] ss:$72 sm:$0x3] %v1422
    %s1425 = scalar_lea.vmem [#allocation0], 864
    %s1426 = smov 3
    %v1427 = vld [vmem:[%s1425] ss:$2 sm:%s1426]
    %s1428 = scalar_lea.vmem %s1, 317
    %1429 = vst [vmem:[%s1428] ss:$72 sm:$0x3] %v1427
    %s1430 = scalar_lea.vmem [#allocation0], 880
    %s1431 = smov 3
    %v1432 = vld [vmem:[%s1430] ss:$2 sm:%s1431]
    %s1433 = scalar_lea.vmem %s1, 294
    %1434 = vst [vmem:[%s1433] ss:$72 sm:$0x3] %v1432
    %s1435 = scalar_lea.vmem [#allocation0], 888
    %s1436 = smov 3
    %v1437 = vld [vmem:[%s1435] ss:$2 sm:%s1436]
    %s1438 = scalar_lea.vmem %s1, 302
    %1439 = vst [vmem:[%s1438] ss:$72 sm:$0x3] %v1437
    %s1440 = scalar_lea.vmem [#allocation0], 896
    %s1441 = smov 3
    %v1442 = vld [vmem:[%s1440] ss:$2 sm:%s1441]
    %s1443 = scalar_lea.vmem %s1, 310
    %1444 = vst [vmem:[%s1443] ss:$72 sm:$0x3] %v1442
    %s1445 = scalar_lea.vmem [#allocation0], 904
    %s1446 = smov 3
    %v1447 = vld [vmem:[%s1445] ss:$2 sm:%s1446]
    %s1448 = scalar_lea.vmem %s1, 318
    %1449 = vst [vmem:[%s1448] ss:$72 sm:$0x3] %v1447
    %s1450 = scalar_lea.vmem [#allocation0], 920
    %s1451 = smov 3
    %v1452 = vld [vmem:[%s1450] ss:$2 sm:%s1451]
    %s1453 = scalar_lea.vmem %s1, 295
    %1454 = vst [vmem:[%s1453] ss:$72 sm:$0x3] %v1452
    %s1455 = scalar_lea.vmem [#allocation0], 928
    %s1456 = smov 3
    %v1457 = vld [vmem:[%s1455] ss:$2 sm:%s1456]
    %s1458 = scalar_lea.vmem %s1, 303
    %1459 = vst [vmem:[%s1458] ss:$72 sm:$0x3] %v1457
    %s1460 = scalar_lea.vmem [#allocation0], 936
    %s1461 = smov 3
    %v1462 = vld [vmem:[%s1460] ss:$2 sm:%s1461]
    %s1463 = scalar_lea.vmem %s1, 311
    %1464 = vst [vmem:[%s1463] ss:$72 sm:$0x3] %v1462
    %s1465 = scalar_lea.vmem [#allocation0], 944
    %s1466 = smov 3
    %v1467 = vld [vmem:[%s1465] ss:$2 sm:%s1466]
    %s1468 = scalar_lea.vmem %s1, 319
    %1469 = vst [vmem:[%s1468] ss:$72 sm:$0x3] %v1467
    %s1470 = scalar_lea.vmem [#allocation0], 960
    %s1471 = smov 3
    %v1472 = vld [vmem:[%s1470] ss:$2 sm:%s1471]
    %s1473 = scalar_lea.vmem %s1, 432
    %1474 = vst [vmem:[%s1473] ss:$72 sm:$0x3] %v1472
    %s1475 = scalar_lea.vmem [#allocation0], 968
    %s1476 = smov 3
    %v1477 = vld [vmem:[%s1475] ss:$2 sm:%s1476]
    %s1478 = scalar_lea.vmem %s1, 440
    %1479 = vst [vmem:[%s1478] ss:$72 sm:$0x3] %v1477
    %s1480 = scalar_lea.vmem [#allocation0], 976
    %s1481 = smov 3
    %v1482 = vld [vmem:[%s1480] ss:$2 sm:%s1481]
    %s1483 = scalar_lea.vmem %s1, 448
    %1484 = vst [vmem:[%s1483] ss:$72 sm:$0x3] %v1482
    %s1485 = scalar_lea.vmem [#allocation0], 984
    %s1486 = smov 3
    %v1487 = vld [vmem:[%s1485] ss:$2 sm:%s1486]
    %s1488 = scalar_lea.vmem %s1, 456
    %1489 = vst [vmem:[%s1488] ss:$72 sm:$0x3] %v1487
    %s1490 = scalar_lea.vmem [#allocation0], 1000
    %s1491 = smov 3
    %v1492 = vld [vmem:[%s1490] ss:$2 sm:%s1491]
    %s1493 = scalar_lea.vmem %s1, 433
    %1494 = vst [vmem:[%s1493] ss:$72 sm:$0x3] %v1492
    %s1495 = scalar_lea.vmem [#allocation0], 1008
    %s1496 = smov 3
    %v1497 = vld [vmem:[%s1495] ss:$2 sm:%s1496]
    %s1498 = scalar_lea.vmem %s1, 441
    %1499 = vst [vmem:[%s1498] ss:$72 sm:$0x3] %v1497
    %s1500 = scalar_lea.vmem [#allocation0], 1016
    %s1501 = smov 3
    %v1502 = vld [vmem:[%s1500] ss:$2 sm:%s1501]
    %s1503 = scalar_lea.vmem %s1, 449
    %1504 = vst [vmem:[%s1503] ss:$72 sm:$0x3] %v1502
    %s1505 = scalar_lea.vmem [#allocation0], 1024
    %s1506 = smov 3
    %v1507 = vld [vmem:[%s1505] ss:$2 sm:%s1506]
    %s1508 = scalar_lea.vmem %s1, 457
    %1509 = vst [vmem:[%s1508] ss:$72 sm:$0x3] %v1507
    %s1510 = scalar_lea.vmem [#allocation0], 1040
    %s1511 = smov 3
    %v1512 = vld [vmem:[%s1510] ss:$2 sm:%s1511]
    %s1513 = scalar_lea.vmem %s1, 434
    %1514 = vst [vmem:[%s1513] ss:$72 sm:$0x3] %v1512
    %s1515 = scalar_lea.vmem [#allocation0], 1048
    %s1516 = smov 3
    %v1517 = vld [vmem:[%s1515] ss:$2 sm:%s1516]
    %s1518 = scalar_lea.vmem %s1, 442
    %1519 = vst [vmem:[%s1518] ss:$72 sm:$0x3] %v1517
    %s1520 = scalar_lea.vmem [#allocation0], 1056
    %s1521 = smov 3
    %v1522 = vld [vmem:[%s1520] ss:$2 sm:%s1521]
    %s1523 = scalar_lea.vmem %s1, 450
    %1524 = vst [vmem:[%s1523] ss:$72 sm:$0x3] %v1522
    %s1525 = scalar_lea.vmem [#allocation0], 1064
    %s1526 = smov 3
    %v1527 = vld [vmem:[%s1525] ss:$2 sm:%s1526]
    %s1528 = scalar_lea.vmem %s1, 458
    %1529 = vst [vmem:[%s1528] ss:$72 sm:$0x3] %v1527
    %s1530 = scalar_lea.vmem [#allocation0], 1080
    %s1531 = smov 3
    %v1532 = vld [vmem:[%s1530] ss:$2 sm:%s1531]
    %s1533 = scalar_lea.vmem %s1, 435
    %1534 = vst [vmem:[%s1533] ss:$72 sm:$0x3] %v1532
    %s1535 = scalar_lea.vmem [#allocation0], 1088
    %s1536 = smov 3
    %v1537 = vld [vmem:[%s1535] ss:$2 sm:%s1536]
    %s1538 = scalar_lea.vmem %s1, 443
    %1539 = vst [vmem:[%s1538] ss:$72 sm:$0x3] %v1537
    %s1540 = scalar_lea.vmem [#allocation0], 1096
    %s1541 = smov 3
    %v1542 = vld [vmem:[%s1540] ss:$2 sm:%s1541]
    %s1543 = scalar_lea.vmem %s1, 451
    %1544 = vst [vmem:[%s1543] ss:$72 sm:$0x3] %v1542
    %s1545 = scalar_lea.vmem [#allocation0], 1104
    %s1546 = smov 3
    %v1547 = vld [vmem:[%s1545] ss:$2 sm:%s1546]
    %s1548 = scalar_lea.vmem %s1, 459
    %1549 = vst [vmem:[%s1548] ss:$72 sm:$0x3] %v1547
    %s1550 = scalar_lea.vmem [#allocation0], 1120
    %s1551 = smov 3
    %v1552 = vld [vmem:[%s1550] ss:$2 sm:%s1551]
    %s1553 = scalar_lea.vmem %s1, 436
    %1554 = vst [vmem:[%s1553] ss:$72 sm:$0x3] %v1552
    %s1555 = scalar_lea.vmem [#allocation0], 1128
    %s1556 = smov 3
    %v1557 = vld [vmem:[%s1555] ss:$2 sm:%s1556]
    %s1558 = scalar_lea.vmem %s1, 444
    %1559 = vst [vmem:[%s1558] ss:$72 sm:$0x3] %v1557
    %s1560 = scalar_lea.vmem [#allocation0], 1136
    %s1561 = smov 3
    %v1562 = vld [vmem:[%s1560] ss:$2 sm:%s1561]
    %s1563 = scalar_lea.vmem %s1, 452
    %1564 = vst [vmem:[%s1563] ss:$72 sm:$0x3] %v1562
    %s1565 = scalar_lea.vmem [#allocation0], 1144
    %s1566 = smov 3
    %v1567 = vld [vmem:[%s1565] ss:$2 sm:%s1566]
    %s1568 = scalar_lea.vmem %s1, 460
    %1569 = vst [vmem:[%s1568] ss:$72 sm:$0x3] %v1567
    %s1570 = scalar_lea.vmem [#allocation0], 1160
    %s1571 = smov 3
    %v1572 = vld [vmem:[%s1570] ss:$2 sm:%s1571]
    %s1573 = scalar_lea.vmem %s1, 437
    %1574 = vst [vmem:[%s1573] ss:$72 sm:$0x3] %v1572
    %s1575 = scalar_lea.vmem [#allocation0], 1168
    %s1576 = smov 3
    %v1577 = vld [vmem:[%s1575] ss:$2 sm:%s1576]
    %s1578 = scalar_lea.vmem %s1, 445
    %1579 = vst [vmem:[%s1578] ss:$72 sm:$0x3] %v1577
    %s1580 = scalar_lea.vmem [#allocation0], 1176
    %s1581 = smov 3
    %v1582 = vld [vmem:[%s1580] ss:$2 sm:%s1581]
    %s1583 = scalar_lea.vmem %s1, 453
    %1584 = vst [vmem:[%s1583] ss:$72 sm:$0x3] %v1582
    %s1585 = scalar_lea.vmem [#allocation0], 1184
    %s1586 = smov 3
    %v1587 = vld [vmem:[%s1585] ss:$2 sm:%s1586]
    %s1588 = scalar_lea.vmem %s1, 461
    %1589 = vst [vmem:[%s1588] ss:$72 sm:$0x3] %v1587
    %s1590 = scalar_lea.vmem [#allocation0], 1200
    %s1591 = smov 3
    %v1592 = vld [vmem:[%s1590] ss:$2 sm:%s1591]
    %s1593 = scalar_lea.vmem %s1, 438
    %1594 = vst [vmem:[%s1593] ss:$72 sm:$0x3] %v1592
    %s1595 = scalar_lea.vmem [#allocation0], 1208
    %s1596 = smov 3
    %v1597 = vld [vmem:[%s1595] ss:$2 sm:%s1596]
    %s1598 = scalar_lea.vmem %s1, 446
    %1599 = vst [vmem:[%s1598] ss:$72 sm:$0x3] %v1597
    %s1600 = scalar_lea.vmem [#allocation0], 1216
    %s1601 = smov 3
    %v1602 = vld [vmem:[%s1600] ss:$2 sm:%s1601]
    %s1603 = scalar_lea.vmem %s1, 454
    %1604 = vst [vmem:[%s1603] ss:$72 sm:$0x3] %v1602
    %s1605 = scalar_lea.vmem [#allocation0], 1224
    %s1606 = smov 3
    %v1607 = vld [vmem:[%s1605] ss:$2 sm:%s1606]
    %s1608 = scalar_lea.vmem %s1, 462
    %1609 = vst [vmem:[%s1608] ss:$72 sm:$0x3] %v1607
    %s1610 = scalar_lea.vmem [#allocation0], 1240
    %s1611 = smov 3
    %v1612 = vld [vmem:[%s1610] ss:$2 sm:%s1611]
    %s1613 = scalar_lea.vmem %s1, 439
    %1614 = vst [vmem:[%s1613] ss:$72 sm:$0x3] %v1612
    %s1615 = scalar_lea.vmem [#allocation0], 1248
    %s1616 = smov 3
    %v1617 = vld [vmem:[%s1615] ss:$2 sm:%s1616]
    %s1618 = scalar_lea.vmem %s1, 447
    %1619 = vst [vmem:[%s1618] ss:$72 sm:$0x3] %v1617
    %s1620 = scalar_lea.vmem [#allocation0], 1256
    %s1621 = smov 3
    %v1622 = vld [vmem:[%s1620] ss:$2 sm:%s1621]
    %s1623 = scalar_lea.vmem %s1, 455
    %1624 = vst [vmem:[%s1623] ss:$72 sm:$0x3] %v1622
    %s1625 = scalar_lea.vmem [#allocation0], 1264
    %s1626 = smov 3
    %v1627 = vld [vmem:[%s1625] ss:$2 sm:%s1626]
    %s1628 = scalar_lea.vmem %s1, 463
    %1629 = vst [vmem:[%s1628] ss:$72 sm:$0x3] %v1627
    %s1630 = scalar_lea.vmem [#allocation0], 19
    %v1631 = vld [vmem:[%s1630] ss:$40 sm:$0xf]
    %s1632 = scalar_lea.vmem [#allocation0], 19
    %v1633 = vld [vmem:[%s1632] ss:$40 sm:$0xf0]
    %vm1634 = vcmask 1047556
    %v1635 = vsel %vm1634, %v1633, %v1631
    %s1636 = scalar_lea.vmem [#allocation0], 1
    %v1637 = vld [vmem:[%s1636] ss:$40 sm:$0xf]
    %s1638 = scalar_lea.vmem [#allocation0], 1
    %v1639 = vld [vmem:[%s1638] ss:$40 sm:$0xf0]
    %vm1640 = vcmask 1047556
    %v1641 = vsel %vm1640, %v1639, %v1637
    %vm1642 = vcmask 523264
    %v1643 = vsel %vm1642, %v1641, %v1635
    %1644 = vrot.lane.b32.xlu0 %v1643, 64
    %v1645 = vpop.permute.xlu0 %1644
    %vm1646 = vcmask 523264
    %s1647 = scalar_lea.vmem %s1, 128
    %1648 = vst.msk [vmem:[%s1647] sm:$0xff] %vm1646, %v1645
    %vm1649 = vcmask 1048064
    %s1650 = scalar_lea.vmem %s1, 32
    %1651 = vst.msk [vmem:[%s1650] sm:$0xff] %vm1649, %v1645
    %s1652 = scalar_lea.vmem [#allocation0], 25
    %v1653 = vld [vmem:[%s1652] ss:$40 sm:$0xf]
    %s1654 = scalar_lea.vmem [#allocation0], 25
    %v1655 = vld [vmem:[%s1654] ss:$40 sm:$0xf0]
    %vm1656 = vcmask 1047556
    %v1657 = vsel %vm1656, %v1655, %v1653
    %s1658 = scalar_lea.vmem [#allocation0], 27
    %v1659 = vld [vmem:[%s1658] ss:$40 sm:$0xf]
    %s1660 = scalar_lea.vmem [#allocation0], 27
    %v1661 = vld [vmem:[%s1660] ss:$40 sm:$0xf0]
    %vm1662 = vcmask 1047556
    %v1663 = vsel %vm1662, %v1661, %v1659
    %vm1664 = vcmask 523264
    %v1665 = vsel %vm1664, %v1663, %v1657
    %1666 = vrot.lane.b32.xlu0 %v1665, 64
    %v1667 = vpop.permute.xlu0 %1666
    %vm1668 = vcmask 523264
    %s1669 = scalar_lea.vmem %s1, 64
    %1670 = vst.msk [vmem:[%s1669] sm:$0xff] %vm1668, %v1667
    %vm1671 = vcmask 1048064
    %s1672 = scalar_lea.vmem %s1, 128
    %1673 = vst.msk [vmem:[%s1672] sm:$0xff] %vm1671, %v1667
    %s1674 = scalar_lea.vmem [#allocation0], 323
    %v1675 = vld [vmem:[%s1674] ss:$40 sm:$0xf]
    %s1676 = scalar_lea.vmem [#allocation0], 323
    %v1677 = vld [vmem:[%s1676] ss:$40 sm:$0xf0]
    %vm1678 = vcmask 1047556
    %v1679 = vsel %vm1678, %v1677, %v1675
    %s1680 = scalar_lea.vmem [#allocation0], 33
    %v1681 = vld [vmem:[%s1680] ss:$40 sm:$0xf]
    %s1682 = scalar_lea.vmem [#allocation0], 33
    %v1683 = vld [vmem:[%s1682] ss:$40 sm:$0xf0]
    %vm1684 = vcmask 1047556
    %v1685 = vsel %vm1684, %v1683, %v1681
    %vm1686 = vcmask 523264
    %v1687 = vsel %vm1686, %v1685, %v1679
    %1688 = vrot.lane.b32.xlu0 %v1687, 64
    %v1689 = vpop.permute.xlu0 %1688
    %vm1690 = vcmask 523264
    %s1691 = scalar_lea.vmem %s1, 256
    %1692 = vst.msk [vmem:[%s1691] sm:$0xff] %vm1690, %v1689
    %vm1693 = vcmask 1048064
    %s1694 = scalar_lea.vmem %s1, 64
    %1695 = vst.msk [vmem:[%s1694] sm:$0xff] %vm1693, %v1689
    %s1696 = scalar_lea.vmem [#allocation0], 329
    %v1697 = vld [vmem:[%s1696] ss:$40 sm:$0xf]
    %s1698 = scalar_lea.vmem [#allocation0], 329
    %v1699 = vld [vmem:[%s1698] ss:$40 sm:$0xf0]
    %vm1700 = vcmask 1047556
    %v1701 = vsel %vm1700, %v1699, %v1697
    %s1702 = scalar_lea.vmem [#allocation0], 331
    %v1703 = vld [vmem:[%s1702] ss:$40 sm:$0xf]
    %s1704 = scalar_lea.vmem [#allocation0], 331
    %v1705 = vld [vmem:[%s1704] ss:$40 sm:$0xf0]
    %vm1706 = vcmask 1047556
    %v1707 = vsel %vm1706, %v1705, %v1703
    %vm1708 = vcmask 523264
    %v1709 = vsel %vm1708, %v1707, %v1701
    %1710 = vrot.lane.b32.xlu0 %v1709, 64
    %v1711 = vpop.permute.xlu0 %1710
    %vm1712 = vcmask 523264
    %s1713 = scalar_lea.vmem %s1, 192
    %1714 = vst.msk [vmem:[%s1713] sm:$0xff] %vm1712, %v1711
    %vm1715 = vcmask 1048064
    %s1716 = scalar_lea.vmem %s1, 256
    %1717 = vst.msk [vmem:[%s1716] sm:$0xff] %vm1715, %v1711
    %s1718 = scalar_lea.vmem [#allocation0], 659
    %v1719 = vld [vmem:[%s1718] ss:$40 sm:$0xf]
    %s1720 = scalar_lea.vmem [#allocation0], 659
    %v1721 = vld [vmem:[%s1720] ss:$40 sm:$0xf0]
    %vm1722 = vcmask 1047556
    %v1723 = vsel %vm1722, %v1721, %v1719
    %s1724 = scalar_lea.vmem [#allocation0], 337
    %v1725 = vld [vmem:[%s1724] ss:$40 sm:$0xf]
    %s1726 = scalar_lea.vmem [#allocation0], 337
    %v1727 = vld [vmem:[%s1726] ss:$40 sm:$0xf0]
    %vm1728 = vcmask 1047556
    %v1729 = vsel %vm1728, %v1727, %v1725
    %vm1730 = vcmask 523264
    %v1731 = vsel %vm1730, %v1729, %v1723
    %1732 = vrot.lane.b32.xlu0 %v1731, 64
    %v1733 = vpop.permute.xlu0 %1732
    %vm1734 = vcmask 523264
    %s1735 = scalar_lea.vmem %s1, 416
    %1736 = vst.msk [vmem:[%s1735] sm:$0xff] %vm1734, %v1733
    %vm1737 = vcmask 1048064
    %s1738 = scalar_lea.vmem %s1, 192
    %1739 = vst.msk [vmem:[%s1738] sm:$0xff] %vm1737, %v1733
    %s1740 = scalar_lea.vmem [#allocation0], 665
    %v1741 = vld [vmem:[%s1740] ss:$40 sm:$0xf]
    %s1742 = scalar_lea.vmem [#allocation0], 665
    %v1743 = vld [vmem:[%s1742] ss:$40 sm:$0xf0]
    %vm1744 = vcmask 1047556
    %v1745 = vsel %vm1744, %v1743, %v1741
    %s1746 = scalar_lea.vmem [#allocation0], 641
    %v1747 = vld [vmem:[%s1746] ss:$40 sm:$0xf]
    %s1748 = scalar_lea.vmem [#allocation0], 641
    %v1749 = vld [vmem:[%s1748] ss:$40 sm:$0xf0]
    %vm1750 = vcmask 1047556
    %v1751 = vsel %vm1750, %v1749, %v1747
    %vm1752 = vcmask 523264
    %v1753 = vsel %vm1752, %v1751, %v1745
    %1754 = vrot.lane.b32.xlu0 %v1753, 64
    %v1755 = vpop.permute.xlu0 %1754
    %vm1756 = vcmask 523264
    %s1757 = scalar_lea.vmem %s1, 352
    %1758 = vst.msk [vmem:[%s1757] sm:$0xff] %vm1756, %v1755
    %vm1759 = vcmask 1048064
    %s1760 = scalar_lea.vmem %s1, 320
    %1761 = vst.msk [vmem:[%s1760] sm:$0xff] %vm1759, %v1755
    %s1762 = scalar_lea.vmem [#allocation0], 963
    %v1763 = vld [vmem:[%s1762] ss:$40 sm:$0xf]
    %s1764 = scalar_lea.vmem [#allocation0], 963
    %v1765 = vld [vmem:[%s1764] ss:$40 sm:$0xf0]
    %vm1766 = vcmask 1047556
    %v1767 = vsel %vm1766, %v1765, %v1763
    %s1768 = scalar_lea.vmem [#allocation0], 667
    %v1769 = vld [vmem:[%s1768] ss:$40 sm:$0xf]
    %s1770 = scalar_lea.vmem [#allocation0], 667
    %v1771 = vld [vmem:[%s1770] ss:$40 sm:$0xf0]
    %vm1772 = vcmask 1047556
    %v1773 = vsel %vm1772, %v1771, %v1769
    %vm1774 = vcmask 523264
    %v1775 = vsel %vm1774, %v1773, %v1767
    %1776 = vrot.lane.b32.xlu0 %v1775, 64
    %v1777 = vpop.permute.xlu0 %1776
    %vm1778 = vcmask 523264
    %s1779 = scalar_lea.vmem %s1, 544
    %1780 = vst.msk [vmem:[%s1779] sm:$0xff] %vm1778, %v1777
    %vm1781 = vcmask 1048064
    %s1782 = scalar_lea.vmem %s1, 416
    %1783 = vst.msk [vmem:[%s1782] sm:$0xff] %vm1781, %v1777
    %s1784 = scalar_lea.vmem [#allocation0], 969
    %v1785 = vld [vmem:[%s1784] ss:$40 sm:$0xf]
    %s1786 = scalar_lea.vmem [#allocation0], 969
    %v1787 = vld [vmem:[%s1786] ss:$40 sm:$0xf0]
    %vm1788 = vcmask 1047556
    %v1789 = vsel %vm1788, %v1787, %v1785
    %s1790 = scalar_lea.vmem [#allocation0], 673
    %v1791 = vld [vmem:[%s1790] ss:$40 sm:$0xf]
    %s1792 = scalar_lea.vmem [#allocation0], 673
    %v1793 = vld [vmem:[%s1792] ss:$40 sm:$0xf0]
    %vm1794 = vcmask 1047556
    %v1795 = vsel %vm1794, %v1793, %v1791
    %vm1796 = vcmask 523264
    %v1797 = vsel %vm1796, %v1795, %v1789
    %1798 = vrot.lane.b32.xlu0 %v1797, 64
    %v1799 = vpop.permute.xlu0 %1798
    %vm1800 = vcmask 523264
    %s1801 = scalar_lea.vmem %s1, 480
    %1802 = vst.msk [vmem:[%s1801] sm:$0xff] %vm1800, %v1799
    %vm1803 = vcmask 1048064
    %s1804 = scalar_lea.vmem %s1, 352
    %1805 = vst.msk [vmem:[%s1804] sm:$0xff] %vm1803, %v1799
    %s1806 = scalar_lea.vmem [#allocation0], 1
    %v1807 = vld [vmem:[%s1806] ss:$40 sm:$0xf]
    %s1808 = scalar_lea.vmem [#allocation0], 1
    %v1809 = vld [vmem:[%s1808] ss:$40 sm:$0xf0]
    %vm1810 = vcmask 1047556
    %v1811 = vsel %vm1810, %v1809, %v1807
    %s1812 = scalar_lea.vmem [#allocation0], 971
    %v1813 = vld [vmem:[%s1812] ss:$40 sm:$0xf]
    %s1814 = scalar_lea.vmem [#allocation0], 971
    %v1815 = vld [vmem:[%s1814] ss:$40 sm:$0xf0]
    %vm1816 = vcmask 1047556
    %v1817 = vsel %vm1816, %v1815, %v1813
    %vm1818 = vcmask 523264
    %v1819 = vsel %vm1818, %v1817, %v1811
    %1820 = vrot.lane.b32.xlu0 %v1819, 64
    %v1821 = vpop.permute.xlu0 %1820
    %vm1822 = vcmask 523264
    %s1823 = scalar_lea.vmem %s1, 40
    %1824 = vst.msk [vmem:[%s1823] sm:$0xff] %vm1822, %v1821
    %vm1825 = vcmask 1048064
    %s1826 = scalar_lea.vmem %s1, 544
    %1827 = vst.msk [vmem:[%s1826] sm:$0xff] %vm1825, %v1821
    %s1828 = scalar_lea.vmem [#allocation0], 27
    %v1829 = vld [vmem:[%s1828] ss:$40 sm:$0xf]
    %s1830 = scalar_lea.vmem [#allocation0], 27
    %v1831 = vld [vmem:[%s1830] ss:$40 sm:$0xf0]
    %vm1832 = vcmask 1047556
    %v1833 = vsel %vm1832, %v1831, %v1829
    %s1834 = scalar_lea.vmem [#allocation0], 977
    %v1835 = vld [vmem:[%s1834] ss:$40 sm:$0xf]
    %s1836 = scalar_lea.vmem [#allocation0], 977
    %v1837 = vld [vmem:[%s1836] ss:$40 sm:$0xf0]
    %vm1838 = vcmask 1047556
    %v1839 = vsel %vm1838, %v1837, %v1835
    %vm1840 = vcmask 523264
    %v1841 = vsel %vm1840, %v1839, %v1833
    %1842 = vrot.lane.b32.xlu0 %v1841, 64
    %v1843 = vpop.permute.xlu0 %1842
    %vm1844 = vcmask 523264
    %s1845 = scalar_lea.vmem %s1, 136
    %1846 = vst.msk [vmem:[%s1845] sm:$0xff] %vm1844, %v1843
    %vm1847 = vcmask 1048064
    %s1848 = scalar_lea.vmem %s1, 480
    %1849 = vst.msk [vmem:[%s1848] sm:$0xff] %vm1847, %v1843
    %s1850 = scalar_lea.vmem [#allocation0], 331
    %v1851 = vld [vmem:[%s1850] ss:$40 sm:$0xf]
    %s1852 = scalar_lea.vmem [#allocation0], 331
    %v1853 = vld [vmem:[%s1852] ss:$40 sm:$0xf0]
    %vm1854 = vcmask 1047556
    %v1855 = vsel %vm1854, %v1853, %v1851
    %s1856 = scalar_lea.vmem [#allocation0], 3
    %v1857 = vld [vmem:[%s1856] ss:$40 sm:$0xf]
    %s1858 = scalar_lea.vmem [#allocation0], 3
    %v1859 = vld [vmem:[%s1858] ss:$40 sm:$0xf0]
    %vm1860 = vcmask 1047556
    %v1861 = vsel %vm1860, %v1859, %v1857
    %vm1862 = vcmask 523264
    %v1863 = vsel %vm1862, %v1861, %v1855
    %1864 = vrot.lane.b32.xlu0 %v1863, 64
    %v1865 = vpop.permute.xlu0 %1864
    %vm1866 = vcmask 523264
    %s1867 = scalar_lea.vmem %s1, 264
    %1868 = vst.msk [vmem:[%s1867] sm:$0xff] %vm1866, %v1865
    %vm1869 = vcmask 1048064
    %s1870 = scalar_lea.vmem %s1, 104
    %1871 = vst.msk [vmem:[%s1870] sm:$0xff] %vm1869, %v1865
    %s1872 = scalar_lea.vmem [#allocation0], 337
    %v1873 = vld [vmem:[%s1872] ss:$40 sm:$0xf]
    %s1874 = scalar_lea.vmem [#allocation0], 337
    %v1875 = vld [vmem:[%s1874] ss:$40 sm:$0xf0]
    %vm1876 = vcmask 1047556
    %v1877 = vsel %vm1876, %v1875, %v1873
    %s1878 = scalar_lea.vmem [#allocation0], 9
    %v1879 = vld [vmem:[%s1878] ss:$40 sm:$0xf]
    %s1880 = scalar_lea.vmem [#allocation0], 9
    %v1881 = vld [vmem:[%s1880] ss:$40 sm:$0xf0]
    %vm1882 = vcmask 1047556
    %v1883 = vsel %vm1882, %v1881, %v1879
    %vm1884 = vcmask 523264
    %v1885 = vsel %vm1884, %v1883, %v1877
    %1886 = vrot.lane.b32.xlu0 %v1885, 64
    %v1887 = vpop.permute.xlu0 %1886
    %vm1888 = vcmask 523264
    %s1889 = scalar_lea.vmem %s1, 200
    %1890 = vst.msk [vmem:[%s1889] sm:$0xff] %vm1888, %v1887
    %vm1891 = vcmask 1048064
    %s1892 = scalar_lea.vmem %s1, 40
    %1893 = vst.msk [vmem:[%s1892] sm:$0xff] %vm1891, %v1887
    %s1894 = scalar_lea.vmem [#allocation0], 641
    %v1895 = vld [vmem:[%s1894] ss:$40 sm:$0xf]
    %s1896 = scalar_lea.vmem [#allocation0], 641
    %v1897 = vld [vmem:[%s1896] ss:$40 sm:$0xf0]
    %vm1898 = vcmask 1047556
    %v1899 = vsel %vm1898, %v1897, %v1895
    %s1900 = scalar_lea.vmem [#allocation0], 35
    %v1901 = vld [vmem:[%s1900] ss:$40 sm:$0xf]
    %s1902 = scalar_lea.vmem [#allocation0], 35
    %v1903 = vld [vmem:[%s1902] ss:$40 sm:$0xf0]
    %vm1904 = vcmask 1047556
    %v1905 = vsel %vm1904, %v1903, %v1901
    %vm1906 = vcmask 523264
    %v1907 = vsel %vm1906, %v1905, %v1899
    %1908 = vrot.lane.b32.xlu0 %v1907, 64
    %v1909 = vpop.permute.xlu0 %1908
    %vm1910 = vcmask 523264
    %s1911 = scalar_lea.vmem %s1, 328
    %1912 = vst.msk [vmem:[%s1911] sm:$0xff] %vm1910, %v1909
    %vm1913 = vcmask 1048064
    %s1914 = scalar_lea.vmem %s1, 136
    %1915 = vst.msk [vmem:[%s1914] sm:$0xff] %vm1913, %v1909
    %s1916 = scalar_lea.vmem [#allocation0], 667
    %v1917 = vld [vmem:[%s1916] ss:$40 sm:$0xf]
    %s1918 = scalar_lea.vmem [#allocation0], 667
    %v1919 = vld [vmem:[%s1918] ss:$40 sm:$0xf0]
    %vm1920 = vcmask 1047556
    %v1921 = vsel %vm1920, %v1919, %v1917
    %s1922 = scalar_lea.vmem [#allocation0], 339
    %v1923 = vld [vmem:[%s1922] ss:$40 sm:$0xf]
    %s1924 = scalar_lea.vmem [#allocation0], 339
    %v1925 = vld [vmem:[%s1924] ss:$40 sm:$0xf0]
    %vm1926 = vcmask 1047556
    %v1927 = vsel %vm1926, %v1925, %v1923
    %vm1928 = vcmask 523264
    %v1929 = vsel %vm1928, %v1927, %v1921
    %1930 = vrot.lane.b32.xlu0 %v1929, 64
    %v1931 = vpop.permute.xlu0 %1930
    %vm1932 = vcmask 523264
    %s1933 = scalar_lea.vmem %s1, 424
    %1934 = vst.msk [vmem:[%s1933] sm:$0xff] %vm1932, %v1931
    %vm1935 = vcmask 1048064
    %s1936 = scalar_lea.vmem %s1, 264
    %1937 = vst.msk [vmem:[%s1936] sm:$0xff] %vm1935, %v1931
    %s1938 = scalar_lea.vmem [#allocation0], 971
    %v1939 = vld [vmem:[%s1938] ss:$40 sm:$0xf]
    %s1940 = scalar_lea.vmem [#allocation0], 971
    %v1941 = vld [vmem:[%s1940] ss:$40 sm:$0xf0]
    %vm1942 = vcmask 1047556
    %v1943 = vsel %vm1942, %v1941, %v1939
    %s1944 = scalar_lea.vmem [#allocation0], 345
    %v1945 = vld [vmem:[%s1944] ss:$40 sm:$0xf]
    %s1946 = scalar_lea.vmem [#allocation0], 345
    %v1947 = vld [vmem:[%s1946] ss:$40 sm:$0xf0]
    %vm1948 = vcmask 1047556
    %v1949 = vsel %vm1948, %v1947, %v1945
    %vm1950 = vcmask 523264
    %v1951 = vsel %vm1950, %v1949, %v1943
    %1952 = vrot.lane.b32.xlu0 %v1951, 64
    %v1953 = vpop.permute.xlu0 %1952
    %vm1954 = vcmask 523264
    %s1955 = scalar_lea.vmem %s1, 552
    %1956 = vst.msk [vmem:[%s1955] sm:$0xff] %vm1954, %v1953
    %vm1957 = vcmask 1048064
    %s1958 = scalar_lea.vmem %s1, 200
    %1959 = vst.msk [vmem:[%s1958] sm:$0xff] %vm1957, %v1953
    %s1960 = scalar_lea.vmem [#allocation0], 977
    %v1961 = vld [vmem:[%s1960] ss:$40 sm:$0xf]
    %s1962 = scalar_lea.vmem [#allocation0], 977
    %v1963 = vld [vmem:[%s1962] ss:$40 sm:$0xf0]
    %vm1964 = vcmask 1047556
    %v1965 = vsel %vm1964, %v1963, %v1961
    %s1966 = scalar_lea.vmem [#allocation0], 643
    %v1967 = vld [vmem:[%s1966] ss:$40 sm:$0xf]
    %s1968 = scalar_lea.vmem [#allocation0], 643
    %v1969 = vld [vmem:[%s1968] ss:$40 sm:$0xf0]
    %vm1970 = vcmask 1047556
    %v1971 = vsel %vm1970, %v1969, %v1967
    %vm1972 = vcmask 523264
    %v1973 = vsel %vm1972, %v1971, %v1965
    %1974 = vrot.lane.b32.xlu0 %v1973, 64
    %v1975 = vpop.permute.xlu0 %1974
    %vm1976 = vcmask 523264
    %s1977 = scalar_lea.vmem %s1, 488
    %1978 = vst.msk [vmem:[%s1977] sm:$0xff] %vm1976, %v1975
    %vm1979 = vcmask 1048064
    %s1980 = scalar_lea.vmem %s1, 392
    %1981 = vst.msk [vmem:[%s1980] sm:$0xff] %vm1979, %v1975
    %s1982 = scalar_lea.vmem [#allocation0], 3
    %v1983 = vld [vmem:[%s1982] ss:$40 sm:$0xf]
    %s1984 = scalar_lea.vmem [#allocation0], 3
    %v1985 = vld [vmem:[%s1984] ss:$40 sm:$0xf0]
    %vm1986 = vcmask 1047556
    %v1987 = vsel %vm1986, %v1985, %v1983
    %s1988 = scalar_lea.vmem [#allocation0], 649
    %v1989 = vld [vmem:[%s1988] ss:$40 sm:$0xf]
    %s1990 = scalar_lea.vmem [#allocation0], 649
    %v1991 = vld [vmem:[%s1990] ss:$40 sm:$0xf0]
    %vm1992 = vcmask 1047556
    %v1993 = vsel %vm1992, %v1991, %v1989
    %vm1994 = vcmask 523264
    %v1995 = vsel %vm1994, %v1993, %v1987
    %1996 = vrot.lane.b32.xlu0 %v1995, 64
    %v1997 = vpop.permute.xlu0 %1996
    %vm1998 = vcmask 523264
    %s1999 = scalar_lea.vmem %s1, 112
    %2000 = vst.msk [vmem:[%s1999] sm:$0xff] %vm1998, %v1997
    %vm2001 = vcmask 1048064
    %s2002 = scalar_lea.vmem %s1, 328
    %2003 = vst.msk [vmem:[%s2002] sm:$0xff] %vm2001, %v1997
    %s2004 = scalar_lea.vmem [#allocation0], 9
    %v2005 = vld [vmem:[%s2004] ss:$40 sm:$0xf]
    %s2006 = scalar_lea.vmem [#allocation0], 9
    %v2007 = vld [vmem:[%s2006] ss:$40 sm:$0xf0]
    %vm2008 = vcmask 1047556
    %v2009 = vsel %vm2008, %v2007, %v2005
    %s2010 = scalar_lea.vmem [#allocation0], 675
    %v2011 = vld [vmem:[%s2010] ss:$40 sm:$0xf]
    %s2012 = scalar_lea.vmem [#allocation0], 675
    %v2013 = vld [vmem:[%s2012] ss:$40 sm:$0xf0]
    %vm2014 = vcmask 1047556
    %v2015 = vsel %vm2014, %v2013, %v2011
    %vm2016 = vcmask 523264
    %v2017 = vsel %vm2016, %v2015, %v2009
    %2018 = vrot.lane.b32.xlu0 %v2017, 64
    %v2019 = vpop.permute.xlu0 %2018
    %vm2020 = vcmask 523264
    %s2021 = scalar_lea.vmem %s1, 48
    %2022 = vst.msk [vmem:[%s2021] sm:$0xff] %vm2020, %v2019
    %vm2023 = vcmask 1048064
    %s2024 = scalar_lea.vmem %s1, 424
    %2025 = vst.msk [vmem:[%s2024] sm:$0xff] %vm2023, %v2019
    %s2026 = scalar_lea.vmem [#allocation0], 339
    %v2027 = vld [vmem:[%s2026] ss:$40 sm:$0xf]
    %s2028 = scalar_lea.vmem [#allocation0], 339
    %v2029 = vld [vmem:[%s2028] ss:$40 sm:$0xf0]
    %vm2030 = vcmask 1047556
    %v2031 = vsel %vm2030, %v2029, %v2027
    %s2032 = scalar_lea.vmem [#allocation0], 979
    %v2033 = vld [vmem:[%s2032] ss:$40 sm:$0xf]
    %s2034 = scalar_lea.vmem [#allocation0], 979
    %v2035 = vld [vmem:[%s2034] ss:$40 sm:$0xf0]
    %vm2036 = vcmask 1047556
    %v2037 = vsel %vm2036, %v2035, %v2033
    %vm2038 = vcmask 523264
    %v2039 = vsel %vm2038, %v2037, %v2031
    %2040 = vrot.lane.b32.xlu0 %v2039, 64
    %v2041 = vpop.permute.xlu0 %2040
    %vm2042 = vcmask 523264
    %s2043 = scalar_lea.vmem %s1, 272
    %2044 = vst.msk [vmem:[%s2043] sm:$0xff] %vm2042, %v2041
    %vm2045 = vcmask 1048064
    %s2046 = scalar_lea.vmem %s1, 552
    %2047 = vst.msk [vmem:[%s2046] sm:$0xff] %vm2045, %v2041
    %s2048 = scalar_lea.vmem [#allocation0], 345
    %v2049 = vld [vmem:[%s2048] ss:$40 sm:$0xf]
    %s2050 = scalar_lea.vmem [#allocation0], 345
    %v2051 = vld [vmem:[%s2050] ss:$40 sm:$0xf0]
    %vm2052 = vcmask 1047556
    %v2053 = vsel %vm2052, %v2051, %v2049
    %s2054 = scalar_lea.vmem [#allocation0], 985
    %v2055 = vld [vmem:[%s2054] ss:$40 sm:$0xf]
    %s2056 = scalar_lea.vmem [#allocation0], 985
    %v2057 = vld [vmem:[%s2056] ss:$40 sm:$0xf0]
    %vm2058 = vcmask 1047556
    %v2059 = vsel %vm2058, %v2057, %v2055
    %vm2060 = vcmask 523264
    %v2061 = vsel %vm2060, %v2059, %v2053
    %2062 = vrot.lane.b32.xlu0 %v2061, 64
    %v2063 = vpop.permute.xlu0 %2062
    %vm2064 = vcmask 523264
    %s2065 = scalar_lea.vmem %s1, 208
    %2066 = vst.msk [vmem:[%s2065] sm:$0xff] %vm2064, %v2063
    %vm2067 = vcmask 1048064
    %s2068 = scalar_lea.vmem %s1, 488
    %2069 = vst.msk [vmem:[%s2068] sm:$0xff] %vm2067, %v2063
    %s2070 = scalar_lea.vmem [#allocation0], 643
    %v2071 = vld [vmem:[%s2070] ss:$40 sm:$0xf]
    %s2072 = scalar_lea.vmem [#allocation0], 643
    %v2073 = vld [vmem:[%s2072] ss:$40 sm:$0xf0]
    %vm2074 = vcmask 1047556
    %v2075 = vsel %vm2074, %v2073, %v2071
    %s2076 = scalar_lea.vmem [#allocation0], 11
    %v2077 = vld [vmem:[%s2076] ss:$40 sm:$0xf]
    %s2078 = scalar_lea.vmem [#allocation0], 11
    %v2079 = vld [vmem:[%s2078] ss:$40 sm:$0xf0]
    %vm2080 = vcmask 1047556
    %v2081 = vsel %vm2080, %v2079, %v2077
    %vm2082 = vcmask 523264
    %v2083 = vsel %vm2082, %v2081, %v2075
    %2084 = vrot.lane.b32.xlu0 %v2083, 64
    %v2085 = vpop.permute.xlu0 %2084
    %vm2086 = vcmask 523264
    %s2087 = scalar_lea.vmem %s1, 400
    %2088 = vst.msk [vmem:[%s2087] sm:$0xff] %vm2086, %v2085
    %vm2089 = vcmask 1048064
    %s2090 = scalar_lea.vmem %s1, 112
    %2091 = vst.msk [vmem:[%s2090] sm:$0xff] %vm2089, %v2085
    %s2092 = scalar_lea.vmem [#allocation0], 649
    %v2093 = vld [vmem:[%s2092] ss:$40 sm:$0xf]
    %s2094 = scalar_lea.vmem [#allocation0], 649
    %v2095 = vld [vmem:[%s2094] ss:$40 sm:$0xf0]
    %vm2096 = vcmask 1047556
    %v2097 = vsel %vm2096, %v2095, %v2093
    %s2098 = scalar_lea.vmem [#allocation0], 17
    %v2099 = vld [vmem:[%s2098] ss:$40 sm:$0xf]
    %s2100 = scalar_lea.vmem [#allocation0], 17
    %v2101 = vld [vmem:[%s2100] ss:$40 sm:$0xf0]
    %vm2102 = vcmask 1047556
    %v2103 = vsel %vm2102, %v2101, %v2099
    %vm2104 = vcmask 523264
    %v2105 = vsel %vm2104, %v2103, %v2097
    %2106 = vrot.lane.b32.xlu0 %v2105, 64
    %v2107 = vpop.permute.xlu0 %2106
    %vm2108 = vcmask 523264
    %s2109 = scalar_lea.vmem %s1, 336
    %2110 = vst.msk [vmem:[%s2109] sm:$0xff] %vm2108, %v2107
    %vm2111 = vcmask 1048064
    %s2112 = scalar_lea.vmem %s1, 48
    %2113 = vst.msk [vmem:[%s2112] sm:$0xff] %vm2111, %v2107
    %s2114 = scalar_lea.vmem [#allocation0], 979
    %v2115 = vld [vmem:[%s2114] ss:$40 sm:$0xf]
    %s2116 = scalar_lea.vmem [#allocation0], 979
    %v2117 = vld [vmem:[%s2116] ss:$40 sm:$0xf0]
    %vm2118 = vcmask 1047556
    %v2119 = vsel %vm2118, %v2117, %v2115
    %s2120 = scalar_lea.vmem [#allocation0], 321
    %v2121 = vld [vmem:[%s2120] ss:$40 sm:$0xf]
    %s2122 = scalar_lea.vmem [#allocation0], 321
    %v2123 = vld [vmem:[%s2122] ss:$40 sm:$0xf0]
    %vm2124 = vcmask 1047556
    %v2125 = vsel %vm2124, %v2123, %v2121
    %vm2126 = vcmask 523264
    %v2127 = vsel %vm2126, %v2125, %v2119
    %2128 = vrot.lane.b32.xlu0 %v2127, 64
    %v2129 = vpop.permute.xlu0 %2128
    %vm2130 = vcmask 523264
    %s2131 = scalar_lea.vmem %s1, 560
    %2132 = vst.msk [vmem:[%s2131] sm:$0xff] %vm2130, %v2129
    %vm2133 = vcmask 1048064
    %s2134 = scalar_lea.vmem %s1, 176
    %2135 = vst.msk [vmem:[%s2134] sm:$0xff] %vm2133, %v2129
    %s2136 = scalar_lea.vmem [#allocation0], 985
    %v2137 = vld [vmem:[%s2136] ss:$40 sm:$0xf]
    %s2138 = scalar_lea.vmem [#allocation0], 985
    %v2139 = vld [vmem:[%s2138] ss:$40 sm:$0xf0]
    %vm2140 = vcmask 1047556
    %v2141 = vsel %vm2140, %v2139, %v2137
    %s2142 = scalar_lea.vmem [#allocation0], 347
    %v2143 = vld [vmem:[%s2142] ss:$40 sm:$0xf]
    %s2144 = scalar_lea.vmem [#allocation0], 347
    %v2145 = vld [vmem:[%s2144] ss:$40 sm:$0xf0]
    %vm2146 = vcmask 1047556
    %v2147 = vsel %vm2146, %v2145, %v2143
    %vm2148 = vcmask 523264
    %v2149 = vsel %vm2148, %v2147, %v2141
    %2150 = vrot.lane.b32.xlu0 %v2149, 64
    %v2151 = vpop.permute.xlu0 %2150
    %vm2152 = vcmask 523264
    %s2153 = scalar_lea.vmem %s1, 496
    %2154 = vst.msk [vmem:[%s2153] sm:$0xff] %vm2152, %v2151
    %vm2155 = vcmask 1048064
    %s2156 = scalar_lea.vmem %s1, 272
    %2157 = vst.msk [vmem:[%s2156] sm:$0xff] %vm2155, %v2151
    %s2158 = scalar_lea.vmem [#allocation0], 11
    %v2159 = vld [vmem:[%s2158] ss:$40 sm:$0xf]
    %s2160 = scalar_lea.vmem [#allocation0], 11
    %v2161 = vld [vmem:[%s2160] ss:$40 sm:$0xf0]
    %vm2162 = vcmask 1047556
    %v2163 = vsel %vm2162, %v2161, %v2159
    %s2164 = scalar_lea.vmem [#allocation0], 353
    %v2165 = vld [vmem:[%s2164] ss:$40 sm:$0xf]
    %s2166 = scalar_lea.vmem [#allocation0], 353
    %v2167 = vld [vmem:[%s2166] ss:$40 sm:$0xf0]
    %vm2168 = vcmask 1047556
    %v2169 = vsel %vm2168, %v2167, %v2165
    %vm2170 = vcmask 523264
    %v2171 = vsel %vm2170, %v2169, %v2163
    %2172 = vrot.lane.b32.xlu0 %v2171, 64
    %v2173 = vpop.permute.xlu0 %2172
    %vm2174 = vcmask 523264
    %s2175 = scalar_lea.vmem %s1, 120
    %2176 = vst.msk [vmem:[%s2175] sm:$0xff] %vm2174, %v2173
    %vm2177 = vcmask 1048064
    %s2178 = scalar_lea.vmem %s1, 208
    %2179 = vst.msk [vmem:[%s2178] sm:$0xff] %vm2177, %v2173
    %s2180 = scalar_lea.vmem [#allocation0], 17
    %v2181 = vld [vmem:[%s2180] ss:$40 sm:$0xf]
    %s2182 = scalar_lea.vmem [#allocation0], 17
    %v2183 = vld [vmem:[%s2182] ss:$40 sm:$0xf0]
    %vm2184 = vcmask 1047556
    %v2185 = vsel %vm2184, %v2183, %v2181
    %s2186 = scalar_lea.vmem [#allocation0], 651
    %v2187 = vld [vmem:[%s2186] ss:$40 sm:$0xf]
    %s2188 = scalar_lea.vmem [#allocation0], 651
    %v2189 = vld [vmem:[%s2188] ss:$40 sm:$0xf0]
    %vm2190 = vcmask 1047556
    %v2191 = vsel %vm2190, %v2189, %v2187
    %vm2192 = vcmask 523264
    %v2193 = vsel %vm2192, %v2191, %v2185
    %2194 = vrot.lane.b32.xlu0 %v2193, 64
    %v2195 = vpop.permute.xlu0 %2194
    %vm2196 = vcmask 523264
    %s2197 = scalar_lea.vmem %s1, 56
    %2198 = vst.msk [vmem:[%s2197] sm:$0xff] %vm2196, %v2195
    %vm2199 = vcmask 1048064
    %s2200 = scalar_lea.vmem %s1, 400
    %2201 = vst.msk [vmem:[%s2200] sm:$0xff] %vm2199, %v2195
    %s2202 = scalar_lea.vmem [#allocation0], 321
    %v2203 = vld [vmem:[%s2202] ss:$40 sm:$0xf]
    %s2204 = scalar_lea.vmem [#allocation0], 321
    %v2205 = vld [vmem:[%s2204] ss:$40 sm:$0xf0]
    %vm2206 = vcmask 1047556
    %v2207 = vsel %vm2206, %v2205, %v2203
    %s2208 = scalar_lea.vmem [#allocation0], 657
    %v2209 = vld [vmem:[%s2208] ss:$40 sm:$0xf]
    %s2210 = scalar_lea.vmem [#allocation0], 657
    %v2211 = vld [vmem:[%s2210] ss:$40 sm:$0xf0]
    %vm2212 = vcmask 1047556
    %v2213 = vsel %vm2212, %v2211, %v2209
    %vm2214 = vcmask 523264
    %v2215 = vsel %vm2214, %v2213, %v2207
    %2216 = vrot.lane.b32.xlu0 %v2215, 64
    %v2217 = vpop.permute.xlu0 %2216
    %vm2218 = vcmask 523264
    %s2219 = scalar_lea.vmem %s1, 184
    %2220 = vst.msk [vmem:[%s2219] sm:$0xff] %vm2218, %v2217
    %vm2221 = vcmask 1048064
    %s2222 = scalar_lea.vmem %s1, 336
    %2223 = vst.msk [vmem:[%s2222] sm:$0xff] %vm2221, %v2217
    %s2224 = scalar_lea.vmem [#allocation0], 347
    %v2225 = vld [vmem:[%s2224] ss:$40 sm:$0xf]
    %s2226 = scalar_lea.vmem [#allocation0], 347
    %v2227 = vld [vmem:[%s2226] ss:$40 sm:$0xf0]
    %vm2228 = vcmask 1047556
    %v2229 = vsel %vm2228, %v2227, %v2225
    %s2230 = scalar_lea.vmem [#allocation0], 961
    %v2231 = vld [vmem:[%s2230] ss:$40 sm:$0xf]
    %s2232 = scalar_lea.vmem [#allocation0], 961
    %v2233 = vld [vmem:[%s2232] ss:$40 sm:$0xf0]
    %vm2234 = vcmask 1047556
    %v2235 = vsel %vm2234, %v2233, %v2231
    %vm2236 = vcmask 523264
    %v2237 = vsel %vm2236, %v2235, %v2229
    %2238 = vrot.lane.b32.xlu0 %v2237, 64
    %v2239 = vpop.permute.xlu0 %2238
    %vm2240 = vcmask 523264
    %s2241 = scalar_lea.vmem %s1, 280
    %2242 = vst.msk [vmem:[%s2241] sm:$0xff] %vm2240, %v2239
    %vm2243 = vcmask 1048064
    %s2244 = scalar_lea.vmem %s1, 464
    %2245 = vst.msk [vmem:[%s2244] sm:$0xff] %vm2243, %v2239
    %s2246 = scalar_lea.vmem [#allocation0], 651
    %v2247 = vld [vmem:[%s2246] ss:$40 sm:$0xf]
    %s2248 = scalar_lea.vmem [#allocation0], 651
    %v2249 = vld [vmem:[%s2248] ss:$40 sm:$0xf0]
    %vm2250 = vcmask 1047556
    %v2251 = vsel %vm2250, %v2249, %v2247
    %s2252 = scalar_lea.vmem [#allocation0], 987
    %v2253 = vld [vmem:[%s2252] ss:$40 sm:$0xf]
    %s2254 = scalar_lea.vmem [#allocation0], 987
    %v2255 = vld [vmem:[%s2254] ss:$40 sm:$0xf0]
    %vm2256 = vcmask 1047556
    %v2257 = vsel %vm2256, %v2255, %v2253
    %vm2258 = vcmask 523264
    %v2259 = vsel %vm2258, %v2257, %v2251
    %2260 = vrot.lane.b32.xlu0 %v2259, 64
    %v2261 = vpop.permute.xlu0 %2260
    %vm2262 = vcmask 523264
    %s2263 = scalar_lea.vmem %s1, 408
    %2264 = vst.msk [vmem:[%s2263] sm:$0xff] %vm2262, %v2261
    %vm2265 = vcmask 1048064
    %s2266 = scalar_lea.vmem %s1, 560
    %2267 = vst.msk [vmem:[%s2266] sm:$0xff] %vm2265, %v2261
    %s2268 = scalar_lea.vmem [#allocation0], 657
    %v2269 = vld [vmem:[%s2268] ss:$40 sm:$0xf]
    %s2270 = scalar_lea.vmem [#allocation0], 657
    %v2271 = vld [vmem:[%s2270] ss:$40 sm:$0xf0]
    %vm2272 = vcmask 1047556
    %v2273 = vsel %vm2272, %v2271, %v2269
    %s2274 = scalar_lea.vmem [#allocation0], 993
    %v2275 = vld [vmem:[%s2274] ss:$40 sm:$0xf]
    %s2276 = scalar_lea.vmem [#allocation0], 993
    %v2277 = vld [vmem:[%s2276] ss:$40 sm:$0xf0]
    %vm2278 = vcmask 1047556
    %v2279 = vsel %vm2278, %v2277, %v2275
    %vm2280 = vcmask 523264
    %v2281 = vsel %vm2280, %v2279, %v2273
    %2282 = vrot.lane.b32.xlu0 %v2281, 64
    %v2283 = vpop.permute.xlu0 %2282
    %vm2284 = vcmask 523264
    %s2285 = scalar_lea.vmem %s1, 344
    %2286 = vst.msk [vmem:[%s2285] sm:$0xff] %vm2284, %v2283
    %vm2287 = vcmask 1048064
    %s2288 = scalar_lea.vmem %s1, 496
    %2289 = vst.msk [vmem:[%s2288] sm:$0xff] %vm2287, %v2283
    %s2290 = scalar_lea.vmem [#allocation0], 961
    %v2291 = vld [vmem:[%s2290] ss:$40 sm:$0xf]
    %s2292 = scalar_lea.vmem [#allocation0], 961
    %v2293 = vld [vmem:[%s2292] ss:$40 sm:$0xf0]
    %vm2294 = vcmask 1047556
    %v2295 = vsel %vm2294, %v2293, %v2291
    %s2296 = scalar_lea.vmem [#allocation0], 19
    %v2297 = vld [vmem:[%s2296] ss:$40 sm:$0xf]
    %s2298 = scalar_lea.vmem [#allocation0], 19
    %v2299 = vld [vmem:[%s2298] ss:$40 sm:$0xf0]
    %vm2300 = vcmask 1047556
    %v2301 = vsel %vm2300, %v2299, %v2297
    %vm2302 = vcmask 523264
    %v2303 = vsel %vm2302, %v2301, %v2295
    %2304 = vrot.lane.b32.xlu0 %v2303, 64
    %v2305 = vpop.permute.xlu0 %2304
    %vm2306 = vcmask 523264
    %s2307 = scalar_lea.vmem %s1, 472
    %2308 = vst.msk [vmem:[%s2307] sm:$0xff] %vm2306, %v2305
    %vm2309 = vcmask 1048064
    %s2310 = scalar_lea.vmem %s1, 120
    %2311 = vst.msk [vmem:[%s2310] sm:$0xff] %vm2309, %v2305
    %s2312 = scalar_lea.vmem [#allocation0], 987
    %v2313 = vld [vmem:[%s2312] ss:$40 sm:$0xf]
    %s2314 = scalar_lea.vmem [#allocation0], 987
    %v2315 = vld [vmem:[%s2314] ss:$40 sm:$0xf0]
    %vm2316 = vcmask 1047556
    %v2317 = vsel %vm2316, %v2315, %v2313
    %s2318 = scalar_lea.vmem [#allocation0], 25
    %v2319 = vld [vmem:[%s2318] ss:$40 sm:$0xf]
    %s2320 = scalar_lea.vmem [#allocation0], 25
    %v2321 = vld [vmem:[%s2320] ss:$40 sm:$0xf0]
    %vm2322 = vcmask 1047556
    %v2323 = vsel %vm2322, %v2321, %v2319
    %vm2324 = vcmask 523264
    %v2325 = vsel %vm2324, %v2323, %v2317
    %2326 = vrot.lane.b32.xlu0 %v2325, 64
    %v2327 = vpop.permute.xlu0 %2326
    %vm2328 = vcmask 523264
    %s2329 = scalar_lea.vmem %s1, 568
    %2330 = vst.msk [vmem:[%s2329] sm:$0xff] %vm2328, %v2327
    %vm2331 = vcmask 1048064
    %s2332 = scalar_lea.vmem %s1, 56
    %2333 = vst.msk [vmem:[%s2332] sm:$0xff] %vm2331, %v2327
    %s2334 = scalar_lea.vmem [#allocation0], 323
    %v2335 = vld [vmem:[%s2334] ss:$40 sm:$0xf]
    %s2336 = scalar_lea.vmem [#allocation0], 323
    %v2337 = vld [vmem:[%s2336] ss:$40 sm:$0xf0]
    %vm2338 = vcmask 1047556
    %v2339 = vsel %vm2338, %v2337, %v2335
    %2340 = vrot.lane.b32.xlu0 %v2339, 64
    %v2341 = vpop.permute.xlu0 %2340
    %vm2342 = vcmask 1048064
    %s2343 = scalar_lea.vmem %s1, 248
    %2344 = vst.msk [vmem:[%s2343] sm:$0xff] %vm2342, %v2341
    %s2345 = scalar_lea.vmem [#allocation0], 329
    %v2346 = vld [vmem:[%s2345] ss:$40 sm:$0xf]
    %s2347 = scalar_lea.vmem [#allocation0], 329
    %v2348 = vld [vmem:[%s2347] ss:$40 sm:$0xf0]
    %vm2349 = vcmask 1047556
    %v2350 = vsel %vm2349, %v2348, %v2346
    %2351 = vrot.lane.b32.xlu0 %v2350, 64
    %v2352 = vpop.permute.xlu0 %2351
    %vm2353 = vcmask 1048064
    %s2354 = scalar_lea.vmem %s1, 184
    %2355 = vst.msk [vmem:[%s2354] sm:$0xff] %vm2353, %v2352
    %s2356 = scalar_lea.vmem [#allocation0], 355
    %v2357 = vld [vmem:[%s2356] ss:$40 sm:$0xf]
    %s2358 = scalar_lea.vmem [#allocation0], 355
    %v2359 = vld [vmem:[%s2358] ss:$40 sm:$0xf0]
    %vm2360 = vcmask 1047556
    %v2361 = vsel %vm2360, %v2359, %v2357
    %2362 = vrot.lane.b32.xlu0 %v2361, 64
    %v2363 = vpop.permute.xlu0 %2362
    %vm2364 = vcmask 1048064
    %s2365 = scalar_lea.vmem %s1, 280
    %2366 = vst.msk [vmem:[%s2365] sm:$0xff] %vm2364, %v2363
    %s2367 = scalar_lea.vmem [#allocation0], 659
    %v2368 = vld [vmem:[%s2367] ss:$40 sm:$0xf]
    %s2369 = scalar_lea.vmem [#allocation0], 659
    %v2370 = vld [vmem:[%s2369] ss:$40 sm:$0xf0]
    %vm2371 = vcmask 1047556
    %v2372 = vsel %vm2371, %v2370, %v2368
    %2373 = vrot.lane.b32.xlu0 %v2372, 64
    %v2374 = vpop.permute.xlu0 %2373
    %vm2375 = vcmask 1048064
    %s2376 = scalar_lea.vmem %s1, 408
    %2377 = vst.msk [vmem:[%s2376] sm:$0xff] %vm2375, %v2374
    %s2378 = scalar_lea.vmem [#allocation0], 665
    %v2379 = vld [vmem:[%s2378] ss:$40 sm:$0xf]
    %s2380 = scalar_lea.vmem [#allocation0], 665
    %v2381 = vld [vmem:[%s2380] ss:$40 sm:$0xf0]
    %vm2382 = vcmask 1047556
    %v2383 = vsel %vm2382, %v2381, %v2379
    %2384 = vrot.lane.b32.xlu0 %v2383, 64
    %v2385 = vpop.permute.xlu0 %2384
    %vm2386 = vcmask 1048064
    %s2387 = scalar_lea.vmem %s1, 344
    %2388 = vst.msk [vmem:[%s2387] sm:$0xff] %vm2386, %v2385
    %s2389 = scalar_lea.vmem [#allocation0], 963
    %v2390 = vld [vmem:[%s2389] ss:$40 sm:$0xf]
    %s2391 = scalar_lea.vmem [#allocation0], 963
    %v2392 = vld [vmem:[%s2391] ss:$40 sm:$0xf0]
    %vm2393 = vcmask 1047556
    %v2394 = vsel %vm2393, %v2392, %v2390
    %2395 = vrot.lane.b32.xlu0 %v2394, 64
    %v2396 = vpop.permute.xlu0 %2395
    %vm2397 = vcmask 1048064
    %s2398 = scalar_lea.vmem %s1, 536
    %2399 = vst.msk [vmem:[%s2398] sm:$0xff] %vm2397, %v2396
    %s2400 = scalar_lea.vmem [#allocation0], 969
    %v2401 = vld [vmem:[%s2400] ss:$40 sm:$0xf]
    %s2402 = scalar_lea.vmem [#allocation0], 969
    %v2403 = vld [vmem:[%s2402] ss:$40 sm:$0xf0]
    %vm2404 = vcmask 1047556
    %v2405 = vsel %vm2404, %v2403, %v2401
    %2406 = vrot.lane.b32.xlu0 %v2405, 64
    %v2407 = vpop.permute.xlu0 %2406
    %vm2408 = vcmask 1048064
    %s2409 = scalar_lea.vmem %s1, 472
    %2410 = vst.msk [vmem:[%s2409] sm:$0xff] %vm2408, %v2407
    %s2411 = scalar_lea.vmem [#allocation0], 995
    %v2412 = vld [vmem:[%s2411] ss:$40 sm:$0xf]
    %s2413 = scalar_lea.vmem [#allocation0], 995
    %v2414 = vld [vmem:[%s2413] ss:$40 sm:$0xf0]
    %vm2415 = vcmask 1047556
    %v2416 = vsel %vm2415, %v2414, %v2412
    %2417 = vrot.lane.b32.xlu0 %v2416, 64
    %v2418 = vpop.permute.xlu0 %2417
    %vm2419 = vcmask 1048064
    %s2420 = scalar_lea.vmem %s1, 568
    %2421 = vst.msk [vmem:[%s2420] sm:$0xff] %vm2419, %v2418

// kernel: _lambda_.1
$region0: #{_lambda_.1}
  #allocation0 [shape = 'u32[]', space=smem, size = 0x4, offset = 0x4, fixed_abs, tag = 'smem constant byte address 0x4 - core index']
  #allocation1 [shape = 'u32[144,128]{1,0:T(1,128)}', space=vmem, size = 0x12000, scoped, tag = 'internal scratch']
  %s0 = inlined_call_operand.vmem [shape: f32[32,2304], index: 0, kind: input, shape index: {}]
  %s1 = inlined_call_operand.vmem [shape: f32[1,2304], index: 1, kind: input, shape index: {}]
  %s2 = inlined_call_operand.vmem [shape: bf16[2304,128], index: 2, kind: input, shape index: {}]
  %s3 = inlined_call_operand.vmem [shape: f32[32,128], index: 3, kind: output, shape index: {}]
  %s4 = sld [smem:[#allocation0]]
  $region22: #{_lambda_.1} parent=0
    _
  %s6 = ssub.s32 1, %s4
  %s7 = scalar_select 0, %s6, %s4
  // Predicated region
  $region2: #{_lambda_.1} parent=0 // pred_check
    _
  $region3: #{_lambda_.1} parent=0 // pred_check_branch
    %9 = sbr.rel (0) target = $region5
  $region4: #{_lambda_.1} parent=0 // pred_region
    _
  $region5: #{_lambda_.1} parent=0 // pred_fallthru
    _
  // Predicated region
  $region6: #{_lambda_.1} parent=0 // pred_check
    _
  $region7: #{_lambda_.1} parent=0 // pred_check_branch
    %11 = sbr.rel (0) target = $region9
  $region8: #{_lambda_.1} parent=0 // pred_region
    _
  $region9: #{_lambda_.1} parent=0 // pred_fallthru
    _
  // Predicated region
  $region10: #{_lambda_.1} parent=0 // pred_check
    _
  $region11: #{_lambda_.1} parent=0 // pred_check_branch
    %13 = sbr.rel (0) target = $region13
  $region12: #{_lambda_.1} parent=0 // pred_region
    _
  $region13: #{_lambda_.1} parent=0 // pred_fallthru
    _
  %v15 = vld [vmem:[%s0] sm:$0xff]
  %v16 = vld [vmem:[%s0 + $0x8] sm:$0xff]
  %v17 = vld [vmem:[%s0 + $0x10] sm:$0xff]
  %v18 = vld [vmem:[%s0 + $0x18] sm:$0xff]
  %v19 = vld [vmem:[%s0 + $0x20] sm:$0xff]
  %v20 = vld [vmem:[%s0 + $0x28] sm:$0xff]
  %v21 = vld [vmem:[%s0 + $0x30] sm:$0xff]
  %v22 = vld [vmem:[%s0 + $0x38] sm:$0xff]
  %v23 = vld [vmem:[%s0 + $0x40] sm:$0xff]
  %v24 = vld [vmem:[%s0 + $0x48] sm:$0xff]
  %v25 = vld [vmem:[%s0 + $0x50] sm:$0xff]
  %v26 = vld [vmem:[%s0 + $0x58] sm:$0xff]
  %v27 = vld [vmem:[%s0 + $0x60] sm:$0xff]
  %v28 = vld [vmem:[%s0 + $0x68] sm:$0xff]
  %v29 = vld [vmem:[%s0 + $0x70] sm:$0xff]
  %v30 = vld [vmem:[%s0 + $0x78] sm:$0xff]
  %v31 = vld [vmem:[%s0 + $0x80] sm:$0xff]
  %v32 = vld [vmem:[%s0 + $0x88] sm:$0xff]
  %v33 = vld [vmem:[%s0 + $0x90] sm:$0xff]
  %v34 = vld [vmem:[%s0 + $0x98] sm:$0xff]
  %v35 = vld [vmem:[%s0 + $0xa0] sm:$0xff]
  %v36 = vld [vmem:[%s0 + $0xa8] sm:$0xff]
  %v37 = vld [vmem:[%s0 + $0xb0] sm:$0xff]
  %v38 = vld [vmem:[%s0 + $0xb8] sm:$0xff]
  %v39 = vld [vmem:[%s0 + $0xc0] sm:$0xff]
  %v40 = vld [vmem:[%s0 + $0xc8] sm:$0xff]
  %v41 = vld [vmem:[%s0 + $0xd0] sm:$0xff]
  %v42 = vld [vmem:[%s0 + $0xd8] sm:$0xff]
  %v43 = vld [vmem:[%s0 + $0xe0] sm:$0xff]
  %v44 = vld [vmem:[%s0 + $0xe8] sm:$0xff]
  %v45 = vld [vmem:[%s0 + $0xf0] sm:$0xff]
  %v46 = vld [vmem:[%s0 + $0xf8] sm:$0xff]
  %v47 = vld [vmem:[%s0 + $0x100] sm:$0xff]
  %v48 = vld [vmem:[%s0 + $0x108] sm:$0xff]
  %v49 = vld [vmem:[%s0 + $0x110] sm:$0xff]
  %v50 = vld [vmem:[%s0 + $0x118] sm:$0xff]
  %v51 = vld [vmem:[%s0 + $0x120] sm:$0xff]
  %v52 = vld [vmem:[%s0 + $0x128] sm:$0xff]
  %v53 = vld [vmem:[%s0 + $0x130] sm:$0xff]
  %v54 = vld [vmem:[%s0 + $0x138] sm:$0xff]
  %v55 = vld [vmem:[%s0 + $0x140] sm:$0xff]
  %v56 = vld [vmem:[%s0 + $0x148] sm:$0xff]
  %v57 = vld [vmem:[%s0 + $0x150] sm:$0xff]
  %v58 = vld [vmem:[%s0 + $0x158] sm:$0xff]
  %v59 = vld [vmem:[%s0 + $0x160] sm:$0xff]
  %v60 = vld [vmem:[%s0 + $0x168] sm:$0xff]
  %v61 = vld [vmem:[%s0 + $0x170] sm:$0xff]
  %v62 = vld [vmem:[%s0 + $0x178] sm:$0xff]
  %v63 = vld [vmem:[%s0 + $0x180] sm:$0xff]
  %v64 = vld [vmem:[%s0 + $0x188] sm:$0xff]
  %v65 = vld [vmem:[%s0 + $0x190] sm:$0xff]
  %v66 = vld [vmem:[%s0 + $0x198] sm:$0xff]
  %v67 = vld [vmem:[%s0 + $0x1a0] sm:$0xff]
  %v68 = vld [vmem:[%s0 + $0x1a8] sm:$0xff]
  %v69 = vld [vmem:[%s0 + $0x1b0] sm:$0xff]
  %v70 = vld [vmem:[%s0 + $0x1b8] sm:$0xff]
  %v71 = vld [vmem:[%s0 + $0x1c0] sm:$0xff]
  %v72 = vld [vmem:[%s0 + $0x1c8] sm:$0xff]
  %v73 = vld [vmem:[%s0 + $0x1d0] sm:$0xff]
  %v74 = vld [vmem:[%s0 + $0x1d8] sm:$0xff]
  %v75 = vld [vmem:[%s0 + $0x1e0] sm:$0xff]
  %v76 = vld [vmem:[%s0 + $0x1e8] sm:$0xff]
  %v77 = vld [vmem:[%s0 + $0x1f0] sm:$0xff]
  %v78 = vld [vmem:[%s0 + $0x1f8] sm:$0xff]
  %v79 = vld [vmem:[%s0 + $0x200] sm:$0xff]
  %v80 = vld [vmem:[%s0 + $0x208] sm:$0xff]
  %v81 = vld [vmem:[%s0 + $0x210] sm:$0xff]
  %v82 = vld [vmem:[%s0 + $0x218] sm:$0xff]
  %v83 = vld [vmem:[%s0 + $0x220] sm:$0xff]
  %v84 = vld [vmem:[%s0 + $0x228] sm:$0xff]
  %v85 = vld [vmem:[%s0 + $0x230] sm:$0xff]
  %v86 = vld [vmem:[%s0 + $0x238] sm:$0xff]
  %v87 = vld [vmem:[%s1] sm:$0xff]
  %v88 = vld [vmem:[%s1 + $0x8] sm:$0xff]
  %v89 = vld [vmem:[%s1 + $0x10] sm:$0x3]
  %v93 = vlaneseq
  %v94 = vshrl.u32 %v93, 7
  %v95 = vsub.s32 0, %v94
  %v96 = vrot.slane %v87, %v95
  %v97 = vlaneseq
  %v98 = vshrl.u32 %v97, 7
  %v99 = vsub.s32 1, %v98
  %v100 = vrot.slane %v87, %v99
  %v101 = vlaneseq
  %v102 = vshrl.u32 %v101, 7
  %v103 = vsub.s32 2, %v102
  %v104 = vrot.slane %v87, %v103
  %v105 = vlaneseq
  %v106 = vshrl.u32 %v105, 7
  %v107 = vsub.s32 3, %v106
  %v108 = vrot.slane %v87, %v107
  %v109 = vlaneseq
  %v110 = vshrl.u32 %v109, 7
  %v111 = vsub.s32 4, %v110
  %v112 = vrot.slane %v87, %v111
  %v113 = vlaneseq
  %v114 = vshrl.u32 %v113, 7
  %v115 = vsub.s32 5, %v114
  %v116 = vrot.slane %v87, %v115
  %v117 = vlaneseq
  %v118 = vshrl.u32 %v117, 7
  %v119 = vsub.s32 6, %v118
  %v120 = vrot.slane %v87, %v119
  %v121 = vlaneseq
  %v122 = vshrl.u32 %v121, 7
  %v123 = vsub.s32 7, %v122
  %v124 = vrot.slane %v87, %v123
  %v125 = vlaneseq
  %v126 = vshrl.u32 %v125, 7
  %v127 = vsub.s32 0, %v126
  %v128 = vrot.slane %v88, %v127
  %v129 = vlaneseq
  %v130 = vshrl.u32 %v129, 7
  %v131 = vsub.s32 1, %v130
  %v132 = vrot.slane %v88, %v131
  %v133 = vlaneseq
  %v134 = vshrl.u32 %v133, 7
  %v135 = vsub.s32 2, %v134
  %v136 = vrot.slane %v88, %v135
  %v137 = vlaneseq
  %v138 = vshrl.u32 %v137, 7
  %v139 = vsub.s32 3, %v138
  %v140 = vrot.slane %v88, %v139
  %v141 = vlaneseq
  %v142 = vshrl.u32 %v141, 7
  %v143 = vsub.s32 4, %v142
  %v144 = vrot.slane %v88, %v143
  %v145 = vlaneseq
  %v146 = vshrl.u32 %v145, 7
  %v147 = vsub.s32 5, %v146
  %v148 = vrot.slane %v88, %v147
  %v149 = vlaneseq
  %v150 = vshrl.u32 %v149, 7
  %v151 = vsub.s32 6, %v150
  %v152 = vrot.slane %v88, %v151
  %v153 = vlaneseq
  %v154 = vshrl.u32 %v153, 7
  %v155 = vsub.s32 7, %v154
  %v156 = vrot.slane %v88, %v155
  %v157 = vlaneseq
  %v158 = vshrl.u32 %v157, 7
  %v159 = vsub.s32 0, %v158
  %v160 = vrot.slane %v89, %v159
  %v161 = vlaneseq
  %v162 = vshrl.u32 %v161, 7
  %v163 = vsub.s32 1, %v162
  %v164 = vrot.slane %v89, %v163
  %v183 = vsub.f32 %v15, %v96
  %v184 = vsub.f32 %v16, %v100
  %v185 = vsub.f32 %v17, %v104
  %v186 = vsub.f32 %v18, %v108
  %v187 = vsub.f32 %v19, %v112
  %v188 = vsub.f32 %v20, %v116
  %v189 = vsub.f32 %v21, %v120
  %v190 = vsub.f32 %v22, %v124
  %v191 = vsub.f32 %v23, %v128
  %v192 = vsub.f32 %v24, %v132
  %v193 = vsub.f32 %v25, %v136
  %v194 = vsub.f32 %v26, %v140
  %v195 = vsub.f32 %v27, %v144
  %v196 = vsub.f32 %v28, %v148
  %v197 = vsub.f32 %v29, %v152
  %v198 = vsub.f32 %v30, %v156
  %v199 = vsub.f32 %v31, %v160
  %v200 = vsub.f32 %v32, %v164
  %v201 = vsub.f32 %v33, %v96
  %v202 = vsub.f32 %v34, %v100
  %v203 = vsub.f32 %v35, %v104
  %v204 = vsub.f32 %v36, %v108
  %v205 = vsub.f32 %v37, %v112
  %v206 = vsub.f32 %v38, %v116
  %v207 = vsub.f32 %v39, %v120
  %v208 = vsub.f32 %v40, %v124
  %v209 = vsub.f32 %v41, %v128
  %v210 = vsub.f32 %v42, %v132
  %v211 = vsub.f32 %v43, %v136
  %v212 = vsub.f32 %v44, %v140
  %v213 = vsub.f32 %v45, %v144
  %v214 = vsub.f32 %v46, %v148
  %v215 = vsub.f32 %v47, %v152
  %v216 = vsub.f32 %v48, %v156
  %v217 = vsub.f32 %v49, %v160
  %v218 = vsub.f32 %v50, %v164
  %v219 = vsub.f32 %v51, %v96
  %v220 = vsub.f32 %v52, %v100
  %v221 = vsub.f32 %v53, %v104
  %v222 = vsub.f32 %v54, %v108
  %v223 = vsub.f32 %v55, %v112
  %v224 = vsub.f32 %v56, %v116
  %v225 = vsub.f32 %v57, %v120
  %v226 = vsub.f32 %v58, %v124
  %v227 = vsub.f32 %v59, %v128
  %v228 = vsub.f32 %v60, %v132
  %v229 = vsub.f32 %v61, %v136
  %v230 = vsub.f32 %v62, %v140
  %v231 = vsub.f32 %v63, %v144
  %v232 = vsub.f32 %v64, %v148
  %v233 = vsub.f32 %v65, %v152
  %v234 = vsub.f32 %v66, %v156
  %v235 = vsub.f32 %v67, %v160
  %v236 = vsub.f32 %v68, %v164
  %v237 = vsub.f32 %v69, %v96
  %v238 = vsub.f32 %v70, %v100
  %v239 = vsub.f32 %v71, %v104
  %v240 = vsub.f32 %v72, %v108
  %v241 = vsub.f32 %v73, %v112
  %v242 = vsub.f32 %v74, %v116
  %v243 = vsub.f32 %v75, %v120
  %v244 = vsub.f32 %v76, %v124
  %v245 = vsub.f32 %v77, %v128
  %v246 = vsub.f32 %v78, %v132
  %v247 = vsub.f32 %v79, %v136
  %v248 = vsub.f32 %v80, %v140
  %v249 = vsub.f32 %v81, %v144
  %v250 = vsub.f32 %v82, %v148
  %v251 = vsub.f32 %v83, %v152
  %v252 = vsub.f32 %v84, %v156
  %v253 = vsub.f32 %v85, %v160
  %v254 = vsub.f32 %v86, %v164
  %v255 = vand.u32 2147483647, %v183
  %v256 = vand.u32 2147483647, %v184
  %v257 = vand.u32 2147483647, %v185
  %v258 = vand.u32 2147483647, %v186
  %v259 = vand.u32 2147483647, %v187
  %v260 = vand.u32 2147483647, %v188
  %v261 = vand.u32 2147483647, %v189
  %v262 = vand.u32 2147483647, %v190
  %v263 = vand.u32 2147483647, %v191
  %v264 = vand.u32 2147483647, %v192
  %v265 = vand.u32 2147483647, %v193
  %v266 = vand.u32 2147483647, %v194
  %v267 = vand.u32 2147483647, %v195
  %v268 = vand.u32 2147483647, %v196
  %v269 = vand.u32 2147483647, %v197
  %v270 = vand.u32 2147483647, %v198
  %v271 = vand.u32 2147483647, %v199
  %v272 = vand.u32 2147483647, %v200
  %v273 = vand.u32 2147483647, %v201
  %v274 = vand.u32 2147483647, %v202
  %v275 = vand.u32 2147483647, %v203
  %v276 = vand.u32 2147483647, %v204
  %v277 = vand.u32 2147483647, %v205
  %v278 = vand.u32 2147483647, %v206
  %v279 = vand.u32 2147483647, %v207
  %v280 = vand.u32 2147483647, %v208
  %v281 = vand.u32 2147483647, %v209
  %v282 = vand.u32 2147483647, %v210
  %v283 = vand.u32 2147483647, %v211
  %v284 = vand.u32 2147483647, %v212
  %v285 = vand.u32 2147483647, %v213
  %v286 = vand.u32 2147483647, %v214
  %v287 = vand.u32 2147483647, %v215
  %v288 = vand.u32 2147483647, %v216
  %v289 = vand.u32 2147483647, %v217
  %v290 = vand.u32 2147483647, %v218
  %v291 = vand.u32 2147483647, %v219
  %v292 = vand.u32 2147483647, %v220
  %v293 = vand.u32 2147483647, %v221
  %v294 = vand.u32 2147483647, %v222
  %v295 = vand.u32 2147483647, %v223
  %v296 = vand.u32 2147483647, %v224
  %v297 = vand.u32 2147483647, %v225
  %v298 = vand.u32 2147483647, %v226
  %v299 = vand.u32 2147483647, %v227
  %v300 = vand.u32 2147483647, %v228
  %v301 = vand.u32 2147483647, %v229
  %v302 = vand.u32 2147483647, %v230
  %v303 = vand.u32 2147483647, %v231
  %v304 = vand.u32 2147483647, %v232
  %v305 = vand.u32 2147483647, %v233
  %v306 = vand.u32 2147483647, %v234
  %v307 = vand.u32 2147483647, %v235
  %v308 = vand.u32 2147483647, %v236
  %v309 = vand.u32 2147483647, %v237
  %v310 = vand.u32 2147483647, %v238
  %v311 = vand.u32 2147483647, %v239
  %v312 = vand.u32 2147483647, %v240
  %v313 = vand.u32 2147483647, %v241
  %v314 = vand.u32 2147483647, %v242
  %v315 = vand.u32 2147483647, %v243
  %v316 = vand.u32 2147483647, %v244
  %v317 = vand.u32 2147483647, %v245
  %v318 = vand.u32 2147483647, %v246
  %v319 = vand.u32 2147483647, %v247
  %v320 = vand.u32 2147483647, %v248
  %v321 = vand.u32 2147483647, %v249
  %v322 = vand.u32 2147483647, %v250
  %v323 = vand.u32 2147483647, %v251
  %v324 = vand.u32 2147483647, %v252
  %v325 = vand.u32 2147483647, %v253
  %v326 = vand.u32 2147483647, %v254
  %v327 = vmul.f32 %v255, 3.0
  %v328 = vmul.f32 %v256, 3.0
  %v329 = vmul.f32 %v257, 3.0
  %v330 = vmul.f32 %v258, 3.0
  %v331 = vmul.f32 %v259, 3.0
  %v332 = vmul.f32 %v260, 3.0
  %v333 = vmul.f32 %v261, 3.0
  %v334 = vmul.f32 %v262, 3.0
  %v335 = vmul.f32 %v263, 3.0
  %v336 = vmul.f32 %v264, 3.0
  %v337 = vmul.f32 %v265, 3.0
  %v338 = vmul.f32 %v266, 3.0
  %v339 = vmul.f32 %v267, 3.0
  %v340 = vmul.f32 %v268, 3.0
  %v341 = vmul.f32 %v269, 3.0
  %v342 = vmul.f32 %v270, 3.0
  %v343 = vmul.f32 %v271, 3.0
  %v344 = vmul.f32 %v272, 3.0
  %v345 = vmul.f32 %v273, 3.0
  %v346 = vmul.f32 %v274, 3.0
  %v347 = vmul.f32 %v275, 3.0
  %v348 = vmul.f32 %v276, 3.0
  %v349 = vmul.f32 %v277, 3.0
  %v350 = vmul.f32 %v278, 3.0
  %v351 = vmul.f32 %v279, 3.0
  %v352 = vmul.f32 %v280, 3.0
  %v353 = vmul.f32 %v281, 3.0
  %v354 = vmul.f32 %v282, 3.0
  %v355 = vmul.f32 %v283, 3.0
  %v356 = vmul.f32 %v284, 3.0
  %v357 = vmul.f32 %v285, 3.0
  %v358 = vmul.f32 %v286, 3.0
  %v359 = vmul.f32 %v287, 3.0
  %v360 = vmul.f32 %v288, 3.0
  %v361 = vmul.f32 %v289, 3.0
  %v362 = vmul.f32 %v290, 3.0
  %v363 = vmul.f32 %v291, 3.0
  %v364 = vmul.f32 %v292, 3.0
  %v365 = vmul.f32 %v293, 3.0
  %v366 = vmul.f32 %v294, 3.0
  %v367 = vmul.f32 %v295, 3.0
  %v368 = vmul.f32 %v296, 3.0
  %v369 = vmul.f32 %v297, 3.0
  %v370 = vmul.f32 %v298, 3.0
  %v371 = vmul.f32 %v299, 3.0
  %v372 = vmul.f32 %v300, 3.0
  %v373 = vmul.f32 %v301, 3.0
  %v374 = vmul.f32 %v302, 3.0
  %v375 = vmul.f32 %v303, 3.0
  %v376 = vmul.f32 %v304, 3.0
  %v377 = vmul.f32 %v305, 3.0
  %v378 = vmul.f32 %v306, 3.0
  %v379 = vmul.f32 %v307, 3.0
  %v380 = vmul.f32 %v308, 3.0
  %v381 = vmul.f32 %v309, 3.0
  %v382 = vmul.f32 %v310, 3.0
  %v383 = vmul.f32 %v311, 3.0
  %v384 = vmul.f32 %v312, 3.0
  %v385 = vmul.f32 %v313, 3.0
  %v386 = vmul.f32 %v314, 3.0
  %v387 = vmul.f32 %v315, 3.0
  %v388 = vmul.f32 %v316, 3.0
  %v389 = vmul.f32 %v317, 3.0
  %v390 = vmul.f32 %v318, 3.0
  %v391 = vmul.f32 %v319, 3.0
  %v392 = vmul.f32 %v320, 3.0
  %v393 = vmul.f32 %v321, 3.0
  %v394 = vmul.f32 %v322, 3.0
  %v395 = vmul.f32 %v323, 3.0
  %v396 = vmul.f32 %v324, 3.0
  %v397 = vmul.f32 %v325, 3.0
  %v398 = vmul.f32 %v326, 3.0
  %v399 = vsub.f32 1.0, %v327
  %v400 = vsub.f32 1.0, %v328
  %v401 = vsub.f32 1.0, %v329
  %v402 = vsub.f32 1.0, %v330
  %v403 = vsub.f32 1.0, %v331
  %v404 = vsub.f32 1.0, %v332
  %v405 = vsub.f32 1.0, %v333
  %v406 = vsub.f32 1.0, %v334
  %v407 = vsub.f32 1.0, %v335
  %v408 = vsub.f32 1.0, %v336
  %v409 = vsub.f32 1.0, %v337
  %v410 = vsub.f32 1.0, %v338
  %v411 = vsub.f32 1.0, %v339
  %v412 = vsub.f32 1.0, %v340
  %v413 = vsub.f32 1.0, %v341
  %v414 = vsub.f32 1.0, %v342
  %v415 = vsub.f32 1.0, %v343
  %v416 = vsub.f32 1.0, %v344
  %v417 = vsub.f32 1.0, %v345
  %v418 = vsub.f32 1.0, %v346
  %v419 = vsub.f32 1.0, %v347
  %v420 = vsub.f32 1.0, %v348
  %v421 = vsub.f32 1.0, %v349
  %v422 = vsub.f32 1.0, %v350
  %v423 = vsub.f32 1.0, %v351
  %v424 = vsub.f32 1.0, %v352
  %v425 = vsub.f32 1.0, %v353
  %v426 = vsub.f32 1.0, %v354
  %v427 = vsub.f32 1.0, %v355
  %v428 = vsub.f32 1.0, %v356
  %v429 = vsub.f32 1.0, %v357
  %v430 = vsub.f32 1.0, %v358
  %v431 = vsub.f32 1.0, %v359
  %v432 = vsub.f32 1.0, %v360
  %v433 = vsub.f32 1.0, %v361
  %v434 = vsub.f32 1.0, %v362
  %v435 = vsub.f32 1.0, %v363
  %v436 = vsub.f32 1.0, %v364
  %v437 = vsub.f32 1.0, %v365
  %v438 = vsub.f32 1.0, %v366
  %v439 = vsub.f32 1.0, %v367
  %v440 = vsub.f32 1.0, %v368
  %v441 = vsub.f32 1.0, %v369
  %v442 = vsub.f32 1.0, %v370
  %v443 = vsub.f32 1.0, %v371
  %v444 = vsub.f32 1.0, %v372
  %v445 = vsub.f32 1.0, %v373
  %v446 = vsub.f32 1.0, %v374
  %v447 = vsub.f32 1.0, %v375
  %v448 = vsub.f32 1.0, %v376
  %v449 = vsub.f32 1.0, %v377
  %v450 = vsub.f32 1.0, %v378
  %v451 = vsub.f32 1.0, %v379
  %v452 = vsub.f32 1.0, %v380
  %v453 = vsub.f32 1.0, %v381
  %v454 = vsub.f32 1.0, %v382
  %v455 = vsub.f32 1.0, %v383
  %v456 = vsub.f32 1.0, %v384
  %v457 = vsub.f32 1.0, %v385
  %v458 = vsub.f32 1.0, %v386
  %v459 = vsub.f32 1.0, %v387
  %v460 = vsub.f32 1.0, %v388
  %v461 = vsub.f32 1.0, %v389
  %v462 = vsub.f32 1.0, %v390
  %v463 = vsub.f32 1.0, %v391
  %v464 = vsub.f32 1.0, %v392
  %v465 = vsub.f32 1.0, %v393
  %v466 = vsub.f32 1.0, %v394
  %v467 = vsub.f32 1.0, %v395
  %v468 = vsub.f32 1.0, %v396
  %v469 = vsub.f32 1.0, %v397
  %v470 = vsub.f32 1.0, %v398
  %v471 = vmax.f32 %v399, 0.0
  %v472 = vmax.f32 %v400, 0.0
  %v473 = vmax.f32 %v401, 0.0
  %v474 = vmax.f32 %v402, 0.0
  %v475 = vmax.f32 %v403, 0.0
  %v476 = vmax.f32 %v404, 0.0
  %v477 = vmax.f32 %v405, 0.0
  %v478 = vmax.f32 %v406, 0.0
  %v479 = vmax.f32 %v407, 0.0
  %v480 = vmax.f32 %v408, 0.0
  %v481 = vmax.f32 %v409, 0.0
  %v482 = vmax.f32 %v410, 0.0
  %v483 = vmax.f32 %v411, 0.0
  %v484 = vmax.f32 %v412, 0.0
  %v485 = vmax.f32 %v413, 0.0
  %v486 = vmax.f32 %v414, 0.0
  %v487 = vmax.f32 %v415, 0.0
  %v488 = vmax.f32 %v416, 0.0
  %v489 = vmax.f32 %v417, 0.0
  %v490 = vmax.f32 %v418, 0.0
  %v491 = vmax.f32 %v419, 0.0
  %v492 = vmax.f32 %v420, 0.0
  %v493 = vmax.f32 %v421, 0.0
  %v494 = vmax.f32 %v422, 0.0
  %v495 = vmax.f32 %v423, 0.0
  %v496 = vmax.f32 %v424, 0.0
  %v497 = vmax.f32 %v425, 0.0
  %v498 = vmax.f32 %v426, 0.0
  %v499 = vmax.f32 %v427, 0.0
  %v500 = vmax.f32 %v428, 0.0
  %v501 = vmax.f32 %v429, 0.0
  %v502 = vmax.f32 %v430, 0.0
  %v503 = vmax.f32 %v431, 0.0
  %v504 = vmax.f32 %v432, 0.0
  %v505 = vmax.f32 %v433, 0.0
  %v506 = vmax.f32 %v434, 0.0
  %v507 = vmax.f32 %v435, 0.0
  %v508 = vmax.f32 %v436, 0.0
  %v509 = vmax.f32 %v437, 0.0
  %v510 = vmax.f32 %v438, 0.0
  %v511 = vmax.f32 %v439, 0.0
  %v512 = vmax.f32 %v440, 0.0
  %v513 = vmax.f32 %v441, 0.0
  %v514 = vmax.f32 %v442, 0.0
  %v515 = vmax.f32 %v443, 0.0
  %v516 = vmax.f32 %v444, 0.0
  %v517 = vmax.f32 %v445, 0.0
  %v518 = vmax.f32 %v446, 0.0
  %v519 = vmax.f32 %v447, 0.0
  %v520 = vmax.f32 %v448, 0.0
  %v521 = vmax.f32 %v449, 0.0
  %v522 = vmax.f32 %v450, 0.0
  %v523 = vmax.f32 %v451, 0.0
  %v524 = vmax.f32 %v452, 0.0
  %v525 = vmax.f32 %v453, 0.0
  %v526 = vmax.f32 %v454, 0.0
  %v527 = vmax.f32 %v455, 0.0
  %v528 = vmax.f32 %v456, 0.0
  %v529 = vmax.f32 %v457, 0.0
  %v530 = vmax.f32 %v458, 0.0
  %v531 = vmax.f32 %v459, 0.0
  %v532 = vmax.f32 %v460, 0.0
  %v533 = vmax.f32 %v461, 0.0
  %v534 = vmax.f32 %v462, 0.0
  %v535 = vmax.f32 %v463, 0.0
  %v536 = vmax.f32 %v464, 0.0
  %v537 = vmax.f32 %v465, 0.0
  %v538 = vmax.f32 %v466, 0.0
  %v539 = vmax.f32 %v467, 0.0
  %v540 = vmax.f32 %v468, 0.0
  %v541 = vmax.f32 %v469, 0.0
  %v542 = vmax.f32 %v470, 0.0
  %v543 = vpack.c.bf16 %v489, %v471
  %v544 = vpack.c.bf16 %v490, %v472
  %v545 = vpack.c.bf16 %v491, %v473
  %v546 = vpack.c.bf16 %v492, %v474
  %v547 = vpack.c.bf16 %v493, %v475
  %v548 = vpack.c.bf16 %v494, %v476
  %v549 = vpack.c.bf16 %v495, %v477
  %v550 = vpack.c.bf16 %v496, %v478
  %v551 = vpack.c.bf16 %v497, %v479
  %v552 = vpack.c.bf16 %v498, %v480
  %v553 = vpack.c.bf16 %v499, %v481
  %v554 = vpack.c.bf16 %v500, %v482
  %v555 = vpack.c.bf16 %v501, %v483
  %v556 = vpack.c.bf16 %v502, %v484
  %v557 = vpack.c.bf16 %v503, %v485
  %v558 = vpack.c.bf16 %v504, %v486
  %v559 = vpack.c.bf16 %v505, %v487
  %v560 = vpack.c.bf16 %v506, %v488
  %v561 = vpack.c.bf16 %v525, %v507
  %v562 = vpack.c.bf16 %v526, %v508
  %v563 = vpack.c.bf16 %v527, %v509
  %v564 = vpack.c.bf16 %v528, %v510
  %v565 = vpack.c.bf16 %v529, %v511
  %v566 = vpack.c.bf16 %v530, %v512
  %v567 = vpack.c.bf16 %v531, %v513
  %v568 = vpack.c.bf16 %v532, %v514
  %v569 = vpack.c.bf16 %v533, %v515
  %v570 = vpack.c.bf16 %v534, %v516
  %v571 = vpack.c.bf16 %v535, %v517
  %v572 = vpack.c.bf16 %v536, %v518
  %v573 = vpack.c.bf16 %v537, %v519
  %v574 = vpack.c.bf16 %v538, %v520
  %v575 = vpack.c.bf16 %v539, %v521
  %v576 = vpack.c.bf16 %v540, %v522
  %v577 = vpack.c.bf16 %v541, %v523
  %v578 = vpack.c.bf16 %v542, %v524
  %v579 = vld [vmem:[%s2] sm:$0xf]
  %v580 = vld [vmem:[%s2 + $0x4] sm:$0xf]
  %v581 = vld [vmem:[%s2 + $0x8] sm:$0xf]
  %v582 = vld [vmem:[%s2 + $0xc] sm:$0xf]
  %v583 = vld [vmem:[%s2 + $0x10] sm:$0xf]
  %v584 = vld [vmem:[%s2 + $0x14] sm:$0xf]
  %v585 = vld [vmem:[%s2 + $0x18] sm:$0xf]
  %v586 = vld [vmem:[%s2 + $0x1c] sm:$0xf]
  %v587 = vld [vmem:[%s2 + $0x20] sm:$0xf]
  %v588 = vld [vmem:[%s2 + $0x24] sm:$0xf]
  %v589 = vld [vmem:[%s2 + $0x28] sm:$0xf]
  %v590 = vld [vmem:[%s2 + $0x2c] sm:$0xf]
  %v591 = vld [vmem:[%s2 + $0x30] sm:$0xf]
  %v592 = vld [vmem:[%s2 + $0x34] sm:$0xf]
  %v593 = vld [vmem:[%s2 + $0x38] sm:$0xf]
  %v594 = vld [vmem:[%s2 + $0x3c] sm:$0xf]
  %v595 = vld [vmem:[%s2 + $0x40] sm:$0xf]
  %v596 = vld [vmem:[%s2 + $0x44] sm:$0xf]
  %v597 = vld [vmem:[%s2 + $0x48] sm:$0xf]
  %v598 = vld [vmem:[%s2 + $0x4c] sm:$0xf]
  %v599 = vld [vmem:[%s2 + $0x50] sm:$0xf]
  %v600 = vld [vmem:[%s2 + $0x54] sm:$0xf]
  %v601 = vld [vmem:[%s2 + $0x58] sm:$0xf]
  %v602 = vld [vmem:[%s2 + $0x5c] sm:$0xf]
  %v603 = vld [vmem:[%s2 + $0x60] sm:$0xf]
  %v604 = vld [vmem:[%s2 + $0x64] sm:$0xf]
  %v605 = vld [vmem:[%s2 + $0x68] sm:$0xf]
  %v606 = vld [vmem:[%s2 + $0x6c] sm:$0xf]
  %v607 = vld [vmem:[%s2 + $0x70] sm:$0xf]
  %v608 = vld [vmem:[%s2 + $0x74] sm:$0xf]
  %v609 = vld [vmem:[%s2 + $0x78] sm:$0xf]
  %v610 = vld [vmem:[%s2 + $0x7c] sm:$0xf]
  %v611 = vld [vmem:[%s2 + $0x80] sm:$0xf]
  %v612 = vld [vmem:[%s2 + $0x84] sm:$0xf]
  %v613 = vld [vmem:[%s2 + $0x88] sm:$0xf]
  %v614 = vld [vmem:[%s2 + $0x8c] sm:$0xf]
  %v615 = vld [vmem:[%s2 + $0x90] sm:$0xf]
  %v616 = vld [vmem:[%s2 + $0x94] sm:$0xf]
  %v617 = vld [vmem:[%s2 + $0x98] sm:$0xf]
  %v618 = vld [vmem:[%s2 + $0x9c] sm:$0xf]
  %v619 = vld [vmem:[%s2 + $0xa0] sm:$0xf]
  %v620 = vld [vmem:[%s2 + $0xa4] sm:$0xf]
  %v621 = vld [vmem:[%s2 + $0xa8] sm:$0xf]
  %v622 = vld [vmem:[%s2 + $0xac] sm:$0xf]
  %v623 = vld [vmem:[%s2 + $0xb0] sm:$0xf]
  %v624 = vld [vmem:[%s2 + $0xb4] sm:$0xf]
  %v625 = vld [vmem:[%s2 + $0xb8] sm:$0xf]
  %v626 = vld [vmem:[%s2 + $0xbc] sm:$0xf]
  %v627 = vld [vmem:[%s2 + $0xc0] sm:$0xf]
  %v628 = vld [vmem:[%s2 + $0xc4] sm:$0xf]
  %v629 = vld [vmem:[%s2 + $0xc8] sm:$0xf]
  %v630 = vld [vmem:[%s2 + $0xcc] sm:$0xf]
  %v631 = vld [vmem:[%s2 + $0xd0] sm:$0xf]
  %v632 = vld [vmem:[%s2 + $0xd4] sm:$0xf]
  %v633 = vld [vmem:[%s2 + $0xd8] sm:$0xf]
  %v634 = vld [vmem:[%s2 + $0xdc] sm:$0xf]
  %v635 = vld [vmem:[%s2 + $0xe0] sm:$0xf]
  %v636 = vld [vmem:[%s2 + $0xe4] sm:$0xf]
  %v637 = vld [vmem:[%s2 + $0xe8] sm:$0xf]
  %v638 = vld [vmem:[%s2 + $0xec] sm:$0xf]
  %v639 = vld [vmem:[%s2 + $0xf0] sm:$0xf]
  %v640 = vld [vmem:[%s2 + $0xf4] sm:$0xf]
  %v641 = vld [vmem:[%s2 + $0xf8] sm:$0xf]
  %v642 = vld [vmem:[%s2 + $0xfc] sm:$0xf]
  %v643 = vld [vmem:[%s2 + $0x100] sm:$0xf]
  %v644 = vld [vmem:[%s2 + $0x104] sm:$0xf]
  %v645 = vld [vmem:[%s2 + $0x108] sm:$0xf]
  %v646 = vld [vmem:[%s2 + $0x10c] sm:$0xf]
  %v647 = vld [vmem:[%s2 + $0x110] sm:$0xf]
  %v648 = vld [vmem:[%s2 + $0x114] sm:$0xf]
  %v649 = vld [vmem:[%s2 + $0x118] sm:$0xf]
  %v650 = vld [vmem:[%s2 + $0x11c] sm:$0xf]
  %v651 = vld [vmem:[%s2 + $0x120] sm:$0xf]
  %v652 = vld [vmem:[%s2 + $0x124] sm:$0xf]
  %v653 = vld [vmem:[%s2 + $0x128] sm:$0xf]
  %v654 = vld [vmem:[%s2 + $0x12c] sm:$0xf]
  %v655 = vld [vmem:[%s2 + $0x130] sm:$0xf]
  %v656 = vld [vmem:[%s2 + $0x134] sm:$0xf]
  %v657 = vld [vmem:[%s2 + $0x138] sm:$0xf]
  %v658 = vld [vmem:[%s2 + $0x13c] sm:$0xf]
  %v659 = vld [vmem:[%s2 + $0x140] sm:$0xf]
  %v660 = vld [vmem:[%s2 + $0x144] sm:$0xf]
  %v661 = vld [vmem:[%s2 + $0x148] sm:$0xf]
  %v662 = vld [vmem:[%s2 + $0x14c] sm:$0xf]
  %v663 = vld [vmem:[%s2 + $0x150] sm:$0xf]
  %v664 = vld [vmem:[%s2 + $0x154] sm:$0xf]
  %v665 = vld [vmem:[%s2 + $0x158] sm:$0xf]
  %v666 = vld [vmem:[%s2 + $0x15c] sm:$0xf]
  %v667 = vld [vmem:[%s2 + $0x160] sm:$0xf]
  %v668 = vld [vmem:[%s2 + $0x164] sm:$0xf]
  %v669 = vld [vmem:[%s2 + $0x168] sm:$0xf]
  %v670 = vld [vmem:[%s2 + $0x16c] sm:$0xf]
  %v671 = vld [vmem:[%s2 + $0x170] sm:$0xf]
  %v672 = vld [vmem:[%s2 + $0x174] sm:$0xf]
  %v673 = vld [vmem:[%s2 + $0x178] sm:$0xf]
  %v674 = vld [vmem:[%s2 + $0x17c] sm:$0xf]
  %v675 = vld [vmem:[%s2 + $0x180] sm:$0xf]
  %v676 = vld [vmem:[%s2 + $0x184] sm:$0xf]
  %v677 = vld [vmem:[%s2 + $0x188] sm:$0xf]
  %v678 = vld [vmem:[%s2 + $0x18c] sm:$0xf]
  %v679 = vld [vmem:[%s2 + $0x190] sm:$0xf]
  %v680 = vld [vmem:[%s2 + $0x194] sm:$0xf]
  %v681 = vld [vmem:[%s2 + $0x198] sm:$0xf]
  %v682 = vld [vmem:[%s2 + $0x19c] sm:$0xf]
  %v683 = vld [vmem:[%s2 + $0x1a0] sm:$0xf]
  %v684 = vld [vmem:[%s2 + $0x1a4] sm:$0xf]
  %v685 = vld [vmem:[%s2 + $0x1a8] sm:$0xf]
  %v686 = vld [vmem:[%s2 + $0x1ac] sm:$0xf]
  %v687 = vld [vmem:[%s2 + $0x1b0] sm:$0xf]
  %v688 = vld [vmem:[%s2 + $0x1b4] sm:$0xf]
  %v689 = vld [vmem:[%s2 + $0x1b8] sm:$0xf]
  %v690 = vld [vmem:[%s2 + $0x1bc] sm:$0xf]
  %v691 = vld [vmem:[%s2 + $0x1c0] sm:$0xf]
  %v692 = vld [vmem:[%s2 + $0x1c4] sm:$0xf]
  %v693 = vld [vmem:[%s2 + $0x1c8] sm:$0xf]
  %v694 = vld [vmem:[%s2 + $0x1cc] sm:$0xf]
  %v695 = vld [vmem:[%s2 + $0x1d0] sm:$0xf]
  %v696 = vld [vmem:[%s2 + $0x1d4] sm:$0xf]
  %v697 = vld [vmem:[%s2 + $0x1d8] sm:$0xf]
  %v698 = vld [vmem:[%s2 + $0x1dc] sm:$0xf]
  %v699 = vld [vmem:[%s2 + $0x1e0] sm:$0xf]
  %v700 = vld [vmem:[%s2 + $0x1e4] sm:$0xf]
  %v701 = vld [vmem:[%s2 + $0x1e8] sm:$0xf]
  %v702 = vld [vmem:[%s2 + $0x1ec] sm:$0xf]
  %v703 = vld [vmem:[%s2 + $0x1f0] sm:$0xf]
  %v704 = vld [vmem:[%s2 + $0x1f4] sm:$0xf]
  %v705 = vld [vmem:[%s2 + $0x1f8] sm:$0xf]
  %v706 = vld [vmem:[%s2 + $0x1fc] sm:$0xf]
  %v707 = vld [vmem:[%s2 + $0x200] sm:$0xf]
  %v708 = vld [vmem:[%s2 + $0x204] sm:$0xf]
  %v709 = vld [vmem:[%s2 + $0x208] sm:$0xf]
  %v710 = vld [vmem:[%s2 + $0x20c] sm:$0xf]
  %v711 = vld [vmem:[%s2 + $0x210] sm:$0xf]
  %v712 = vld [vmem:[%s2 + $0x214] sm:$0xf]
  %v713 = vld [vmem:[%s2 + $0x218] sm:$0xf]
  %v714 = vld [vmem:[%s2 + $0x21c] sm:$0xf]
  %v715 = vld [vmem:[%s2 + $0x220] sm:$0xf]
  %v716 = vld [vmem:[%s2 + $0x224] sm:$0xf]
  %v717 = vld [vmem:[%s2 + $0x228] sm:$0xf]
  %v718 = vld [vmem:[%s2 + $0x22c] sm:$0xf]
  %v719 = vld [vmem:[%s2 + $0x230] sm:$0xf]
  %v720 = vld [vmem:[%s2 + $0x234] sm:$0xf]
  %v721 = vld [vmem:[%s2 + $0x238] sm:$0xf]
  %v722 = vld [vmem:[%s2 + $0x23c] sm:$0xf]
  %v723 = vld [vmem:[%s2 + $0x240] sm:$0xf]
  %v724 = vld [vmem:[%s2 + $0x244] sm:$0xf]
  %v725 = vld [vmem:[%s2 + $0x248] sm:$0xf]
  %v726 = vld [vmem:[%s2 + $0x24c] sm:$0xf]
  %v727 = vld [vmem:[%s2 + $0x250] sm:$0xf]
  %v728 = vld [vmem:[%s2 + $0x254] sm:$0xf]
  %v729 = vld [vmem:[%s2 + $0x258] sm:$0xf]
  %v730 = vld [vmem:[%s2 + $0x25c] sm:$0xf]
  %v731 = vld [vmem:[%s2 + $0x260] sm:$0xf]
  %v732 = vld [vmem:[%s2 + $0x264] sm:$0xf]
  %v733 = vld [vmem:[%s2 + $0x268] sm:$0xf]
  %v734 = vld [vmem:[%s2 + $0x26c] sm:$0xf]
  %v735 = vld [vmem:[%s2 + $0x270] sm:$0xf]
  %v736 = vld [vmem:[%s2 + $0x274] sm:$0xf]
  %v737 = vld [vmem:[%s2 + $0x278] sm:$0xf]
  %v738 = vld [vmem:[%s2 + $0x27c] sm:$0xf]
  %v739 = vld [vmem:[%s2 + $0x280] sm:$0xf]
  %v740 = vld [vmem:[%s2 + $0x284] sm:$0xf]
  %v741 = vld [vmem:[%s2 + $0x288] sm:$0xf]
  %v742 = vld [vmem:[%s2 + $0x28c] sm:$0xf]
  %v743 = vld [vmem:[%s2 + $0x290] sm:$0xf]
  %v744 = vld [vmem:[%s2 + $0x294] sm:$0xf]
  %v745 = vld [vmem:[%s2 + $0x298] sm:$0xf]
  %v746 = vld [vmem:[%s2 + $0x29c] sm:$0xf]
  %v747 = vld [vmem:[%s2 + $0x2a0] sm:$0xf]
  %v748 = vld [vmem:[%s2 + $0x2a4] sm:$0xf]
  %v749 = vld [vmem:[%s2 + $0x2a8] sm:$0xf]
  %v750 = vld [vmem:[%s2 + $0x2ac] sm:$0xf]
  %v751 = vld [vmem:[%s2 + $0x2b0] sm:$0xf]
  %v752 = vld [vmem:[%s2 + $0x2b4] sm:$0xf]
  %v753 = vld [vmem:[%s2 + $0x2b8] sm:$0xf]
  %v754 = vld [vmem:[%s2 + $0x2bc] sm:$0xf]
  %v755 = vld [vmem:[%s2 + $0x2c0] sm:$0xf]
  %v756 = vld [vmem:[%s2 + $0x2c4] sm:$0xf]
  %v757 = vld [vmem:[%s2 + $0x2c8] sm:$0xf]
  %v758 = vld [vmem:[%s2 + $0x2cc] sm:$0xf]
  %v759 = vld [vmem:[%s2 + $0x2d0] sm:$0xf]
  %v760 = vld [vmem:[%s2 + $0x2d4] sm:$0xf]
  %v761 = vld [vmem:[%s2 + $0x2d8] sm:$0xf]
  %v762 = vld [vmem:[%s2 + $0x2dc] sm:$0xf]
  %v763 = vld [vmem:[%s2 + $0x2e0] sm:$0xf]
  %v764 = vld [vmem:[%s2 + $0x2e4] sm:$0xf]
  %v765 = vld [vmem:[%s2 + $0x2e8] sm:$0xf]
  %v766 = vld [vmem:[%s2 + $0x2ec] sm:$0xf]
  %v767 = vld [vmem:[%s2 + $0x2f0] sm:$0xf]
  %v768 = vld [vmem:[%s2 + $0x2f4] sm:$0xf]
  %v769 = vld [vmem:[%s2 + $0x2f8] sm:$0xf]
  %v770 = vld [vmem:[%s2 + $0x2fc] sm:$0xf]
  %v771 = vld [vmem:[%s2 + $0x300] sm:$0xf]
  %v772 = vld [vmem:[%s2 + $0x304] sm:$0xf]
  %v773 = vld [vmem:[%s2 + $0x308] sm:$0xf]
  %v774 = vld [vmem:[%s2 + $0x30c] sm:$0xf]
  %v775 = vld [vmem:[%s2 + $0x310] sm:$0xf]
  %v776 = vld [vmem:[%s2 + $0x314] sm:$0xf]
  %v777 = vld [vmem:[%s2 + $0x318] sm:$0xf]
  %v778 = vld [vmem:[%s2 + $0x31c] sm:$0xf]
  %v779 = vld [vmem:[%s2 + $0x320] sm:$0xf]
  %v780 = vld [vmem:[%s2 + $0x324] sm:$0xf]
  %v781 = vld [vmem:[%s2 + $0x328] sm:$0xf]
  %v782 = vld [vmem:[%s2 + $0x32c] sm:$0xf]
  %v783 = vld [vmem:[%s2 + $0x330] sm:$0xf]
  %v784 = vld [vmem:[%s2 + $0x334] sm:$0xf]
  %v785 = vld [vmem:[%s2 + $0x338] sm:$0xf]
  %v786 = vld [vmem:[%s2 + $0x33c] sm:$0xf]
  %v787 = vld [vmem:[%s2 + $0x340] sm:$0xf]
  %v788 = vld [vmem:[%s2 + $0x344] sm:$0xf]
  %v789 = vld [vmem:[%s2 + $0x348] sm:$0xf]
  %v790 = vld [vmem:[%s2 + $0x34c] sm:$0xf]
  %v791 = vld [vmem:[%s2 + $0x350] sm:$0xf]
  %v792 = vld [vmem:[%s2 + $0x354] sm:$0xf]
  %v793 = vld [vmem:[%s2 + $0x358] sm:$0xf]
  %v794 = vld [vmem:[%s2 + $0x35c] sm:$0xf]
  %v795 = vld [vmem:[%s2 + $0x360] sm:$0xf]
  %v796 = vld [vmem:[%s2 + $0x364] sm:$0xf]
  %v797 = vld [vmem:[%s2 + $0x368] sm:$0xf]
  %v798 = vld [vmem:[%s2 + $0x36c] sm:$0xf]
  %v799 = vld [vmem:[%s2 + $0x370] sm:$0xf]
  %v800 = vld [vmem:[%s2 + $0x374] sm:$0xf]
  %v801 = vld [vmem:[%s2 + $0x378] sm:$0xf]
  %v802 = vld [vmem:[%s2 + $0x37c] sm:$0xf]
  %v803 = vld [vmem:[%s2 + $0x380] sm:$0xf]
  %v804 = vld [vmem:[%s2 + $0x384] sm:$0xf]
  %v805 = vld [vmem:[%s2 + $0x388] sm:$0xf]
  %v806 = vld [vmem:[%s2 + $0x38c] sm:$0xf]
  %v807 = vld [vmem:[%s2 + $0x390] sm:$0xf]
  %v808 = vld [vmem:[%s2 + $0x394] sm:$0xf]
  %v809 = vld [vmem:[%s2 + $0x398] sm:$0xf]
  %v810 = vld [vmem:[%s2 + $0x39c] sm:$0xf]
  %v811 = vld [vmem:[%s2 + $0x3a0] sm:$0xf]
  %v812 = vld [vmem:[%s2 + $0x3a4] sm:$0xf]
  %v813 = vld [vmem:[%s2 + $0x3a8] sm:$0xf]
  %v814 = vld [vmem:[%s2 + $0x3ac] sm:$0xf]
  %v815 = vld [vmem:[%s2 + $0x3b0] sm:$0xf]
  %v816 = vld [vmem:[%s2 + $0x3b4] sm:$0xf]
  %v817 = vld [vmem:[%s2 + $0x3b8] sm:$0xf]
  %v818 = vld [vmem:[%s2 + $0x3bc] sm:$0xf]
  %v819 = vld [vmem:[%s2 + $0x3c0] sm:$0xf]
  %v820 = vld [vmem:[%s2 + $0x3c4] sm:$0xf]
  %v821 = vld [vmem:[%s2 + $0x3c8] sm:$0xf]
  %v822 = vld [vmem:[%s2 + $0x3cc] sm:$0xf]
  %v823 = vld [vmem:[%s2 + $0x3d0] sm:$0xf]
  %v824 = vld [vmem:[%s2 + $0x3d4] sm:$0xf]
  %v825 = vld [vmem:[%s2 + $0x3d8] sm:$0xf]
  %v826 = vld [vmem:[%s2 + $0x3dc] sm:$0xf]
  %v827 = vld [vmem:[%s2 + $0x3e0] sm:$0xf]
  %v828 = vld [vmem:[%s2 + $0x3e4] sm:$0xf]
  %v829 = vld [vmem:[%s2 + $0x3e8] sm:$0xf]
  %v830 = vld [vmem:[%s2 + $0x3ec] sm:$0xf]
  %v831 = vld [vmem:[%s2 + $0x3f0] sm:$0xf]
  %v832 = vld [vmem:[%s2 + $0x3f4] sm:$0xf]
  %v833 = vld [vmem:[%s2 + $0x3f8] sm:$0xf]
  %v834 = vld [vmem:[%s2 + $0x3fc] sm:$0xf]
  %v835 = vld [vmem:[%s2 + $0x400] sm:$0xf]
  %v836 = vld [vmem:[%s2 + $0x404] sm:$0xf]
  %v837 = vld [vmem:[%s2 + $0x408] sm:$0xf]
  %v838 = vld [vmem:[%s2 + $0x40c] sm:$0xf]
  %v839 = vld [vmem:[%s2 + $0x410] sm:$0xf]
  %v840 = vld [vmem:[%s2 + $0x414] sm:$0xf]
  %v841 = vld [vmem:[%s2 + $0x418] sm:$0xf]
  %v842 = vld [vmem:[%s2 + $0x41c] sm:$0xf]
  %v843 = vld [vmem:[%s2 + $0x420] sm:$0xf]
  %v844 = vld [vmem:[%s2 + $0x424] sm:$0xf]
  %v845 = vld [vmem:[%s2 + $0x428] sm:$0xf]
  %v846 = vld [vmem:[%s2 + $0x42c] sm:$0xf]
  %v847 = vld [vmem:[%s2 + $0x430] sm:$0xf]
  %v848 = vld [vmem:[%s2 + $0x434] sm:$0xf]
  %v849 = vld [vmem:[%s2 + $0x438] sm:$0xf]
  %v850 = vld [vmem:[%s2 + $0x43c] sm:$0xf]
  %v851 = vld [vmem:[%s2 + $0x440] sm:$0xf]
  %v852 = vld [vmem:[%s2 + $0x444] sm:$0xf]
  %v853 = vld [vmem:[%s2 + $0x448] sm:$0xf]
  %v854 = vld [vmem:[%s2 + $0x44c] sm:$0xf]
  %v855 = vld [vmem:[%s2 + $0x450] sm:$0xf]
  %v856 = vld [vmem:[%s2 + $0x454] sm:$0xf]
  %v857 = vld [vmem:[%s2 + $0x458] sm:$0xf]
  %v858 = vld [vmem:[%s2 + $0x45c] sm:$0xf]
  %v859 = vld [vmem:[%s2 + $0x460] sm:$0xf]
  %v860 = vld [vmem:[%s2 + $0x464] sm:$0xf]
  %v861 = vld [vmem:[%s2 + $0x468] sm:$0xf]
  %v862 = vld [vmem:[%s2 + $0x46c] sm:$0xf]
  %v863 = vld [vmem:[%s2 + $0x470] sm:$0xf]
  %v864 = vld [vmem:[%s2 + $0x474] sm:$0xf]
  %v865 = vld [vmem:[%s2 + $0x478] sm:$0xf]
  %v866 = vld [vmem:[%s2 + $0x47c] sm:$0xf]
  %v1155 = vunpack.c.l.b16 %v579
  %v1156 = vunpack.c.l.b16 %v580
  %v1157 = vunpack.c.l.b16 %v581
  %v1158 = vunpack.c.l.b16 %v582
  %v1159 = vunpack.c.l.b16 %v583
  %v1160 = vunpack.c.l.b16 %v584
  %v1161 = vunpack.c.l.b16 %v585
  %v1162 = vunpack.c.l.b16 %v586
  %v1163 = vunpack.c.l.b16 %v587
  %v1164 = vunpack.c.l.b16 %v588
  %v1165 = vunpack.c.l.b16 %v589
  %v1166 = vunpack.c.l.b16 %v590
  %v1167 = vunpack.c.l.b16 %v591
  %v1168 = vunpack.c.l.b16 %v592
  %v1169 = vunpack.c.l.b16 %v593
  %v1170 = vunpack.c.l.b16 %v594
  %v1171 = vunpack.c.l.b16 %v595
  %v1172 = vunpack.c.l.b16 %v596
  %v1173 = vunpack.c.l.b16 %v597
  %v1174 = vunpack.c.l.b16 %v598
  %v1175 = vunpack.c.l.b16 %v599
  %v1176 = vunpack.c.l.b16 %v600
  %v1177 = vunpack.c.l.b16 %v601
  %v1178 = vunpack.c.l.b16 %v602
  %v1179 = vunpack.c.l.b16 %v603
  %v1180 = vunpack.c.l.b16 %v604
  %v1181 = vunpack.c.l.b16 %v605
  %v1182 = vunpack.c.l.b16 %v606
  %v1183 = vunpack.c.l.b16 %v607
  %v1184 = vunpack.c.l.b16 %v608
  %v1185 = vunpack.c.l.b16 %v609
  %v1186 = vunpack.c.l.b16 %v610
  %v1187 = vunpack.c.l.b16 %v611
  %v1188 = vunpack.c.l.b16 %v612
  %v1189 = vunpack.c.l.b16 %v613
  %v1190 = vunpack.c.l.b16 %v614
  %v1191 = vunpack.c.l.b16 %v615
  %v1192 = vunpack.c.l.b16 %v616
  %v1193 = vunpack.c.l.b16 %v617
  %v1194 = vunpack.c.l.b16 %v618
  %v1195 = vunpack.c.l.b16 %v619
  %v1196 = vunpack.c.l.b16 %v620
  %v1197 = vunpack.c.l.b16 %v621
  %v1198 = vunpack.c.l.b16 %v622
  %v1199 = vunpack.c.l.b16 %v623
  %v1200 = vunpack.c.l.b16 %v624
  %v1201 = vunpack.c.l.b16 %v625
  %v1202 = vunpack.c.l.b16 %v626
  %v1203 = vunpack.c.l.b16 %v627
  %v1204 = vunpack.c.l.b16 %v628
  %v1205 = vunpack.c.l.b16 %v629
  %v1206 = vunpack.c.l.b16 %v630
  %v1207 = vunpack.c.l.b16 %v631
  %v1208 = vunpack.c.l.b16 %v632
  %v1209 = vunpack.c.l.b16 %v633
  %v1210 = vunpack.c.l.b16 %v634
  %v1211 = vunpack.c.l.b16 %v635
  %v1212 = vunpack.c.l.b16 %v636
  %v1213 = vunpack.c.l.b16 %v637
  %v1214 = vunpack.c.l.b16 %v638
  %v1215 = vunpack.c.l.b16 %v639
  %v1216 = vunpack.c.l.b16 %v640
  %v1217 = vunpack.c.l.b16 %v641
  %v1218 = vunpack.c.l.b16 %v642
  %v1219 = vunpack.c.l.b16 %v643
  %v1220 = vunpack.c.l.b16 %v644
  %v1221 = vunpack.c.l.b16 %v645
  %v1222 = vunpack.c.l.b16 %v646
  %v1223 = vunpack.c.l.b16 %v647
  %v1224 = vunpack.c.l.b16 %v648
  %v1225 = vunpack.c.l.b16 %v649
  %v1226 = vunpack.c.l.b16 %v650
  %v1227 = vunpack.c.l.b16 %v651
  %v1228 = vunpack.c.l.b16 %v652
  %v1229 = vunpack.c.l.b16 %v653
  %v1230 = vunpack.c.l.b16 %v654
  %v1231 = vunpack.c.l.b16 %v655
  %v1232 = vunpack.c.l.b16 %v656
  %v1233 = vunpack.c.l.b16 %v657
  %v1234 = vunpack.c.l.b16 %v658
  %v1235 = vunpack.c.l.b16 %v659
  %v1236 = vunpack.c.l.b16 %v660
  %v1237 = vunpack.c.l.b16 %v661
  %v1238 = vunpack.c.l.b16 %v662
  %v1239 = vunpack.c.l.b16 %v663
  %v1240 = vunpack.c.l.b16 %v664
  %v1241 = vunpack.c.l.b16 %v665
  %v1242 = vunpack.c.l.b16 %v666
  %v1243 = vunpack.c.l.b16 %v667
  %v1244 = vunpack.c.l.b16 %v668
  %v1245 = vunpack.c.l.b16 %v669
  %v1246 = vunpack.c.l.b16 %v670
  %v1247 = vunpack.c.l.b16 %v671
  %v1248 = vunpack.c.l.b16 %v672
  %v1249 = vunpack.c.l.b16 %v673
  %v1250 = vunpack.c.l.b16 %v674
  %v1251 = vunpack.c.l.b16 %v675
  %v1252 = vunpack.c.l.b16 %v676
  %v1253 = vunpack.c.l.b16 %v677
  %v1254 = vunpack.c.l.b16 %v678
  %v1255 = vunpack.c.l.b16 %v679
  %v1256 = vunpack.c.l.b16 %v680
  %v1257 = vunpack.c.l.b16 %v681
  %v1258 = vunpack.c.l.b16 %v682
  %v1259 = vunpack.c.l.b16 %v683
  %v1260 = vunpack.c.l.b16 %v684
  %v1261 = vunpack.c.l.b16 %v685
  %v1262 = vunpack.c.l.b16 %v686
  %v1263 = vunpack.c.l.b16 %v687
  %v1264 = vunpack.c.l.b16 %v688
  %v1265 = vunpack.c.l.b16 %v689
  %v1266 = vunpack.c.l.b16 %v690
  %v1267 = vunpack.c.l.b16 %v691
  %v1268 = vunpack.c.l.b16 %v692
  %v1269 = vunpack.c.l.b16 %v693
  %v1270 = vunpack.c.l.b16 %v694
  %v1271 = vunpack.c.l.b16 %v695
  %v1272 = vunpack.c.l.b16 %v696
  %v1273 = vunpack.c.l.b16 %v697
  %v1274 = vunpack.c.l.b16 %v698
  %v1275 = vunpack.c.l.b16 %v699
  %v1276 = vunpack.c.l.b16 %v700
  %v1277 = vunpack.c.l.b16 %v701
  %v1278 = vunpack.c.l.b16 %v702
  %v1279 = vunpack.c.l.b16 %v703
  %v1280 = vunpack.c.l.b16 %v704
  %v1281 = vunpack.c.l.b16 %v705
  %v1282 = vunpack.c.l.b16 %v706
  %v1283 = vunpack.c.l.b16 %v707
  %v1284 = vunpack.c.l.b16 %v708
  %v1285 = vunpack.c.l.b16 %v709
  %v1286 = vunpack.c.l.b16 %v710
  %v1287 = vunpack.c.l.b16 %v711
  %v1288 = vunpack.c.l.b16 %v712
  %v1289 = vunpack.c.l.b16 %v713
  %v1290 = vunpack.c.l.b16 %v714
  %v1291 = vunpack.c.l.b16 %v715
  %v1292 = vunpack.c.l.b16 %v716
  %v1293 = vunpack.c.l.b16 %v717
  %v1294 = vunpack.c.l.b16 %v718
  %v1295 = vunpack.c.l.b16 %v719
  %v1296 = vunpack.c.l.b16 %v720
  %v1297 = vunpack.c.l.b16 %v721
  %v1298 = vunpack.c.l.b16 %v722
  %v1299 = vunpack.c.l.b16 %v723
  %v1300 = vunpack.c.l.b16 %v724
  %v1301 = vunpack.c.l.b16 %v725
  %v1302 = vunpack.c.l.b16 %v726
  %v1303 = vunpack.c.l.b16 %v727
  %v1304 = vunpack.c.l.b16 %v728
  %v1305 = vunpack.c.l.b16 %v729
  %v1306 = vunpack.c.l.b16 %v730
  %v1307 = vunpack.c.l.b16 %v731
  %v1308 = vunpack.c.l.b16 %v732
  %v1309 = vunpack.c.l.b16 %v733
  %v1310 = vunpack.c.l.b16 %v734
  %v1311 = vunpack.c.l.b16 %v735
  %v1312 = vunpack.c.l.b16 %v736
  %v1313 = vunpack.c.l.b16 %v737
  %v1314 = vunpack.c.l.b16 %v738
  %v1315 = vunpack.c.l.b16 %v739
  %v1316 = vunpack.c.l.b16 %v740
  %v1317 = vunpack.c.l.b16 %v741
  %v1318 = vunpack.c.l.b16 %v742
  %v1319 = vunpack.c.l.b16 %v743
  %v1320 = vunpack.c.l.b16 %v744
  %v1321 = vunpack.c.l.b16 %v745
  %v1322 = vunpack.c.l.b16 %v746
  %v1323 = vunpack.c.l.b16 %v747
  %v1324 = vunpack.c.l.b16 %v748
  %v1325 = vunpack.c.l.b16 %v749
  %v1326 = vunpack.c.l.b16 %v750
  %v1327 = vunpack.c.l.b16 %v751
  %v1328 = vunpack.c.l.b16 %v752
  %v1329 = vunpack.c.l.b16 %v753
  %v1330 = vunpack.c.l.b16 %v754
  %v1331 = vunpack.c.l.b16 %v755
  %v1332 = vunpack.c.l.b16 %v756
  %v1333 = vunpack.c.l.b16 %v757
  %v1334 = vunpack.c.l.b16 %v758
  %v1335 = vunpack.c.l.b16 %v759
  %v1336 = vunpack.c.l.b16 %v760
  %v1337 = vunpack.c.l.b16 %v761
  %v1338 = vunpack.c.l.b16 %v762
  %v1339 = vunpack.c.l.b16 %v763
  %v1340 = vunpack.c.l.b16 %v764
  %v1341 = vunpack.c.l.b16 %v765
  %v1342 = vunpack.c.l.b16 %v766
  %v1343 = vunpack.c.l.b16 %v767
  %v1344 = vunpack.c.l.b16 %v768
  %v1345 = vunpack.c.l.b16 %v769
  %v1346 = vunpack.c.l.b16 %v770
  %v1347 = vunpack.c.l.b16 %v771
  %v1348 = vunpack.c.l.b16 %v772
  %v1349 = vunpack.c.l.b16 %v773
  %v1350 = vunpack.c.l.b16 %v774
  %v1351 = vunpack.c.l.b16 %v775
  %v1352 = vunpack.c.l.b16 %v776
  %v1353 = vunpack.c.l.b16 %v777
  %v1354 = vunpack.c.l.b16 %v778
  %v1355 = vunpack.c.l.b16 %v779
  %v1356 = vunpack.c.l.b16 %v780
  %v1357 = vunpack.c.l.b16 %v781
  %v1358 = vunpack.c.l.b16 %v782
  %v1359 = vunpack.c.l.b16 %v783
  %v1360 = vunpack.c.l.b16 %v784
  %v1361 = vunpack.c.l.b16 %v785
  %v1362 = vunpack.c.l.b16 %v786
  %v1363 = vunpack.c.l.b16 %v787
  %v1364 = vunpack.c.l.b16 %v788
  %v1365 = vunpack.c.l.b16 %v789
  %v1366 = vunpack.c.l.b16 %v790
  %v1367 = vunpack.c.l.b16 %v791
  %v1368 = vunpack.c.l.b16 %v792
  %v1369 = vunpack.c.l.b16 %v793
  %v1370 = vunpack.c.l.b16 %v794
  %v1371 = vunpack.c.l.b16 %v795
  %v1372 = vunpack.c.l.b16 %v796
  %v1373 = vunpack.c.l.b16 %v797
  %v1374 = vunpack.c.l.b16 %v798
  %v1375 = vunpack.c.l.b16 %v799
  %v1376 = vunpack.c.l.b16 %v800
  %v1377 = vunpack.c.l.b16 %v801
  %v1378 = vunpack.c.l.b16 %v802
  %v1379 = vunpack.c.l.b16 %v803
  %v1380 = vunpack.c.l.b16 %v804
  %v1381 = vunpack.c.l.b16 %v805
  %v1382 = vunpack.c.l.b16 %v806
  %v1383 = vunpack.c.l.b16 %v807
  %v1384 = vunpack.c.l.b16 %v808
  %v1385 = vunpack.c.l.b16 %v809
  %v1386 = vunpack.c.l.b16 %v810
  %v1387 = vunpack.c.l.b16 %v811
  %v1388 = vunpack.c.l.b16 %v812
  %v1389 = vunpack.c.l.b16 %v813
  %v1390 = vunpack.c.l.b16 %v814
  %v1391 = vunpack.c.l.b16 %v815
  %v1392 = vunpack.c.l.b16 %v816
  %v1393 = vunpack.c.l.b16 %v817
  %v1394 = vunpack.c.l.b16 %v818
  %v1395 = vunpack.c.l.b16 %v819
  %v1396 = vunpack.c.l.b16 %v820
  %v1397 = vunpack.c.l.b16 %v821
  %v1398 = vunpack.c.l.b16 %v822
  %v1399 = vunpack.c.l.b16 %v823
  %v1400 = vunpack.c.l.b16 %v824
  %v1401 = vunpack.c.l.b16 %v825
  %v1402 = vunpack.c.l.b16 %v826
  %v1403 = vunpack.c.l.b16 %v827
  %v1404 = vunpack.c.l.b16 %v828
  %v1405 = vunpack.c.l.b16 %v829
  %v1406 = vunpack.c.l.b16 %v830
  %v1407 = vunpack.c.l.b16 %v831
  %v1408 = vunpack.c.l.b16 %v832
  %v1409 = vunpack.c.l.b16 %v833
  %v1410 = vunpack.c.l.b16 %v834
  %v1411 = vunpack.c.l.b16 %v835
  %v1412 = vunpack.c.l.b16 %v836
  %v1413 = vunpack.c.l.b16 %v837
  %v1414 = vunpack.c.l.b16 %v838
  %v1415 = vunpack.c.l.b16 %v839
  %v1416 = vunpack.c.l.b16 %v840
  %v1417 = vunpack.c.l.b16 %v841
  %v1418 = vunpack.c.l.b16 %v842
  %v1419 = vunpack.c.l.b16 %v843
  %v1420 = vunpack.c.l.b16 %v844
  %v1421 = vunpack.c.l.b16 %v845
  %v1422 = vunpack.c.l.b16 %v846
  %v1423 = vunpack.c.l.b16 %v847
  %v1424 = vunpack.c.l.b16 %v848
  %v1425 = vunpack.c.l.b16 %v849
  %v1426 = vunpack.c.l.b16 %v850
  %v1427 = vunpack.c.l.b16 %v851
  %v1428 = vunpack.c.l.b16 %v852
  %v1429 = vunpack.c.l.b16 %v853
  %v1430 = vunpack.c.l.b16 %v854
  %v1431 = vunpack.c.l.b16 %v855
  %v1432 = vunpack.c.l.b16 %v856
  %v1433 = vunpack.c.l.b16 %v857
  %v1434 = vunpack.c.l.b16 %v858
  %v1435 = vunpack.c.l.b16 %v859
  %v1436 = vunpack.c.l.b16 %v860
  %v1437 = vunpack.c.l.b16 %v861
  %v1438 = vunpack.c.l.b16 %v862
  %v1439 = vunpack.c.l.b16 %v863
  %v1440 = vunpack.c.l.b16 %v864
  %v1441 = vunpack.c.l.b16 %v865
  %v1442 = vunpack.c.l.b16 %v866
  %v1443 = vpack.c.b16 %v1156, %v1155
  %v1444 = vpack.c.b16 %v1158, %v1157
  %v1445 = vpack.c.b16 %v1160, %v1159
  %v1446 = vpack.c.b16 %v1162, %v1161
  %v1447 = vpack.c.b16 %v1164, %v1163
  %v1448 = vpack.c.b16 %v1166, %v1165
  %v1449 = vpack.c.b16 %v1168, %v1167
  %v1450 = vpack.c.b16 %v1170, %v1169
  %v1451 = vpack.c.b16 %v1172, %v1171
  %v1452 = vpack.c.b16 %v1174, %v1173
  %v1453 = vpack.c.b16 %v1176, %v1175
  %v1454 = vpack.c.b16 %v1178, %v1177
  %v1455 = vpack.c.b16 %v1180, %v1179
  %v1456 = vpack.c.b16 %v1182, %v1181
  %v1457 = vpack.c.b16 %v1184, %v1183
  %v1458 = vpack.c.b16 %v1186, %v1185
  %v1459 = vpack.c.b16 %v1188, %v1187
  %v1460 = vpack.c.b16 %v1190, %v1189
  %v1461 = vpack.c.b16 %v1192, %v1191
  %v1462 = vpack.c.b16 %v1194, %v1193
  %v1463 = vpack.c.b16 %v1196, %v1195
  %v1464 = vpack.c.b16 %v1198, %v1197
  %v1465 = vpack.c.b16 %v1200, %v1199
  %v1466 = vpack.c.b16 %v1202, %v1201
  %v1467 = vpack.c.b16 %v1204, %v1203
  %v1468 = vpack.c.b16 %v1206, %v1205
  %v1469 = vpack.c.b16 %v1208, %v1207
  %v1470 = vpack.c.b16 %v1210, %v1209
  %v1471 = vpack.c.b16 %v1212, %v1211
  %v1472 = vpack.c.b16 %v1214, %v1213
  %v1473 = vpack.c.b16 %v1216, %v1215
  %v1474 = vpack.c.b16 %v1218, %v1217
  %v1475 = vpack.c.b16 %v1220, %v1219
  %v1476 = vpack.c.b16 %v1222, %v1221
  %v1477 = vpack.c.b16 %v1224, %v1223
  %v1478 = vpack.c.b16 %v1226, %v1225
  %v1479 = vpack.c.b16 %v1228, %v1227
  %v1480 = vpack.c.b16 %v1230, %v1229
  %v1481 = vpack.c.b16 %v1232, %v1231
  %v1482 = vpack.c.b16 %v1234, %v1233
  %v1483 = vpack.c.b16 %v1236, %v1235
  %v1484 = vpack.c.b16 %v1238, %v1237
  %v1485 = vpack.c.b16 %v1240, %v1239
  %v1486 = vpack.c.b16 %v1242, %v1241
  %v1487 = vpack.c.b16 %v1244, %v1243
  %v1488 = vpack.c.b16 %v1246, %v1245
  %v1489 = vpack.c.b16 %v1248, %v1247
  %v1490 = vpack.c.b16 %v1250, %v1249
  %v1491 = vpack.c.b16 %v1252, %v1251
  %v1492 = vpack.c.b16 %v1254, %v1253
  %v1493 = vpack.c.b16 %v1256, %v1255
  %v1494 = vpack.c.b16 %v1258, %v1257
  %v1495 = vpack.c.b16 %v1260, %v1259
  %v1496 = vpack.c.b16 %v1262, %v1261
  %v1497 = vpack.c.b16 %v1264, %v1263
  %v1498 = vpack.c.b16 %v1266, %v1265
  %v1499 = vpack.c.b16 %v1268, %v1267
  %v1500 = vpack.c.b16 %v1270, %v1269
  %v1501 = vpack.c.b16 %v1272, %v1271
  %v1502 = vpack.c.b16 %v1274, %v1273
  %v1503 = vpack.c.b16 %v1276, %v1275
  %v1504 = vpack.c.b16 %v1278, %v1277
  %v1505 = vpack.c.b16 %v1280, %v1279
  %v1506 = vpack.c.b16 %v1282, %v1281
  %v1507 = vpack.c.b16 %v1284, %v1283
  %v1508 = vpack.c.b16 %v1286, %v1285
  %v1509 = vpack.c.b16 %v1288, %v1287
  %v1510 = vpack.c.b16 %v1290, %v1289
  %v1511 = vpack.c.b16 %v1292, %v1291
  %v1512 = vpack.c.b16 %v1294, %v1293
  %v1513 = vpack.c.b16 %v1296, %v1295
  %v1514 = vpack.c.b16 %v1298, %v1297
  %v1515 = vpack.c.b16 %v1300, %v1299
  %v1516 = vpack.c.b16 %v1302, %v1301
  %v1517 = vpack.c.b16 %v1304, %v1303
  %v1518 = vpack.c.b16 %v1306, %v1305
  %v1519 = vpack.c.b16 %v1308, %v1307
  %v1520 = vpack.c.b16 %v1310, %v1309
  %v1521 = vpack.c.b16 %v1312, %v1311
  %v1522 = vpack.c.b16 %v1314, %v1313
  %v1523 = vpack.c.b16 %v1316, %v1315
  %v1524 = vpack.c.b16 %v1318, %v1317
  %v1525 = vpack.c.b16 %v1320, %v1319
  %v1526 = vpack.c.b16 %v1322, %v1321
  %v1527 = vpack.c.b16 %v1324, %v1323
  %v1528 = vpack.c.b16 %v1326, %v1325
  %v1529 = vpack.c.b16 %v1328, %v1327
  %v1530 = vpack.c.b16 %v1330, %v1329
  %v1531 = vpack.c.b16 %v1332, %v1331
  %v1532 = vpack.c.b16 %v1334, %v1333
  %v1533 = vpack.c.b16 %v1336, %v1335
  %v1534 = vpack.c.b16 %v1338, %v1337
  %v1535 = vpack.c.b16 %v1340, %v1339
  %v1536 = vpack.c.b16 %v1342, %v1341
  %v1537 = vpack.c.b16 %v1344, %v1343
  %v1538 = vpack.c.b16 %v1346, %v1345
  %v1539 = vpack.c.b16 %v1348, %v1347
  %v1540 = vpack.c.b16 %v1350, %v1349
  %v1541 = vpack.c.b16 %v1352, %v1351
  %v1542 = vpack.c.b16 %v1354, %v1353
  %v1543 = vpack.c.b16 %v1356, %v1355
  %v1544 = vpack.c.b16 %v1358, %v1357
  %v1545 = vpack.c.b16 %v1360, %v1359
  %v1546 = vpack.c.b16 %v1362, %v1361
  %v1547 = vpack.c.b16 %v1364, %v1363
  %v1548 = vpack.c.b16 %v1366, %v1365
  %v1549 = vpack.c.b16 %v1368, %v1367
  %v1550 = vpack.c.b16 %v1370, %v1369
  %v1551 = vpack.c.b16 %v1372, %v1371
  %v1552 = vpack.c.b16 %v1374, %v1373
  %v1553 = vpack.c.b16 %v1376, %v1375
  %v1554 = vpack.c.b16 %v1378, %v1377
  %v1555 = vpack.c.b16 %v1380, %v1379
  %v1556 = vpack.c.b16 %v1382, %v1381
  %v1557 = vpack.c.b16 %v1384, %v1383
  %v1558 = vpack.c.b16 %v1386, %v1385
  %v1559 = vpack.c.b16 %v1388, %v1387
  %v1560 = vpack.c.b16 %v1390, %v1389
  %v1561 = vpack.c.b16 %v1392, %v1391
  %v1562 = vpack.c.b16 %v1394, %v1393
  %v1563 = vpack.c.b16 %v1396, %v1395
  %v1564 = vpack.c.b16 %v1398, %v1397
  %v1565 = vpack.c.b16 %v1400, %v1399
  %v1566 = vpack.c.b16 %v1402, %v1401
  %v1567 = vpack.c.b16 %v1404, %v1403
  %v1568 = vpack.c.b16 %v1406, %v1405
  %v1569 = vpack.c.b16 %v1408, %v1407
  %v1570 = vpack.c.b16 %v1410, %v1409
  %v1571 = vpack.c.b16 %v1412, %v1411
  %v1572 = vpack.c.b16 %v1414, %v1413
  %v1573 = vpack.c.b16 %v1416, %v1415
  %v1574 = vpack.c.b16 %v1418, %v1417
  %v1575 = vpack.c.b16 %v1420, %v1419
  %v1576 = vpack.c.b16 %v1422, %v1421
  %v1577 = vpack.c.b16 %v1424, %v1423
  %v1578 = vpack.c.b16 %v1426, %v1425
  %v1579 = vpack.c.b16 %v1428, %v1427
  %v1580 = vpack.c.b16 %v1430, %v1429
  %v1581 = vpack.c.b16 %v1432, %v1431
  %v1582 = vpack.c.b16 %v1434, %v1433
  %v1583 = vpack.c.b16 %v1436, %v1435
  %v1584 = vpack.c.b16 %v1438, %v1437
  %v1585 = vpack.c.b16 %v1440, %v1439
  %v1586 = vpack.c.b16 %v1442, %v1441
  %1731 = vmatprep.subr.bf16.mxu0 0
  %1732 = vmatpush1.bf16.msra.mxu0 %v1443
  %1733 = vmatprep.subr.bf16.mxu0 0
  %1734 = vmatpush1.bf16.msra.mxu0 %v1444
  %1735 = vmatprep.subr.bf16.mxu0 0
  %1736 = vmatpush1.bf16.msra.mxu0 %v1445
  %1737 = vmatprep.subr.bf16.mxu0 0
  %1738 = vmatpush1.bf16.msra.mxu0 %v1446
  %1739 = vmatprep.subr.bf16.mxu0 0
  %1740 = vmatpush1.bf16.msra.mxu0 %v1447
  %1741 = vmatprep.subr.bf16.mxu0 0
  %1742 = vmatpush1.bf16.msra.mxu0 %v1448
  %1743 = vmatprep.subr.bf16.mxu0 0
  %1744 = vmatpush1.bf16.msra.mxu0 %v1449
  %1745 = vmatprep.subr.bf16.mxu0 0
  %1746 = vmatpush1.bf16.msra.mxu0 %v1450
  %1747 = vmatprep.subr.bf16.mxu0 0
  %1748 = vmatpush1.bf16.msra.mxu0 %v1451
  %1749 = vmatprep.subr.bf16.mxu0 0
  %1750 = vmatpush1.bf16.msra.mxu0 %v1452
  %1751 = vmatprep.subr.bf16.mxu0 0
  %1752 = vmatpush1.bf16.msra.mxu0 %v1453
  %1753 = vmatprep.subr.bf16.mxu0 0
  %1754 = vmatpush1.bf16.msra.mxu0 %v1454
  %1755 = vmatprep.subr.bf16.mxu0 0
  %1756 = vmatpush1.bf16.msra.mxu0 %v1455
  %1757 = vmatprep.subr.bf16.mxu0 0
  %1758 = vmatpush1.bf16.msra.mxu0 %v1456
  %1759 = vmatprep.subr.bf16.mxu0 0
  %1760 = vmatpush1.bf16.msra.mxu0 %v1457
  %1761 = vmatprep.subr.bf16.mxu0 0
  %1762 = vmatpush1.bf16.msra.mxu0 %v1458
  %1763 = vmatprep.mubr.bf16.mxu0 %v544
  %1764 = vmatmul.mubr.bf16.gmra.mrb[0].mxu0 %v543
  %v1765 = vpop.f32.mrb[0].mxu0
  %v1766 = vadd.f32 0.0, %v1765
  %v1767 = vpop.f32.mrb[0].mxu0
  %v1768 = vpop.f32.mrb[0].mxu0
  %v1769 = vadd.f32 0.0, %v1768
  %v1770 = vpop.f32.mrb[0].mxu0
  %1771 = vmatprep.mubr.bf16.mxu0 %v562
  %1772 = vmatmul.mubr.bf16.gmra.mrb[0].mxu0 %v561
  %v1773 = vpop.f32.mrb[0].mxu0
  %v1774 = vadd.f32 0.0, %v1773
  %v1775 = vpop.f32.mrb[0].mxu0
  %v1776 = vpop.f32.mrb[0].mxu0
  %v1777 = vadd.f32 0.0, %v1776
  %v1778 = vpop.f32.mrb[0].mxu0
  %1779 = vdwg.mxu0
  %1780 = vmatprep.subr.bf16.mxu0 0
  %1781 = vmatpush1.bf16.msra.mxu0 %v1459
  %1782 = vmatprep.subr.bf16.mxu0 0
  %1783 = vmatpush1.bf16.msra.mxu0 %v1460
  %1784 = vmatprep.subr.bf16.mxu0 0
  %1785 = vmatpush1.bf16.msra.mxu0 %v1461
  %1786 = vmatprep.subr.bf16.mxu0 0
  %1787 = vmatpush1.bf16.msra.mxu0 %v1462
  %1788 = vmatprep.subr.bf16.mxu0 0
  %1789 = vmatpush1.bf16.msra.mxu0 %v1463
  %1790 = vmatprep.subr.bf16.mxu0 0
  %1791 = vmatpush1.bf16.msra.mxu0 %v1464
  %1792 = vmatprep.subr.bf16.mxu0 0
  %1793 = vmatpush1.bf16.msra.mxu0 %v1465
  %1794 = vmatprep.subr.bf16.mxu0 0
  %1795 = vmatpush1.bf16.msra.mxu0 %v1466
  %1796 = vmatprep.subr.bf16.mxu0 0
  %1797 = vmatpush1.bf16.msra.mxu0 %v1467
  %1798 = vmatprep.subr.bf16.mxu0 0
  %1799 = vmatpush1.bf16.msra.mxu0 %v1468
  %1800 = vmatprep.subr.bf16.mxu0 0
  %1801 = vmatpush1.bf16.msra.mxu0 %v1469
  %1802 = vmatprep.subr.bf16.mxu0 0
  %1803 = vmatpush1.bf16.msra.mxu0 %v1470
  %1804 = vmatprep.subr.bf16.mxu0 0
  %1805 = vmatpush1.bf16.msra.mxu0 %v1471
  %1806 = vmatprep.subr.bf16.mxu0 0
  %1807 = vmatpush1.bf16.msra.mxu0 %v1472
  %1808 = vmatprep.subr.bf16.mxu0 0
  %1809 = vmatpush1.bf16.msra.mxu0 %v1473
  %1810 = vmatprep.subr.bf16.mxu0 0
  %1811 = vmatpush1.bf16.msra.mxu0 %v1474
  %1812 = vmatprep.mubr.bf16.mxu0 %v546
  %1813 = vmatmul.mubr.bf16.gmra.mrb[0].mxu0 %v545
  %v1814 = vpop.f32.mrb[0].mxu0
  %v1815 = vadd.f32 %v1766, %v1814
  %v1816 = vpop.f32.mrb[0].mxu0
  %v1817 = vpop.f32.mrb[0].mxu0
  %v1818 = vadd.f32 %v1769, %v1817
  %v1819 = vpop.f32.mrb[0].mxu0
  %1820 = vmatprep.mubr.bf16.mxu0 %v564
  %1821 = vmatmul.mubr.bf16.gmra.mrb[0].mxu0 %v563
  %v1822 = vpop.f32.mrb[0].mxu0
  %v1823 = vadd.f32 %v1774, %v1822
  %v1824 = vpop.f32.mrb[0].mxu0
  %v1825 = vpop.f32.mrb[0].mxu0
  %v1826 = vadd.f32 %v1777, %v1825
  %v1827 = vpop.f32.mrb[0].mxu0
  %1828 = vdwg.mxu0
  %1829 = vmatprep.subr.bf16.mxu0 0
  %1830 = vmatpush1.bf16.msra.mxu0 %v1475
  %1831 = vmatprep.subr.bf16.mxu0 0
  %1832 = vmatpush1.bf16.msra.mxu0 %v1476
  %1833 = vmatprep.subr.bf16.mxu0 0
  %1834 = vmatpush1.bf16.msra.mxu0 %v1477
  %1835 = vmatprep.subr.bf16.mxu0 0
  %1836 = vmatpush1.bf16.msra.mxu0 %v1478
  %1837 = vmatprep.subr.bf16.mxu0 0
  %1838 = vmatpush1.bf16.msra.mxu0 %v1479
  %1839 = vmatprep.subr.bf16.mxu0 0
  %1840 = vmatpush1.bf16.msra.mxu0 %v1480
  %1841 = vmatprep.subr.bf16.mxu0 0
  %1842 = vmatpush1.bf16.msra.mxu0 %v1481
  %1843 = vmatprep.subr.bf16.mxu0 0
  %1844 = vmatpush1.bf16.msra.mxu0 %v1482
  %1845 = vmatprep.subr.bf16.mxu0 0
  %1846 = vmatpush1.bf16.msra.mxu0 %v1483
  %1847 = vmatprep.subr.bf16.mxu0 0
  %1848 = vmatpush1.bf16.msra.mxu0 %v1484
  %1849 = vmatprep.subr.bf16.mxu0 0
  %1850 = vmatpush1.bf16.msra.mxu0 %v1485
  %1851 = vmatprep.subr.bf16.mxu0 0
  %1852 = vmatpush1.bf16.msra.mxu0 %v1486
  %1853 = vmatprep.subr.bf16.mxu0 0
  %1854 = vmatpush1.bf16.msra.mxu0 %v1487
  %1855 = vmatprep.subr.bf16.mxu0 0
  %1856 = vmatpush1.bf16.msra.mxu0 %v1488
  %1857 = vmatprep.subr.bf16.mxu0 0
  %1858 = vmatpush1.bf16.msra.mxu0 %v1489
  %1859 = vmatprep.subr.bf16.mxu0 0
  %1860 = vmatpush1.bf16.msra.mxu0 %v1490
  %1861 = vmatprep.mubr.bf16.mxu0 %v548
  %1862 = vmatmul.mubr.bf16.gmra.mrb[0].mxu0 %v547
  %v1863 = vpop.f32.mrb[0].mxu0
  %v1864 = vadd.f32 %v1815, %v1863
  %v1865 = vpop.f32.mrb[0].mxu0
  %v1866 = vpop.f32.mrb[0].mxu0
  %v1867 = vadd.f32 %v1818, %v1866
  %v1868 = vpop.f32.mrb[0].mxu0
  %1869 = vmatprep.mubr.bf16.mxu0 %v566
  %1870 = vmatmul.mubr.bf16.gmra.mrb[0].mxu0 %v565
  %v1871 = vpop.f32.mrb[0].mxu0
  %v1872 = vadd.f32 %v1823, %v1871
  %v1873 = vpop.f32.mrb[0].mxu0
  %v1874 = vpop.f32.mrb[0].mxu0
  %v1875 = vadd.f32 %v1826, %v1874
  %v1876 = vpop.f32.mrb[0].mxu0
  %1877 = vdwg.mxu0
  %1878 = vmatprep.subr.bf16.mxu0 0
  %1879 = vmatpush1.bf16.msra.mxu0 %v1491
  %1880 = vmatprep.subr.bf16.mxu0 0
  %1881 = vmatpush1.bf16.msra.mxu0 %v1492
  %1882 = vmatprep.subr.bf16.mxu0 0
  %1883 = vmatpush1.bf16.msra.mxu0 %v1493
  %1884 = vmatprep.subr.bf16.mxu0 0
  %1885 = vmatpush1.bf16.msra.mxu0 %v1494
  %1886 = vmatprep.subr.bf16.mxu0 0
  %1887 = vmatpush1.bf16.msra.mxu0 %v1495
  %1888 = vmatprep.subr.bf16.mxu0 0
  %1889 = vmatpush1.bf16.msra.mxu0 %v1496
  %1890 = vmatprep.subr.bf16.mxu0 0
  %1891 = vmatpush1.bf16.msra.mxu0 %v1497
  %1892 = vmatprep.subr.bf16.mxu0 0
  %1893 = vmatpush1.bf16.msra.mxu0 %v1498
  %1894 = vmatprep.subr.bf16.mxu0 0
  %1895 = vmatpush1.bf16.msra.mxu0 %v1499
  %1896 = vmatprep.subr.bf16.mxu0 0
  %1897 = vmatpush1.bf16.msra.mxu0 %v1500
  %1898 = vmatprep.subr.bf16.mxu0 0
  %1899 = vmatpush1.bf16.msra.mxu0 %v1501
  %1900 = vmatprep.subr.bf16.mxu0 0
  %1901 = vmatpush1.bf16.msra.mxu0 %v1502
  %1902 = vmatprep.subr.bf16.mxu0 0
  %1903 = vmatpush1.bf16.msra.mxu0 %v1503
  %1904 = vmatprep.subr.bf16.mxu0 0
  %1905 = vmatpush1.bf16.msra.mxu0 %v1504
  %1906 = vmatprep.subr.bf16.mxu0 0
  %1907 = vmatpush1.bf16.msra.mxu0 %v1505
  %1908 = vmatprep.subr.bf16.mxu0 0
  %1909 = vmatpush1.bf16.msra.mxu0 %v1506
  %1910 = vmatprep.mubr.bf16.mxu0 %v550
  %1911 = vmatmul.mubr.bf16.gmra.mrb[0].mxu0 %v549
  %v1912 = vpop.f32.mrb[0].mxu0
  %v1913 = vadd.f32 %v1864, %v1912
  %v1914 = vpop.f32.mrb[0].mxu0
  %v1915 = vpop.f32.mrb[0].mxu0
  %v1916 = vadd.f32 %v1867, %v1915
  %v1917 = vpop.f32.mrb[0].mxu0
  %1918 = vmatprep.mubr.bf16.mxu0 %v568
  %1919 = vmatmul.mubr.bf16.gmra.mrb[0].mxu0 %v567
  %v1920 = vpop.f32.mrb[0].mxu0
  %v1921 = vadd.f32 %v1872, %v1920
  %v1922 = vpop.f32.mrb[0].mxu0
  %v1923 = vpop.f32.mrb[0].mxu0
  %v1924 = vadd.f32 %v1875, %v1923
  %v1925 = vpop.f32.mrb[0].mxu0
  %1926 = vdwg.mxu0
  %1927 = vmatprep.subr.bf16.mxu0 0
  %1928 = vmatpush1.bf16.msra.mxu0 %v1507
  %1929 = vmatprep.subr.bf16.mxu0 0
  %1930 = vmatpush1.bf16.msra.mxu0 %v1508
  %1931 = vmatprep.subr.bf16.mxu0 0
  %1932 = vmatpush1.bf16.msra.mxu0 %v1509
  %1933 = vmatprep.subr.bf16.mxu0 0
  %1934 = vmatpush1.bf16.msra.mxu0 %v1510
  %1935 = vmatprep.subr.bf16.mxu0 0
  %1936 = vmatpush1.bf16.msra.mxu0 %v1511
  %1937 = vmatprep.subr.bf16.mxu0 0
  %1938 = vmatpush1.bf16.msra.mxu0 %v1512
  %1939 = vmatprep.subr.bf16.mxu0 0
  %1940 = vmatpush1.bf16.msra.mxu0 %v1513
  %1941 = vmatprep.subr.bf16.mxu0 0
  %1942 = vmatpush1.bf16.msra.mxu0 %v1514
  %1943 = vmatprep.subr.bf16.mxu0 0
  %1944 = vmatpush1.bf16.msra.mxu0 %v1515
  %1945 = vmatprep.subr.bf16.mxu0 0
  %1946 = vmatpush1.bf16.msra.mxu0 %v1516
  %1947 = vmatprep.subr.bf16.mxu0 0
  %1948 = vmatpush1.bf16.msra.mxu0 %v1517
  %1949 = vmatprep.subr.bf16.mxu0 0
  %1950 = vmatpush1.bf16.msra.mxu0 %v1518
  %1951 = vmatprep.subr.bf16.mxu0 0
  %1952 = vmatpush1.bf16.msra.mxu0 %v1519
  %1953 = vmatprep.subr.bf16.mxu0 0
  %1954 = vmatpush1.bf16.msra.mxu0 %v1520
  %1955 = vmatprep.subr.bf16.mxu0 0
  %1956 = vmatpush1.bf16.msra.mxu0 %v1521
  %1957 = vmatprep.subr.bf16.mxu0 0
  %1958 = vmatpush1.bf16.msra.mxu0 %v1522
  %1959 = vmatprep.mubr.bf16.mxu0 %v552
  %1960 = vmatmul.mubr.bf16.gmra.mrb[0].mxu0 %v551
  %v1961 = vpop.f32.mrb[0].mxu0
  %v1962 = vadd.f32 %v1913, %v1961
  %v1963 = vpop.f32.mrb[0].mxu0
  %v1964 = vpop.f32.mrb[0].mxu0
  %v1965 = vadd.f32 %v1916, %v1964
  %v1966 = vpop.f32.mrb[0].mxu0
  %1967 = vmatprep.mubr.bf16.mxu0 %v570
  %1968 = vmatmul.mubr.bf16.gmra.mrb[0].mxu0 %v569
  %v1969 = vpop.f32.mrb[0].mxu0
  %v1970 = vadd.f32 %v1921, %v1969
  %v1971 = vpop.f32.mrb[0].mxu0
  %v1972 = vpop.f32.mrb[0].mxu0
  %v1973 = vadd.f32 %v1924, %v1972
  %v1974 = vpop.f32.mrb[0].mxu0
  %1975 = vdwg.mxu0
  %1976 = vmatprep.subr.bf16.mxu0 0
  %1977 = vmatpush1.bf16.msra.mxu0 %v1523
  %1978 = vmatprep.subr.bf16.mxu0 0
  %1979 = vmatpush1.bf16.msra.mxu0 %v1524
  %1980 = vmatprep.subr.bf16.mxu0 0
  %1981 = vmatpush1.bf16.msra.mxu0 %v1525
  %1982 = vmatprep.subr.bf16.mxu0 0
  %1983 = vmatpush1.bf16.msra.mxu0 %v1526
  %1984 = vmatprep.subr.bf16.mxu0 0
  %1985 = vmatpush1.bf16.msra.mxu0 %v1527
  %1986 = vmatprep.subr.bf16.mxu0 0
  %1987 = vmatpush1.bf16.msra.mxu0 %v1528
  %1988 = vmatprep.subr.bf16.mxu0 0
  %1989 = vmatpush1.bf16.msra.mxu0 %v1529
  %1990 = vmatprep.subr.bf16.mxu0 0
  %1991 = vmatpush1.bf16.msra.mxu0 %v1530
  %1992 = vmatprep.subr.bf16.mxu0 0
  %1993 = vmatpush1.bf16.msra.mxu0 %v1531
  %1994 = vmatprep.subr.bf16.mxu0 0
  %1995 = vmatpush1.bf16.msra.mxu0 %v1532
  %1996 = vmatprep.subr.bf16.mxu0 0
  %1997 = vmatpush1.bf16.msra.mxu0 %v1533
  %1998 = vmatprep.subr.bf16.mxu0 0
  %1999 = vmatpush1.bf16.msra.mxu0 %v1534
  %2000 = vmatprep.subr.bf16.mxu0 0
  %2001 = vmatpush1.bf16.msra.mxu0 %v1535
  %2002 = vmatprep.subr.bf16.mxu0 0
  %2003 = vmatpush1.bf16.msra.mxu0 %v1536
  %2004 = vmatprep.subr.bf16.mxu0 0
  %2005 = vmatpush1.bf16.msra.mxu0 %v1537
  %2006 = vmatprep.subr.bf16.mxu0 0
  %2007 = vmatpush1.bf16.msra.mxu0 %v1538
  %2008 = vmatprep.mubr.bf16.mxu0 %v554
  %2009 = vmatmul.mubr.bf16.gmra.mrb[0].mxu0 %v553
  %v2010 = vpop.f32.mrb[0].mxu0
  %v2011 = vadd.f32 %v1962, %v2010
  %v2012 = vpop.f32.mrb[0].mxu0
  %v2013 = vpop.f32.mrb[0].mxu0
  %v2014 = vadd.f32 %v1965, %v2013
  %v2015 = vpop.f32.mrb[0].mxu0
  %2016 = vmatprep.mubr.bf16.mxu0 %v572
  %2017 = vmatmul.mubr.bf16.gmra.mrb[0].mxu0 %v571
  %v2018 = vpop.f32.mrb[0].mxu0
  %v2019 = vadd.f32 %v1970, %v2018
  %v2020 = vpop.f32.mrb[0].mxu0
  %v2021 = vpop.f32.mrb[0].mxu0
  %v2022 = vadd.f32 %v1973, %v2021
  %v2023 = vpop.f32.mrb[0].mxu0
  %2024 = vdwg.mxu0
  %2025 = vmatprep.subr.bf16.mxu0 0
  %2026 = vmatpush1.bf16.msra.mxu0 %v1539
  %2027 = vmatprep.subr.bf16.mxu0 0
  %2028 = vmatpush1.bf16.msra.mxu0 %v1540
  %2029 = vmatprep.subr.bf16.mxu0 0
  %2030 = vmatpush1.bf16.msra.mxu0 %v1541
  %2031 = vmatprep.subr.bf16.mxu0 0
  %2032 = vmatpush1.bf16.msra.mxu0 %v1542
  %2033 = vmatprep.subr.bf16.mxu0 0
  %2034 = vmatpush1.bf16.msra.mxu0 %v1543
  %2035 = vmatprep.subr.bf16.mxu0 0
  %2036 = vmatpush1.bf16.msra.mxu0 %v1544
  %2037 = vmatprep.subr.bf16.mxu0 0
  %2038 = vmatpush1.bf16.msra.mxu0 %v1545
  %2039 = vmatprep.subr.bf16.mxu0 0
  %2040 = vmatpush1.bf16.msra.mxu0 %v1546
  %2041 = vmatprep.subr.bf16.mxu0 0
  %2042 = vmatpush1.bf16.msra.mxu0 %v1547
  %2043 = vmatprep.subr.bf16.mxu0 0
  %2044 = vmatpush1.bf16.msra.mxu0 %v1548
  %2045 = vmatprep.subr.bf16.mxu0 0
  %2046 = vmatpush1.bf16.msra.mxu0 %v1549
  %2047 = vmatprep.subr.bf16.mxu0 0
  %2048 = vmatpush1.bf16.msra.mxu0 %v1550
  %2049 = vmatprep.subr.bf16.mxu0 0
  %2050 = vmatpush1.bf16.msra.mxu0 %v1551
  %2051 = vmatprep.subr.bf16.mxu0 0
  %2052 = vmatpush1.bf16.msra.mxu0 %v1552
  %2053 = vmatprep.subr.bf16.mxu0 0
  %2054 = vmatpush1.bf16.msra.mxu0 %v1553
  %2055 = vmatprep.subr.bf16.mxu0 0
  %2056 = vmatpush1.bf16.msra.mxu0 %v1554
  %2057 = vmatprep.mubr.bf16.mxu0 %v556
  %2058 = vmatmul.mubr.bf16.gmra.mrb[0].mxu0 %v555
  %v2059 = vpop.f32.mrb[0].mxu0
  %v2060 = vadd.f32 %v2011, %v2059
  %v2061 = vpop.f32.mrb[0].mxu0
  %v2062 = vpop.f32.mrb[0].mxu0
  %v2063 = vadd.f32 %v2014, %v2062
  %v2064 = vpop.f32.mrb[0].mxu0
  %2065 = vmatprep.mubr.bf16.mxu0 %v574
  %2066 = vmatmul.mubr.bf16.gmra.mrb[0].mxu0 %v573
  %v2067 = vpop.f32.mrb[0].mxu0
  %v2068 = vadd.f32 %v2019, %v2067
  %v2069 = vpop.f32.mrb[0].mxu0
  %v2070 = vpop.f32.mrb[0].mxu0
  %v2071 = vadd.f32 %v2022, %v2070
  %v2072 = vpop.f32.mrb[0].mxu0
  %2073 = vdwg.mxu0
  %2074 = vmatprep.subr.bf16.mxu0 0
  %2075 = vmatpush1.bf16.msra.mxu0 %v1555
  %2076 = vmatprep.subr.bf16.mxu0 0
  %2077 = vmatpush1.bf16.msra.mxu0 %v1556
  %2078 = vmatprep.subr.bf16.mxu0 0
  %2079 = vmatpush1.bf16.msra.mxu0 %v1557
  %2080 = vmatprep.subr.bf16.mxu0 0
  %2081 = vmatpush1.bf16.msra.mxu0 %v1558
  %2082 = vmatprep.subr.bf16.mxu0 0
  %2083 = vmatpush1.bf16.msra.mxu0 %v1559
  %2084 = vmatprep.subr.bf16.mxu0 0
  %2085 = vmatpush1.bf16.msra.mxu0 %v1560
  %2086 = vmatprep.subr.bf16.mxu0 0
  %2087 = vmatpush1.bf16.msra.mxu0 %v1561
  %2088 = vmatprep.subr.bf16.mxu0 0
  %2089 = vmatpush1.bf16.msra.mxu0 %v1562
  %2090 = vmatprep.subr.bf16.mxu0 0
  %2091 = vmatpush1.bf16.msra.mxu0 %v1563
  %2092 = vmatprep.subr.bf16.mxu0 0
  %2093 = vmatpush1.bf16.msra.mxu0 %v1564
  %2094 = vmatprep.subr.bf16.mxu0 0
  %2095 = vmatpush1.bf16.msra.mxu0 %v1565
  %2096 = vmatprep.subr.bf16.mxu0 0
  %2097 = vmatpush1.bf16.msra.mxu0 %v1566
  %2098 = vmatprep.subr.bf16.mxu0 0
  %2099 = vmatpush1.bf16.msra.mxu0 %v1567
  %2100 = vmatprep.subr.bf16.mxu0 0
  %2101 = vmatpush1.bf16.msra.mxu0 %v1568
  %2102 = vmatprep.subr.bf16.mxu0 0
  %2103 = vmatpush1.bf16.msra.mxu0 %v1569
  %2104 = vmatprep.subr.bf16.mxu0 0
  %2105 = vmatpush1.bf16.msra.mxu0 %v1570
  %2106 = vmatprep.mubr.bf16.mxu0 %v558
  %2107 = vmatmul.mubr.bf16.gmra.mrb[0].mxu0 %v557
  %v2108 = vpop.f32.mrb[0].mxu0
  %v2109 = vadd.f32 %v2060, %v2108
  %v2110 = vpop.f32.mrb[0].mxu0
  %v2111 = vpop.f32.mrb[0].mxu0
  %v2112 = vadd.f32 %v2063, %v2111
  %v2113 = vpop.f32.mrb[0].mxu0
  %2114 = vmatprep.mubr.bf16.mxu0 %v576
  %2115 = vmatmul.mubr.bf16.gmra.mrb[0].mxu0 %v575
  %v2116 = vpop.f32.mrb[0].mxu0
  %v2117 = vadd.f32 %v2068, %v2116
  %v2118 = vpop.f32.mrb[0].mxu0
  %v2119 = vpop.f32.mrb[0].mxu0
  %v2120 = vadd.f32 %v2071, %v2119
  %v2121 = vpop.f32.mrb[0].mxu0
  %2122 = vdwg.mxu0
  %2123 = vmatprep.subr.bf16.mxu0 0
  %2124 = vmatpush1.bf16.msra.mxu0 %v1571
  %2125 = vmatprep.subr.bf16.mxu0 0
  %2126 = vmatpush1.bf16.msra.mxu0 %v1572
  %2127 = vmatprep.subr.bf16.mxu0 0
  %2128 = vmatpush1.bf16.msra.mxu0 %v1573
  %2129 = vmatprep.subr.bf16.mxu0 0
  %2130 = vmatpush1.bf16.msra.mxu0 %v1574
  %2131 = vmatprep.subr.bf16.mxu0 0
  %2132 = vmatpush1.bf16.msra.mxu0 %v1575
  %2133 = vmatprep.subr.bf16.mxu0 0
  %2134 = vmatpush1.bf16.msra.mxu0 %v1576
  %2135 = vmatprep.subr.bf16.mxu0 0
  %2136 = vmatpush1.bf16.msra.mxu0 %v1577
  %2137 = vmatprep.subr.bf16.mxu0 0
  %2138 = vmatpush1.bf16.msra.mxu0 %v1578
  %2139 = vmatprep.subr.bf16.mxu0 0
  %2140 = vmatpush1.bf16.msra.mxu0 %v1579
  %2141 = vmatprep.subr.bf16.mxu0 0
  %2142 = vmatpush1.bf16.msra.mxu0 %v1580
  %2143 = vmatprep.subr.bf16.mxu0 0
  %2144 = vmatpush1.bf16.msra.mxu0 %v1581
  %2145 = vmatprep.subr.bf16.mxu0 0
  %2146 = vmatpush1.bf16.msra.mxu0 %v1582
  %2147 = vmatprep.subr.bf16.mxu0 0
  %2148 = vmatpush1.bf16.msra.mxu0 %v1583
  %2149 = vmatprep.subr.bf16.mxu0 0
  %2150 = vmatpush1.bf16.msra.mxu0 %v1584
  %2151 = vmatprep.subr.bf16.mxu0 0
  %2152 = vmatpush1.bf16.msra.mxu0 %v1585
  %2153 = vmatprep.subr.bf16.mxu0 0
  %2154 = vmatpush1.bf16.msra.mxu0 %v1586
  %2155 = vmatprep.mubr.bf16.mxu0 %v560
  %2156 = vmatmul.mubr.bf16.gmra.mrb[0].mxu0 %v559
  %v2157 = vpop.f32.mrb[0].mxu0
  %v2158 = vadd.f32 %v2109, %v2157
  %v2159 = vpop.f32.mrb[0].mxu0
  %v2160 = vpop.f32.mrb[0].mxu0
  %v2161 = vadd.f32 %v2112, %v2160
  %v2162 = vpop.f32.mrb[0].mxu0
  %2163 = vmatprep.mubr.bf16.mxu0 %v578
  %2164 = vmatmul.mubr.bf16.gmra.mrb[0].mxu0 %v577
  %v2165 = vpop.f32.mrb[0].mxu0
  %v2166 = vadd.f32 %v2117, %v2165
  %v2167 = vpop.f32.mrb[0].mxu0
  %v2168 = vpop.f32.mrb[0].mxu0
  %v2169 = vadd.f32 %v2120, %v2168
  %v2170 = vpop.f32.mrb[0].mxu0
  %2171 = vdwg.mxu0
  %2172 = vst [vmem:[%s3] sm:$0xff] %v2158
  %2173 = vst [vmem:[%s3 + $0x8] sm:$0xff] %v2161
  %2174 = vst [vmem:[%s3 + $0x10] sm:$0xff] %v2166
  %2175 = vst [vmem:[%s3 + $0x18] sm:$0xff] %v2169
  // Predicated region
  $region14: #{_lambda_.1} parent=0 // pred_check
    _
  $region15: #{_lambda_.1} parent=0 // pred_check_branch
    %2177 = sbr.rel (0) target = $region17
  $region16: #{_lambda_.1} parent=0 // pred_region
    _
  $region17: #{_lambda_.1} parent=0 // pred_fallthru
    _
  // Predicated region
  $region18: #{_lambda_.1} parent=0 // pred_check
    _
  $region19: #{_lambda_.1} parent=0 // pred_check_branch
    %2179 = sbr.rel (0) target = $region21
  $region20: #{_lambda_.1} parent=0 // pred_region
    _
  $region21: #{_lambda_.1} parent=0 // pred_fallthru
    _

</llo_original>
